<compile_context>
chip_gen: v7x
topology: tpu7x:2x2x1
jax: 0.10.0
libtpu: 0.0.40
codegen_flags: <defaults>
</compile_context>

<pallas_src>
import numpy as np
import jax
import jax.numpy as jnp
from jax.experimental import pallas as pl
from jax.experimental.pallas import tpu as pltpu

# ----------------------- hyper-parameters (the `opt` dict) ------------------
HIDDEN_DIM = 4          # opt['hidden_dim']
LOCAL_RANGE = 1         # opt['local_range'] -> conv kernel K = 2*local_range+1
REGION_NUM = 4          # opt['region_num'] (unused, see TODO above)
K = 2 * LOCAL_RANGE + 1
P = LOCAL_RANGE
NTAPS = K * K                     # conv taps per channel (9)
CIN = 1 + HIDDEN_DIM              # x channel + hidden channels (5)

# Packed-weight column offsets (encoder call).
ENC_O_WX = 0
ENC_O_WH = NTAPS                              # 9
ENC_O_WDE = NTAPS + NTAPS * HIDDEN_DIM        # 45
ENC_O_BE = ENC_O_WDE + NTAPS * HIDDEN_DIM     # 81
ENC_O_BD = ENC_O_BE + 1                       # 82
ENC_PACK_COLS = ENC_O_BD + 1                  # 83
# Packed-weight column offsets (decoder call).
DEC_O_WX = 0
DEC_O_WO = NTAPS                              # 9
DEC_O_BO = DEC_O_WO + NTAPS * HIDDEN_DIM      # 45
DEC_PACK_COLS = DEC_O_BO + 1                  # 46

# ----------------------- parameter packing (flat f32 vector) ----------------
_PARAM_SHAPES = {
    "enc_wx": (HIDDEN_DIM, 1, K, K),
    "enc_wh": (HIDDEN_DIM, HIDDEN_DIM, K, K),
    "enc_b":  (HIDDEN_DIM,),
    "dec_wx": (HIDDEN_DIM, 1, K, K),
    "dec_we": (HIDDEN_DIM, HIDDEN_DIM, K, K),
    "dec_b":  (HIDDEN_DIM,),
    "dec_wo": (1, HIDDEN_DIM, K, K),
    "dec_bo": (1,),
}
_OFFSETS = {}
_total = 0
for _name, _shp in _PARAM_SHAPES.items():
    _OFFSETS[_name] = _total
    _total += int(np.prod(_shp))
PARAM_SIZE = _total


def init_params(key):
    """Deterministic synthetic parameters packed into one flat f32 vector."""
    keys = jax.random.split(key, len(_PARAM_SHAPES))
    parts = []
    for (name, shp), k in zip(_PARAM_SHAPES.items(), keys):
        fan_in = int(np.prod(shp[1:])) if len(shp) > 1 else 1
        w = 0.3 * jax.random.normal(k, shp, jnp.float32) / np.sqrt(fan_in)
        parts.append(w.reshape(-1))
    return jnp.concatenate(parts)


def _unpack_params(params):
    out = {}
    for name, shp in _PARAM_SHAPES.items():
        off = _OFFSETS[name]
        out[name] = params[off:off + int(np.prod(shp))].reshape(shp)
    return out


def _conv_weights_as_matrix(w):
    """[Cout, Cin, K, K] -> [Cout, NTAPS*Cin], tap-major / channel-minor
    (matches the kernels' im2col row order: tap k -> rows [k*cin,(k+1)*cin))."""
    blocks = []
    for ky in range(K):
        for kx in range(K):
            blocks.append(w[:, :, ky, kx])
    return jnp.concatenate(blocks, axis=1)


def _taps():
    return [(dy, dx) for dy in range(-P, P + 1) for dx in range(-P, P + 1)]


# ------------------------------ encoder kernel -------------------------------
def _make_encoder_kernel(b, h, w):
    pw = w + 2 * P
    pimg = (h + 2 * P) * pw
    npix = b * pimg                      # padded pixels per band (lane-dense)
    padl = P * pw + P                    # max |flat tap offset|
    taps = _taps()

    def kernel(x_ref, m_ref, wp_ref, out_ref, sp, cols):
        j = pl.program_id(0)

        # Zero only the shift margins (interiors are always overwritten).
        sp[:, 0:padl] = jnp.zeros((CIN, padl), jnp.float32)
        sp[:, padl + npix:padl + npix + padl] = jnp.zeros((CIN, padl), jnp.float32)

        @pl.when(j == 0)
        def _():                          # h_0 = 0
            sp[1:CIN, padl:padl + npix] = jnp.zeros((HIDDEN_DIM, npix), jnp.float32)

        # Current band's (pre-padded) image goes to channel 0.
        sp[0:1, padl:padl + npix] = x_ref[0]

        mask = m_ref[...]                                       # [1, npix]
        w_x = wp_ref[:, ENC_O_WX:ENC_O_WX + NTAPS]              # [HID, 9]
        w_h = wp_ref[:, ENC_O_WH:ENC_O_WH + NTAPS * HIDDEN_DIM]  # [HID, 36]
        w_de = wp_ref[:, ENC_O_WDE:ENC_O_WDE + NTAPS * HIDDEN_DIM]
        b_enc = wp_ref[:, ENC_O_BE:ENC_O_BE + 1]                # [HID, 1]
        b_dec = wp_ref[:, ENC_O_BD:ENC_O_BD + 1]                # [HID, 1]

        # Hidden-state conv on the MXU: 36-row im2col over the h channels.
        for k, (dy, dx) in enumerate(taps):
            off = dy * pw + dx
            cols[k * HIDDEN_DIM:(k + 1) * HIDDEN_DIM, :] = \
                sp[1:CIN, padl + off:padl + off + npix]
        z = jnp.dot(w_h, cols[...], preferred_element_type=jnp.float32) + b_enc
        # Single-channel x conv: 9 shifted broadcast-FMAs (no im2col stores).
        for k, (dy, dx) in enumerate(taps):
            off = dy * pw + dx
            z = z + w_x[:, k:k + 1] * sp[0:1, padl + off:padl + off + npix]
        hcur = jnp.tanh(z) * mask          # re-zero the per-image padding ring
        sp[1:CIN, padl:padl + npix] = hcur

        @pl.when(j == pl.num_programs(0) - 1)
        def _():
            # Band-invariant decoder term conv(h_enc; dec_we) + b_dec — ONCE.
            for k, (dy, dx) in enumerate(taps):
                off = dy * pw + dx
                cols[k * HIDDEN_DIM:(k + 1) * HIDDEN_DIM, :] = \
                    sp[1:CIN, padl + off:padl + off + npix]
            out_ref[...] = jnp.dot(w_de, cols[...],
                                   preferred_element_type=jnp.float32) + b_dec

    return kernel


# ------------------------------ decoder kernel -------------------------------
def _make_decoder_kernel(b, h, w):
    pw = w + 2 * P
    pimg = (h + 2 * P) * pw
    npix = b * pimg
    padl = P * pw + P
    taps = _taps()

    def kernel(x_ref, encd_ref, m_ref, wp_ref, out_ref, sp, cols):
        # Scratch may be uninitialised per core (parallel axis): zero margins
        # every step (tiny: 2*padl lanes x HID rows).
        sp[:, 0:padl] = jnp.zeros((HIDDEN_DIM, padl), jnp.float32)
        sp[:, padl + npix:padl + npix + padl] = jnp.zeros((HIDDEN_DIM, padl), jnp.float32)

        x = x_ref[0]                                            # [1, npix]
        mask = m_ref[...]                                       # [1, npix]
        w_x = wp_ref[:, DEC_O_WX:DEC_O_WX + NTAPS]              # [HID, 9]
        w_o = wp_ref[0:1, DEC_O_WO:DEC_O_WO + NTAPS * HIDDEN_DIM]  # [1, 36]
        b_o = wp_ref[0:1, DEC_O_BO:DEC_O_BO + 1]                # [1, 1]

        # f = relu(conv(x_t; dec_wx) + [conv(h_enc; dec_we) + b_dec]); the
        # bracketed band-invariant part arrives precomputed in encd_ref.
        sp[0:1, padl:padl + npix] = x
        acc = encd_ref[...]                                     # [HID, npix]
        for k, (dy, dx) in enumerate(taps):
            off = dy * pw + dx
            acc = acc + w_x[:, k:k + 1] * sp[0:1, padl + off:padl + off + npix]
        f = jnp.maximum(acc, 0.0) * mask   # re-zero padding ring before conv

        # out_t = conv(f; dec_wo) + b_out + x_t   (residual reconstruction)
        sp[0:HIDDEN_DIM, padl:padl + npix] = f
        for k, (dy, dx) in enumerate(taps):
            off = dy * pw + dx
            cols[k * HIDDEN_DIM:(k + 1) * HIDDEN_DIM, :] = \
                sp[0:HIDDEN_DIM, padl + off:padl + off + npix]
        out = jnp.dot(w_o, cols[...], preferred_element_type=jnp.float32) + b_o + x
        out_ref[0] = out                                        # [1, npix]

    return kernel


# ------------------------------ JAX wrapper -----------------------------------
@jax.jit
def s2s_hsid_forward(x, params):
    """x: [n, b, c=1, h, w]  ->  out: [n, b, c=1, h, w]  (float32)."""
    n, b, c, h, w = x.shape
    assert c == 1
    ph, pw = h + 2 * P, w + 2 * P
    pimg = ph * pw
    npix = b * pimg                       # padded pixels per band (lane-dense)
    padl = P * pw + P

    # Per-image zero padding: "same"-conv borders come from the layout.
    x_sq = x[:, :, 0].astype(jnp.float32)                       # [n,b,h,w]
    x_pad = jnp.pad(x_sq, ((0, 0), (0, 0), (P, P), (P, P)))     # [n,b,ph,pw]
    x_flat = x_pad.reshape(n, 1, npix)

    # Thin interior mask (1 row), tiled only over the batch of one band.
    interior = jnp.zeros((ph, pw), jnp.float32).at[P:P + h, P:P + w].set(1.0)
    mask = jnp.tile(interior.reshape(-1), (b,)).reshape(1, npix)

    p = _unpack_params(params)
    w_enc_x = _conv_weights_as_matrix(p["enc_wx"])              # [HID, 9]
    w_enc_h = _conv_weights_as_matrix(p["enc_wh"])              # [HID, 36]
    w_dec_x = _conv_weights_as_matrix(p["dec_wx"])              # [HID, 9]
    w_dec_e = _conv_weights_as_matrix(p["dec_we"])              # [HID, 36]
    w_out = _conv_weights_as_matrix(p["dec_wo"])                # [1, 36]

    enc_packed = jnp.concatenate(
        [w_enc_x, w_enc_h, w_dec_e,
         p["enc_b"].reshape(HIDDEN_DIM, 1),
         p["dec_b"].reshape(HIDDEN_DIM, 1)], axis=1)            # [HID, 83]
    dec_packed = jnp.concatenate(
        [w_dec_x,
         jnp.concatenate([w_out,
                          jnp.zeros((HIDDEN_DIM - 1, NTAPS * HIDDEN_DIM),
                                    jnp.float32)], axis=0),
         jnp.concatenate([p["dec_bo"].reshape(1, 1),
                          jnp.zeros((HIDDEN_DIM - 1, 1), jnp.float32)], axis=0)],
        axis=1)                                                  # [HID, 46]

    # ---- call 1: encoder recurrence over bands + band-invariant conv(enc) ----
    enc_dec = pl.pallas_call(
        _make_encoder_kernel(b, h, w),
        out_shape=jax.ShapeDtypeStruct((HIDDEN_DIM, npix), jnp.float32),
        grid_spec=pltpu.PrefetchScalarGridSpec(
            num_scalar_prefetch=0,
            grid=(n,),
            in_specs=[
                pl.BlockSpec((1, 1, npix), lambda j: (j, 0, 0)),      # x band j
                pl.BlockSpec((1, npix), lambda j: (0, 0)),            # mask
                pl.BlockSpec((HIDDEN_DIM, ENC_PACK_COLS), lambda j: (0, 0)),
            ],
            out_specs=pl.BlockSpec((HIDDEN_DIM, npix), lambda j: (0, 0)),
            scratch_shapes=[
                pltpu.VMEM((CIN, npix + 2 * padl), jnp.float32),       # sp
                pltpu.VMEM((NTAPS * HIDDEN_DIM, npix), jnp.float32),   # cols
            ]),
        compiler_params=pltpu.CompilerParams(
            dimension_semantics=("arbitrary",),
            vmem_limit_bytes=32 * 1024 * 1024),
    )(x_flat, mask, enc_packed)

    # ---- call 2: decoder, independent per band ("parallel" -> v7x 2 TCs) ----
    out_flat = pl.pallas_call(
        _make_decoder_kernel(b, h, w),
        out_shape=jax.ShapeDtypeStruct((n, 1, npix), jnp.float32),
        grid_spec=pltpu.PrefetchScalarGridSpec(
            num_scalar_prefetch=0,
            grid=(n,),
            in_specs=[
                pl.BlockSpec((1, 1, npix), lambda t: (t, 0, 0)),      # x band t
                pl.BlockSpec((HIDDEN_DIM, npix), lambda t: (0, 0)),   # enc feat
                pl.BlockSpec((1, npix), lambda t: (0, 0)),            # mask
                pl.BlockSpec((HIDDEN_DIM, DEC_PACK_COLS), lambda t: (0, 0)),
            ],
            out_specs=pl.BlockSpec((1, 1, npix), lambda t: (t, 0, 0)),
            scratch_shapes=[
                pltpu.VMEM((HIDDEN_DIM, npix + 2 * padl), jnp.float32),  # sp
                pltpu.VMEM((NTAPS * HIDDEN_DIM, npix), jnp.float32),     # cols
            ]),
        compiler_params=pltpu.CompilerParams(
            dimension_semantics=("parallel",),
            vmem_limit_bytes=32 * 1024 * 1024),
    )(x_flat, enc_dec, mask, dec_packed)

    # Strip the per-image padding ring back off.
    out = out_flat.reshape(n, b, ph, pw)[:, :, P:P + h, P:P + w]
    return out[:, :, None, :, :]


if __name__ == "__main__":
    key = jax.random.PRNGKey(0)
    kx, kp = jax.random.split(key)

    n, b, c, h, w = 8, 2, 1, 16, 16           # small shapes implied by forward
    x = jax.random.normal(kx, (n, b, c, h, w), jnp.float32)
    params = init_params(kp)

    out = jax.block_until_ready(s2s_hsid_forward(x, params))

    assert out.shape == (n, b, c, h, w), out.shape
    assert out.dtype == jnp.float32
    assert bool(jnp.all(jnp.isfinite(out)))
    print("KERNEL_OK")
</pallas_src>

<mosaic_0001>
module attributes {stable_mosaic.version = 11 : i64} {
  func.func @kernel(%arg0: i32, %arg1: memref<1x1x648xf32, #tpu.memory_space<vmem>>, %arg2: memref<1x648xf32, #tpu.memory_space<vmem>>, %arg3: memref<4x83xf32, #tpu.memory_space<vmem>>, %arg4: memref<4x648xf32, #tpu.memory_space<vmem>>, %arg5: memref<5x686xf32, #tpu.memory_space<vmem>>, %arg6: memref<36x648xf32, #tpu.memory_space<vmem>>) attributes {dimension_semantics = [#tpu.dimension_semantics<arbitrary>], iteration_bounds = array<i64: 8>, scalar_prefetch = 0 : i64, scratch_operands = 2 : i64, tpu.core_type = #tpu.core_type<tc>, window_params = [{transform_indices = @transform_0, window_bounds = array<i64: 1, 1, 648>}, {pipeline_mode = #tpu.pipeline_mode<synchronous>, transform_indices = @transform_1, window_bounds = array<i64: 1, 648>}, {pipeline_mode = #tpu.pipeline_mode<synchronous>, transform_indices = @transform_2, window_bounds = array<i64: 4, 83>}, {pipeline_mode = #tpu.pipeline_mode<synchronous>, transform_indices = @transform_3, window_bounds = array<i64: 4, 648>}]} {
    %cst = arith.constant 0.000000e+00 : f32
    %0 = vector.broadcast %cst : f32 to vector<5x19xf32>
    %c0 = arith.constant 0 : index
    %c0_0 = arith.constant 0 : index
    %1 = vector.load %arg5[%c0, %c0_0] : memref<5x686xf32, #tpu.memory_space<vmem>>, vector<5x19xf32>
    tpu.vector_store %arg5[%c0, %c0_0], %0 {strides = array<i32>} : memref<5x686xf32, #tpu.memory_space<vmem>>, vector<5x19xf32>,
    %cst_1 = arith.constant 0.000000e+00 : f32
    %2 = vector.broadcast %cst_1 : f32 to vector<5x19xf32>
    %c0_2 = arith.constant 0 : index
    %c667 = arith.constant 667 : index
    %3 = vector.load %arg5[%c0_2, %c667] : memref<5x686xf32, #tpu.memory_space<vmem>>, vector<5x19xf32>
    tpu.vector_store %arg5[%c0_2, %c667], %2 {strides = array<i32>} : memref<5x686xf32, #tpu.memory_space<vmem>>, vector<5x19xf32>,
    %c0_i32 = arith.constant 0 : i32
    %4 = arith.cmpi eq, %arg0, %c0_i32 : i32
    %5 = arith.extui %4 : i1 to i32
    %c0_i32_3 = arith.constant 0 : i32
    %6 = arith.cmpi ne, %5, %c0_i32_3 : i32
    scf.if %6 {
      %cst_62 = arith.constant 0.000000e+00 : f32
      %99 = vector.broadcast %cst_62 : f32 to vector<4x648xf32>
      %c1_63 = arith.constant 1 : index
      %c19_64 = arith.constant 19 : index
      %100 = vector.load %arg5[%c1_63, %c19_64] : memref<5x686xf32, #tpu.memory_space<vmem>>, vector<4x648xf32>
      tpu.vector_store %arg5[%c1_63, %c19_64], %99 {strides = array<i32>} : memref<5x686xf32, #tpu.memory_space<vmem>>, vector<4x648xf32>,
    } else {
    }
    %c0_4 = arith.constant 0 : index
    %c0_5 = arith.constant 0 : index
    %c0_6 = arith.constant 0 : index
    %7 = vector.load %arg1[%c0_4, %c0_5, %c0_6] : memref<1x1x648xf32, #tpu.memory_space<vmem>>, vector<1x1x648xf32>
    %8 = vector.shape_cast %7 : vector<1x1x648xf32> to vector<1x648xf32>
    %c0_7 = arith.constant 0 : index
    %c19 = arith.constant 19 : index
    %9 = vector.load %arg5[%c0_7, %c19] : memref<5x686xf32, #tpu.memory_space<vmem>>, vector<1x648xf32>
    tpu.vector_store %arg5[%c0_7, %c19], %8 {strides = array<i32>} : memref<5x686xf32, #tpu.memory_space<vmem>>, vector<1x648xf32>,
    %c0_8 = arith.constant 0 : index
    %c0_9 = arith.constant 0 : index
    %10 = vector.load %arg2[%c0_8, %c0_9] : memref<1x648xf32, #tpu.memory_space<vmem>>, vector<1x648xf32>
    %c0_10 = arith.constant 0 : index
    %c0_11 = arith.constant 0 : index
    %11 = vector.load %arg3[%c0_10, %c0_11] : memref<4x83xf32, #tpu.memory_space<vmem>>, vector<4x9xf32>
    %c0_12 = arith.constant 0 : index
    %c9 = arith.constant 9 : index
    %12 = vector.load %arg3[%c0_12, %c9] : memref<4x83xf32, #tpu.memory_space<vmem>>, vector<4x36xf32>
    %c0_13 = arith.constant 0 : index
    %c45 = arith.constant 45 : index
    %13 = vector.load %arg3[%c0_13, %c45] : memref<4x83xf32, #tpu.memory_space<vmem>>, vector<4x36xf32>
    %c0_14 = arith.constant 0 : index
    %c81 = arith.constant 81 : index
    %14 = vector.load %arg3[%c0_14, %c81] : memref<4x83xf32, #tpu.memory_space<vmem>>, vector<4x1xf32>
    %c0_15 = arith.constant 0 : index
    %c82 = arith.constant 82 : index
    %15 = vector.load %arg3[%c0_15, %c82] : memref<4x83xf32, #tpu.memory_space<vmem>>, vector<4x1xf32>
    %c1 = arith.constant 1 : index
    %c0_16 = arith.constant 0 : index
    %16 = vector.load %arg5[%c1, %c0_16] : memref<5x686xf32, #tpu.memory_space<vmem>>, vector<4x648xf32>
    %c0_17 = arith.constant 0 : index
    %c0_18 = arith.constant 0 : index
    %17 = vector.load %arg6[%c0_17, %c0_18] : memref<36x648xf32, #tpu.memory_space<vmem>>, vector<4x648xf32>
    tpu.vector_store %arg6[%c0_17, %c0_18], %16 {strides = array<i32>} : memref<36x648xf32, #tpu.memory_space<vmem>>, vector<4x648xf32>,
    %c1_19 = arith.constant 1 : index
    %c1_20 = arith.constant 1 : index
    %18 = vector.load %arg5[%c1_19, %c1_20] : memref<5x686xf32, #tpu.memory_space<vmem>>, vector<4x648xf32>
    %c4 = arith.constant 4 : index
    %c0_21 = arith.constant 0 : index
    %19 = vector.load %arg6[%c4, %c0_21] : memref<36x648xf32, #tpu.memory_space<vmem>>, vector<4x648xf32>
    tpu.vector_store %arg6[%c4, %c0_21], %18 {strides = array<i32>} : memref<36x648xf32, #tpu.memory_space<vmem>>, vector<4x648xf32>,
    %c1_22 = arith.constant 1 : index
    %c2 = arith.constant 2 : index
    %20 = vector.load %arg5[%c1_22, %c2] : memref<5x686xf32, #tpu.memory_space<vmem>>, vector<4x648xf32>
    %c8 = arith.constant 8 : index
    %c0_23 = arith.constant 0 : index
    %21 = vector.load %arg6[%c8, %c0_23] : memref<36x648xf32, #tpu.memory_space<vmem>>, vector<4x648xf32>
    tpu.vector_store %arg6[%c8, %c0_23], %20 {strides = array<i32>} : memref<36x648xf32, #tpu.memory_space<vmem>>, vector<4x648xf32>,
    %c1_24 = arith.constant 1 : index
    %c18 = arith.constant 18 : index
    %22 = vector.load %arg5[%c1_24, %c18] : memref<5x686xf32, #tpu.memory_space<vmem>>, vector<4x648xf32>
    %c12 = arith.constant 12 : index
    %c0_25 = arith.constant 0 : index
    %23 = vector.load %arg6[%c12, %c0_25] : memref<36x648xf32, #tpu.memory_space<vmem>>, vector<4x648xf32>
    tpu.vector_store %arg6[%c12, %c0_25], %22 {strides = array<i32>} : memref<36x648xf32, #tpu.memory_space<vmem>>, vector<4x648xf32>,
    %c1_26 = arith.constant 1 : index
    %c19_27 = arith.constant 19 : index
    %24 = vector.load %arg5[%c1_26, %c19_27] : memref<5x686xf32, #tpu.memory_space<vmem>>, vector<4x648xf32>
    %c16 = arith.constant 16 : index
    %c0_28 = arith.constant 0 : index
    %25 = vector.load %arg6[%c16, %c0_28] : memref<36x648xf32, #tpu.memory_space<vmem>>, vector<4x648xf32>
    tpu.vector_store %arg6[%c16, %c0_28], %24 {strides = array<i32>} : memref<36x648xf32, #tpu.memory_space<vmem>>, vector<4x648xf32>,
    %c1_29 = arith.constant 1 : index
    %c20 = arith.constant 20 : index
    %26 = vector.load %arg5[%c1_29, %c20] : memref<5x686xf32, #tpu.memory_space<vmem>>, vector<4x648xf32>
    %c20_30 = arith.constant 20 : index
    %c0_31 = arith.constant 0 : index
    %27 = vector.load %arg6[%c20_30, %c0_31] : memref<36x648xf32, #tpu.memory_space<vmem>>, vector<4x648xf32>
    tpu.vector_store %arg6[%c20_30, %c0_31], %26 {strides = array<i32>} : memref<36x648xf32, #tpu.memory_space<vmem>>, vector<4x648xf32>,
    %c1_32 = arith.constant 1 : index
    %c36 = arith.constant 36 : index
    %28 = vector.load %arg5[%c1_32, %c36] : memref<5x686xf32, #tpu.memory_space<vmem>>, vector<4x648xf32>
    %c24 = arith.constant 24 : index
    %c0_33 = arith.constant 0 : index
    %29 = vector.load %arg6[%c24, %c0_33] : memref<36x648xf32, #tpu.memory_space<vmem>>, vector<4x648xf32>
    tpu.vector_store %arg6[%c24, %c0_33], %28 {strides = array<i32>} : memref<36x648xf32, #tpu.memory_space<vmem>>, vector<4x648xf32>,
    %c1_34 = arith.constant 1 : index
    %c37 = arith.constant 37 : index
    %30 = vector.load %arg5[%c1_34, %c37] : memref<5x686xf32, #tpu.memory_space<vmem>>, vector<4x648xf32>
    %c28 = arith.constant 28 : index
    %c0_35 = arith.constant 0 : index
    %31 = vector.load %arg6[%c28, %c0_35] : memref<36x648xf32, #tpu.memory_space<vmem>>, vector<4x648xf32>
    tpu.vector_store %arg6[%c28, %c0_35], %30 {strides = array<i32>} : memref<36x648xf32, #tpu.memory_space<vmem>>, vector<4x648xf32>,
    %c1_36 = arith.constant 1 : index
    %c38 = arith.constant 38 : index
    %32 = vector.load %arg5[%c1_36, %c38] : memref<5x686xf32, #tpu.memory_space<vmem>>, vector<4x648xf32>
    %c32 = arith.constant 32 : index
    %c0_37 = arith.constant 0 : index
    %33 = vector.load %arg6[%c32, %c0_37] : memref<36x648xf32, #tpu.memory_space<vmem>>, vector<4x648xf32>
    tpu.vector_store %arg6[%c32, %c0_37], %32 {strides = array<i32>} : memref<36x648xf32, #tpu.memory_space<vmem>>, vector<4x648xf32>,
    %c0_38 = arith.constant 0 : index
    %c0_39 = arith.constant 0 : index
    %34 = vector.load %arg6[%c0_38, %c0_39] : memref<36x648xf32, #tpu.memory_space<vmem>>, vector<36x648xf32>
    %cst_40 = arith.constant dense<0.000000e+00> : vector<4x648xf32>
    %35 = tpu.matmul %12, %34, %cst_40 {dimension_numbers = #tpu.dot_dimension_numbers<[1], [0], [0], [1], [0, 0, 1, 1], [], []>} : vector<4x36xf32>, vector<36x648xf32>, vector<4x648xf32> -> vector<4x648xf32>
    %36 = vector.broadcast %14 : vector<4x1xf32> to vector<4x648xf32>
    %37 = arith.addf %35, %36 : vector<4x648xf32>
    %38 = vector.extract_strided_slice %11 {offsets = [0, 0], sizes = [4, 1], strides = [1, 1]} : vector<4x9xf32> to vector<4x1xf32>
    %c0_41 = arith.constant 0 : index
    %c0_42 = arith.constant 0 : index
    %39 = vector.load %arg5[%c0_41, %c0_42] : memref<5x686xf32, #tpu.memory_space<vmem>>, vector<1x648xf32>
    %40 = vector.broadcast %38 : vector<4x1xf32> to vector<4x648xf32>
    %41 = vector.broadcast %39 : vector<1x648xf32> to vector<4x648xf32>
    %42 = arith.mulf %40, %41 : vector<4x648xf32>
    %43 = arith.addf %37, %42 : vector<4x648xf32>
    %44 = vector.extract_strided_slice %11 {offsets = [0, 1], sizes = [4, 1], strides = [1, 1]} : vector<4x9xf32> to vector<4x1xf32>
    %c0_43 = arith.constant 0 : index
    %c1_44 = arith.constant 1 : index
    %45 = vector.load %arg5[%c0_43, %c1_44] : memref<5x686xf32, #tpu.memory_space<vmem>>, vector<1x648xf32>
    %46 = vector.broadcast %44 : vector<4x1xf32> to vector<4x648xf32>
    %47 = vector.broadcast %45 : vector<1x648xf32> to vector<4x648xf32>
    %48 = arith.mulf %46, %47 : vector<4x648xf32>
    %49 = arith.addf %43, %48 : vector<4x648xf32>
    %50 = vector.extract_strided_slice %11 {offsets = [0, 2], sizes = [4, 1], strides = [1, 1]} : vector<4x9xf32> to vector<4x1xf32>
    %c0_45 = arith.constant 0 : index
    %c2_46 = arith.constant 2 : index
    %51 = vector.load %arg5[%c0_45, %c2_46] : memref<5x686xf32, #tpu.memory_space<vmem>>, vector<1x648xf32>
    %52 = vector.broadcast %50 : vector<4x1xf32> to vector<4x648xf32>
    %53 = vector.broadcast %51 : vector<1x648xf32> to vector<4x648xf32>
    %54 = arith.mulf %52, %53 : vector<4x648xf32>
    %55 = arith.addf %49, %54 : vector<4x648xf32>
    %56 = vector.extract_strided_slice %11 {offsets = [0, 3], sizes = [4, 1], strides = [1, 1]} : vector<4x9xf32> to vector<4x1xf32>
    %c0_47 = arith.constant 0 : index
    %c18_48 = arith.constant 18 : index
    %57 = vector.load %arg5[%c0_47, %c18_48] : memref<5x686xf32, #tpu.memory_space<vmem>>, vector<1x648xf32>
    %58 = vector.broadcast %56 : vector<4x1xf32> to vector<4x648xf32>
    %59 = vector.broadcast %57 : vector<1x648xf32> to vector<4x648xf32>
    %60 = arith.mulf %58, %59 : vector<4x648xf32>
    %61 = arith.addf %55, %60 : vector<4x648xf32>
    %62 = vector.extract_strided_slice %11 {offsets = [0, 4], sizes = [4, 1], strides = [1, 1]} : vector<4x9xf32> to vector<4x1xf32>
    %c0_49 = arith.constant 0 : index
    %c19_50 = arith.constant 19 : index
    %63 = vector.load %arg5[%c0_49, %c19_50] : memref<5x686xf32, #tpu.memory_space<vmem>>, vector<1x648xf32>
    %64 = vector.broadcast %62 : vector<4x1xf32> to vector<4x648xf32>
    %65 = vector.broadcast %63 : vector<1x648xf32> to vector<4x648xf32>
    %66 = arith.mulf %64, %65 : vector<4x648xf32>
    %67 = arith.addf %61, %66 : vector<4x648xf32>
    %68 = vector.extract_strided_slice %11 {offsets = [0, 5], sizes = [4, 1], strides = [1, 1]} : vector<4x9xf32> to vector<4x1xf32>
    %c0_51 = arith.constant 0 : index
    %c20_52 = arith.constant 20 : index
    %69 = vector.load %arg5[%c0_51, %c20_52] : memref<5x686xf32, #tpu.memory_space<vmem>>, vector<1x648xf32>
    %70 = vector.broadcast %68 : vector<4x1xf32> to vector<4x648xf32>
    %71 = vector.broadcast %69 : vector<1x648xf32> to vector<4x648xf32>
    %72 = arith.mulf %70, %71 : vector<4x648xf32>
    %73 = arith.addf %67, %72 : vector<4x648xf32>
    %74 = vector.extract_strided_slice %11 {offsets = [0, 6], sizes = [4, 1], strides = [1, 1]} : vector<4x9xf32> to vector<4x1xf32>
    %c0_53 = arith.constant 0 : index
    %c36_54 = arith.constant 36 : index
    %75 = vector.load %arg5[%c0_53, %c36_54] : memref<5x686xf32, #tpu.memory_space<vmem>>, vector<1x648xf32>
    %76 = vector.broadcast %74 : vector<4x1xf32> to vector<4x648xf32>
    %77 = vector.broadcast %75 : vector<1x648xf32> to vector<4x648xf32>
    %78 = arith.mulf %76, %77 : vector<4x648xf32>
    %79 = arith.addf %73, %78 : vector<4x648xf32>
    %80 = vector.extract_strided_slice %11 {offsets = [0, 7], sizes = [4, 1], strides = [1, 1]} : vector<4x9xf32> to vector<4x1xf32>
    %c0_55 = arith.constant 0 : index
    %c37_56 = arith.constant 37 : index
    %81 = vector.load %arg5[%c0_55, %c37_56] : memref<5x686xf32, #tpu.memory_space<vmem>>, vector<1x648xf32>
    %82 = vector.broadcast %80 : vector<4x1xf32> to vector<4x648xf32>
    %83 = vector.broadcast %81 : vector<1x648xf32> to vector<4x648xf32>
    %84 = arith.mulf %82, %83 : vector<4x648xf32>
    %85 = arith.addf %79, %84 : vector<4x648xf32>
    %86 = vector.extract_strided_slice %11 {offsets = [0, 8], sizes = [4, 1], strides = [1, 1]} : vector<4x9xf32> to vector<4x1xf32>
    %c0_57 = arith.constant 0 : index
    %c38_58 = arith.constant 38 : index
    %87 = vector.load %arg5[%c0_57, %c38_58] : memref<5x686xf32, #tpu.memory_space<vmem>>, vector<1x648xf32>
    %88 = vector.broadcast %86 : vector<4x1xf32> to vector<4x648xf32>
    %89 = vector.broadcast %87 : vector<1x648xf32> to vector<4x648xf32>
    %90 = arith.mulf %88, %89 : vector<4x648xf32>
    %91 = arith.addf %85, %90 : vector<4x648xf32>
    %92 = math.tanh %91 : vector<4x648xf32>
    %93 = vector.broadcast %10 : vector<1x648xf32> to vector<4x648xf32>
    %94 = arith.mulf %92, %93 : vector<4x648xf32>
    %c1_59 = arith.constant 1 : index
    %c19_60 = arith.constant 19 : index
    %95 = vector.load %arg5[%c1_59, %c19_60] : memref<5x686xf32, #tpu.memory_space<vmem>>, vector<4x648xf32>
    tpu.vector_store %arg5[%c1_59, %c19_60], %94 {strides = array<i32>} : memref<5x686xf32, #tpu.memory_space<vmem>>, vector<4x648xf32>,
    %c7_i32 = arith.constant 7 : i32
    %96 = arith.cmpi eq, %arg0, %c7_i32 : i32
    %97 = arith.extui %96 : i1 to i32
    %c0_i32_61 = arith.constant 0 : i32
    %98 = arith.cmpi ne, %97, %c0_i32_61 : i32
    scf.if %98 {
      %c1_62 = arith.constant 1 : index
      %c0_63 = arith.constant 0 : index
      %99 = vector.load %arg5[%c1_62, %c0_63] : memref<5x686xf32, #tpu.memory_space<vmem>>, vector<4x648xf32>
      %c0_64 = arith.constant 0 : index
      %c0_65 = arith.constant 0 : index
      %100 = vector.load %arg6[%c0_64, %c0_65] : memref<36x648xf32, #tpu.memory_space<vmem>>, vector<4x648xf32>
      tpu.vector_store %arg6[%c0_64, %c0_65], %99 {strides = array<i32>} : memref<36x648xf32, #tpu.memory_space<vmem>>, vector<4x648xf32>,
      %c1_66 = arith.constant 1 : index
      %c1_67 = arith.constant 1 : index
      %101 = vector.load %arg5[%c1_66, %c1_67] : memref<5x686xf32, #tpu.memory_space<vmem>>, vector<4x648xf32>
      %c4_68 = arith.constant 4 : index
      %c0_69 = arith.constant 0 : index
      %102 = vector.load %arg6[%c4_68, %c0_69] : memref<36x648xf32, #tpu.memory_space<vmem>>, vector<4x648xf32>
      tpu.vector_store %arg6[%c4_68, %c0_69], %101 {strides = array<i32>} : memref<36x648xf32, #tpu.memory_space<vmem>>, vector<4x648xf32>,
      %c1_70 = arith.constant 1 : index
      %c2_71 = arith.constant 2 : index
      %103 = vector.load %arg5[%c1_70, %c2_71] : memref<5x686xf32, #tpu.memory_space<vmem>>, vector<4x648xf32>
      %c8_72 = arith.constant 8 : index
      %c0_73 = arith.constant 0 : index
      %104 = vector.load %arg6[%c8_72, %c0_73] : memref<36x648xf32, #tpu.memory_space<vmem>>, vector<4x648xf32>
      tpu.vector_store %arg6[%c8_72, %c0_73], %103 {strides = array<i32>} : memref<36x648xf32, #tpu.memory_space<vmem>>, vector<4x648xf32>,
      %c1_74 = arith.constant 1 : index
      %c18_75 = arith.constant 18 : index
      %105 = vector.load %arg5[%c1_74, %c18_75] : memref<5x686xf32, #tpu.memory_space<vmem>>, vector<4x648xf32>
      %c12_76 = arith.constant 12 : index
      %c0_77 = arith.constant 0 : index
      %106 = vector.load %arg6[%c12_76, %c0_77] : memref<36x648xf32, #tpu.memory_space<vmem>>, vector<4x648xf32>
      tpu.vector_store %arg6[%c12_76, %c0_77], %105 {strides = array<i32>} : memref<36x648xf32, #tpu.memory_space<vmem>>, vector<4x648xf32>,
      %c1_78 = arith.constant 1 : index
      %c19_79 = arith.constant 19 : index
      %107 = vector.load %arg5[%c1_78, %c19_79] : memref<5x686xf32, #tpu.memory_space<vmem>>, vector<4x648xf32>
      %c16_80 = arith.constant 16 : index
      %c0_81 = arith.constant 0 : index
      %108 = vector.load %arg6[%c16_80, %c0_81] : memref<36x648xf32, #tpu.memory_space<vmem>>, vector<4x648xf32>
      tpu.vector_store %arg6[%c16_80, %c0_81], %107 {strides = array<i32>} : memref<36x648xf32, #tpu.memory_space<vmem>>, vector<4x648xf32>,
      %c1_82 = arith.constant 1 : index
      %c20_83 = arith.constant 20 : index
      %109 = vector.load %arg5[%c1_82, %c20_83] : memref<5x686xf32, #tpu.memory_space<vmem>>, vector<4x648xf32>
      %c20_84 = arith.constant 20 : index
      %c0_85 = arith.constant 0 : index
      %110 = vector.load %arg6[%c20_84, %c0_85] : memref<36x648xf32, #tpu.memory_space<vmem>>, vector<4x648xf32>
      tpu.vector_store %arg6[%c20_84, %c0_85], %109 {strides = array<i32>} : memref<36x648xf32, #tpu.memory_space<vmem>>, vector<4x648xf32>,
      %c1_86 = arith.constant 1 : index
      %c36_87 = arith.constant 36 : index
      %111 = vector.load %arg5[%c1_86, %c36_87] : memref<5x686xf32, #tpu.memory_space<vmem>>, vector<4x648xf32>
      %c24_88 = arith.constant 24 : index
      %c0_89 = arith.constant 0 : index
      %112 = vector.load %arg6[%c24_88, %c0_89] : memref<36x648xf32, #tpu.memory_space<vmem>>, vector<4x648xf32>
      tpu.vector_store %arg6[%c24_88, %c0_89], %111 {strides = array<i32>} : memref<36x648xf32, #tpu.memory_space<vmem>>, vector<4x648xf32>,
      %c1_90 = arith.constant 1 : index
      %c37_91 = arith.constant 37 : index
      %113 = vector.load %arg5[%c1_90, %c37_91] : memref<5x686xf32, #tpu.memory_space<vmem>>, vector<4x648xf32>
      %c28_92 = arith.constant 28 : index
      %c0_93 = arith.constant 0 : index
      %114 = vector.load %arg6[%c28_92, %c0_93] : memref<36x648xf32, #tpu.memory_space<vmem>>, vector<4x648xf32>
      tpu.vector_store %arg6[%c28_92, %c0_93], %113 {strides = array<i32>} : memref<36x648xf32, #tpu.memory_space<vmem>>, vector<4x648xf32>,
      %c1_94 = arith.constant 1 : index
      %c38_95 = arith.constant 38 : index
      %115 = vector.load %arg5[%c1_94, %c38_95] : memref<5x686xf32, #tpu.memory_space<vmem>>, vector<4x648xf32>
      %c32_96 = arith.constant 32 : index
      %c0_97 = arith.constant 0 : index
      %116 = vector.load %arg6[%c32_96, %c0_97] : memref<36x648xf32, #tpu.memory_space<vmem>>, vector<4x648xf32>
      tpu.vector_store %arg6[%c32_96, %c0_97], %115 {strides = array<i32>} : memref<36x648xf32, #tpu.memory_space<vmem>>, vector<4x648xf32>,
      %c0_98 = arith.constant 0 : index
      %c0_99 = arith.constant 0 : index
      %117 = vector.load %arg6[%c0_98, %c0_99] : memref<36x648xf32, #tpu.memory_space<vmem>>, vector<36x648xf32>
      %cst_100 = arith.constant dense<0.000000e+00> : vector<4x648xf32>
      %118 = tpu.matmul %13, %117, %cst_100 {dimension_numbers = #tpu.dot_dimension_numbers<[1], [0], [0], [1], [0, 0, 1, 1], [], []>} : vector<4x36xf32>, vector<36x648xf32>, vector<4x648xf32> -> vector<4x648xf32>
      %119 = vector.broadcast %15 : vector<4x1xf32> to vector<4x648xf32>
      %120 = arith.addf %118, %119 : vector<4x648xf32>
      %c0_101 = arith.constant 0 : index
      %c0_102 = arith.constant 0 : index
      %121 = vector.load %arg4[%c0_101, %c0_102] : memref<4x648xf32, #tpu.memory_space<vmem>>, vector<4x648xf32>
      tpu.vector_store %arg4[%c0_101, %c0_102], %120 {strides = array<i32>} : memref<4x648xf32, #tpu.memory_space<vmem>>, vector<4x648xf32>,
    } else {
    }
    return
  }
  func.func @transform_0(%arg0: i32) -> (i32, i32, i32) {
    %c0_i32 = arith.constant 0 : i32
    %c0_i32_0 = arith.constant 0 : i32
    %c0_i32_1 = arith.constant 0 : i32
    return %arg0, %c0_i32, %c0_i32_0 : i32, i32, i32
  }
  func.func @transform_1(%arg0: i32) -> (i32, i32) {
    %c0_i32 = arith.constant 0 : i32
    %c0_i32_0 = arith.constant 0 : i32
    %c0_i32_1 = arith.constant 0 : i32
    return %c0_i32, %c0_i32_0 : i32, i32
  }
  func.func @transform_2(%arg0: i32) -> (i32, i32) {
    %c0_i32 = arith.constant 0 : i32
    %c0_i32_0 = arith.constant 0 : i32
    %c0_i32_1 = arith.constant 0 : i32
    return %c0_i32, %c0_i32_0 : i32, i32
  }
  func.func @transform_3(%arg0: i32) -> (i32, i32) {
    %c0_i32 = arith.constant 0 : i32
    %c0_i32_0 = arith.constant 0 : i32
    %c0_i32_1 = arith.constant 0 : i32
    return %c0_i32, %c0_i32_0 : i32, i32
  }
}

module attributes {stable_mosaic.version = 11 : i64} {
  func.func @kernel(%arg0: i32, %arg1: memref<1x1x648xf32, #tpu.memory_space<vmem>>, %arg2: memref<4x648xf32, #tpu.memory_space<vmem>>, %arg3: memref<1x648xf32, #tpu.memory_space<vmem>>, %arg4: memref<4x46xf32, #tpu.memory_space<vmem>>, %arg5: memref<1x1x648xf32, #tpu.memory_space<vmem>>, %arg6: memref<4x686xf32, #tpu.memory_space<vmem>>, %arg7: memref<36x648xf32, #tpu.memory_space<vmem>>) attributes {dimension_semantics = [#tpu.dimension_semantics<parallel>], iteration_bounds = array<i64: 8>, scalar_prefetch = 0 : i64, scratch_operands = 2 : i64, tpu.core_type = #tpu.core_type<tc>, window_params = [{transform_indices = @transform_0, window_bounds = array<i64: 1, 1, 648>}, {pipeline_mode = #tpu.pipeline_mode<synchronous>, transform_indices = @transform_1, window_bounds = array<i64: 4, 648>}, {pipeline_mode = #tpu.pipeline_mode<synchronous>, transform_indices = @transform_2, window_bounds = array<i64: 1, 648>}, {pipeline_mode = #tpu.pipeline_mode<synchronous>, transform_indices = @transform_3, window_bounds = array<i64: 4, 46>}, {transform_indices = @transform_4, window_bounds = array<i64: 1, 1, 648>}]} {
    %cst = arith.constant 0.000000e+00 : f32
    %0 = vector.broadcast %cst : f32 to vector<4x19xf32>
    %c0 = arith.constant 0 : index
    %c0_0 = arith.constant 0 : index
    %1 = vector.load %arg6[%c0, %c0_0] : memref<4x686xf32, #tpu.memory_space<vmem>>, vector<4x19xf32>
    tpu.vector_store %arg6[%c0, %c0_0], %0 {strides = array<i32>} : memref<4x686xf32, #tpu.memory_space<vmem>>, vector<4x19xf32>,
    %cst_1 = arith.constant 0.000000e+00 : f32
    %2 = vector.broadcast %cst_1 : f32 to vector<4x19xf32>
    %c0_2 = arith.constant 0 : index
    %c667 = arith.constant 667 : index
    %3 = vector.load %arg6[%c0_2, %c667] : memref<4x686xf32, #tpu.memory_space<vmem>>, vector<4x19xf32>
    tpu.vector_store %arg6[%c0_2, %c667], %2 {strides = array<i32>} : memref<4x686xf32, #tpu.memory_space<vmem>>, vector<4x19xf32>,
    %c0_3 = arith.constant 0 : index
    %c0_4 = arith.constant 0 : index
    %c0_5 = arith.constant 0 : index
    %4 = vector.load %arg1[%c0_3, %c0_4, %c0_5] : memref<1x1x648xf32, #tpu.memory_space<vmem>>, vector<1x1x648xf32>
    %5 = vector.shape_cast %4 : vector<1x1x648xf32> to vector<1x648xf32>
    %c0_6 = arith.constant 0 : index
    %c0_7 = arith.constant 0 : index
    %6 = vector.load %arg3[%c0_6, %c0_7] : memref<1x648xf32, #tpu.memory_space<vmem>>, vector<1x648xf32>
    %c0_8 = arith.constant 0 : index
    %c0_9 = arith.constant 0 : index
    %7 = vector.load %arg4[%c0_8, %c0_9] : memref<4x46xf32, #tpu.memory_space<vmem>>, vector<4x9xf32>
    %c0_10 = arith.constant 0 : index
    %c9 = arith.constant 9 : index
    %8 = vector.load %arg4[%c0_10, %c9] : memref<4x46xf32, #tpu.memory_space<vmem>>, vector<1x36xf32>
    %c0_11 = arith.constant 0 : index
    %c45 = arith.constant 45 : index
    %9 = vector.load %arg4[%c0_11, %c45] : memref<4x46xf32, #tpu.memory_space<vmem>>, vector<1x1xf32>
    %c0_12 = arith.constant 0 : index
    %c19 = arith.constant 19 : index
    %10 = vector.load %arg6[%c0_12, %c19] : memref<4x686xf32, #tpu.memory_space<vmem>>, vector<1x648xf32>
    tpu.vector_store %arg6[%c0_12, %c19], %5 {strides = array<i32>} : memref<4x686xf32, #tpu.memory_space<vmem>>, vector<1x648xf32>,
    %c0_13 = arith.constant 0 : index
    %c0_14 = arith.constant 0 : index
    %11 = vector.load %arg2[%c0_13, %c0_14] : memref<4x648xf32, #tpu.memory_space<vmem>>, vector<4x648xf32>
    %12 = vector.extract_strided_slice %7 {offsets = [0, 0], sizes = [4, 1], strides = [1, 1]} : vector<4x9xf32> to vector<4x1xf32>
    %c0_15 = arith.constant 0 : index
    %c0_16 = arith.constant 0 : index
    %13 = vector.load %arg6[%c0_15, %c0_16] : memref<4x686xf32, #tpu.memory_space<vmem>>, vector<1x648xf32>
    %14 = vector.broadcast %12 : vector<4x1xf32> to vector<4x648xf32>
    %15 = vector.broadcast %13 : vector<1x648xf32> to vector<4x648xf32>
    %16 = arith.mulf %14, %15 : vector<4x648xf32>
    %17 = arith.addf %11, %16 : vector<4x648xf32>
    %18 = vector.extract_strided_slice %7 {offsets = [0, 1], sizes = [4, 1], strides = [1, 1]} : vector<4x9xf32> to vector<4x1xf32>
    %c0_17 = arith.constant 0 : index
    %c1 = arith.constant 1 : index
    %19 = vector.load %arg6[%c0_17, %c1] : memref<4x686xf32, #tpu.memory_space<vmem>>, vector<1x648xf32>
    %20 = vector.broadcast %18 : vector<4x1xf32> to vector<4x648xf32>
    %21 = vector.broadcast %19 : vector<1x648xf32> to vector<4x648xf32>
    %22 = arith.mulf %20, %21 : vector<4x648xf32>
    %23 = arith.addf %17, %22 : vector<4x648xf32>
    %24 = vector.extract_strided_slice %7 {offsets = [0, 2], sizes = [4, 1], strides = [1, 1]} : vector<4x9xf32> to vector<4x1xf32>
    %c0_18 = arith.constant 0 : index
    %c2 = arith.constant 2 : index
    %25 = vector.load %arg6[%c0_18, %c2] : memref<4x686xf32, #tpu.memory_space<vmem>>, vector<1x648xf32>
    %26 = vector.broadcast %24 : vector<4x1xf32> to vector<4x648xf32>
    %27 = vector.broadcast %25 : vector<1x648xf32> to vector<4x648xf32>
    %28 = arith.mulf %26, %27 : vector<4x648xf32>
    %29 = arith.addf %23, %28 : vector<4x648xf32>
    %30 = vector.extract_strided_slice %7 {offsets = [0, 3], sizes = [4, 1], strides = [1, 1]} : vector<4x9xf32> to vector<4x1xf32>
    %c0_19 = arith.constant 0 : index
    %c18 = arith.constant 18 : index
    %31 = vector.load %arg6[%c0_19, %c18] : memref<4x686xf32, #tpu.memory_space<vmem>>, vector<1x648xf32>
    %32 = vector.broadcast %30 : vector<4x1xf32> to vector<4x648xf32>
    %33 = vector.broadcast %31 : vector<1x648xf32> to vector<4x648xf32>
    %34 = arith.mulf %32, %33 : vector<4x648xf32>
    %35 = arith.addf %29, %34 : vector<4x648xf32>
    %36 = vector.extract_strided_slice %7 {offsets = [0, 4], sizes = [4, 1], strides = [1, 1]} : vector<4x9xf32> to vector<4x1xf32>
    %c0_20 = arith.constant 0 : index
    %c19_21 = arith.constant 19 : index
    %37 = vector.load %arg6[%c0_20, %c19_21] : memref<4x686xf32, #tpu.memory_space<vmem>>, vector<1x648xf32>
    %38 = vector.broadcast %36 : vector<4x1xf32> to vector<4x648xf32>
    %39 = vector.broadcast %37 : vector<1x648xf32> to vector<4x648xf32>
    %40 = arith.mulf %38, %39 : vector<4x648xf32>
    %41 = arith.addf %35, %40 : vector<4x648xf32>
    %42 = vector.extract_strided_slice %7 {offsets = [0, 5], sizes = [4, 1], strides = [1, 1]} : vector<4x9xf32> to vector<4x1xf32>
    %c0_22 = arith.constant 0 : index
    %c20 = arith.constant 20 : index
    %43 = vector.load %arg6[%c0_22, %c20] : memref<4x686xf32, #tpu.memory_space<vmem>>, vector<1x648xf32>
    %44 = vector.broadcast %42 : vector<4x1xf32> to vector<4x648xf32>
    %45 = vector.broadcast %43 : vector<1x648xf32> to vector<4x648xf32>
    %46 = arith.mulf %44, %45 : vector<4x648xf32>
    %47 = arith.addf %41, %46 : vector<4x648xf32>
    %48 = vector.extract_strided_slice %7 {offsets = [0, 6], sizes = [4, 1], strides = [1, 1]} : vector<4x9xf32> to vector<4x1xf32>
    %c0_23 = arith.constant 0 : index
    %c36 = arith.constant 36 : index
    %49 = vector.load %arg6[%c0_23, %c36] : memref<4x686xf32, #tpu.memory_space<vmem>>, vector<1x648xf32>
    %50 = vector.broadcast %48 : vector<4x1xf32> to vector<4x648xf32>
    %51 = vector.broadcast %49 : vector<1x648xf32> to vector<4x648xf32>
    %52 = arith.mulf %50, %51 : vector<4x648xf32>
    %53 = arith.addf %47, %52 : vector<4x648xf32>
    %54 = vector.extract_strided_slice %7 {offsets = [0, 7], sizes = [4, 1], strides = [1, 1]} : vector<4x9xf32> to vector<4x1xf32>
    %c0_24 = arith.constant 0 : index
    %c37 = arith.constant 37 : index
    %55 = vector.load %arg6[%c0_24, %c37] : memref<4x686xf32, #tpu.memory_space<vmem>>, vector<1x648xf32>
    %56 = vector.broadcast %54 : vector<4x1xf32> to vector<4x648xf32>
    %57 = vector.broadcast %55 : vector<1x648xf32> to vector<4x648xf32>
    %58 = arith.mulf %56, %57 : vector<4x648xf32>
    %59 = arith.addf %53, %58 : vector<4x648xf32>
    %60 = vector.extract_strided_slice %7 {offsets = [0, 8], sizes = [4, 1], strides = [1, 1]} : vector<4x9xf32> to vector<4x1xf32>
    %c0_25 = arith.constant 0 : index
    %c38 = arith.constant 38 : index
    %61 = vector.load %arg6[%c0_25, %c38] : memref<4x686xf32, #tpu.memory_space<vmem>>, vector<1x648xf32>
    %62 = vector.broadcast %60 : vector<4x1xf32> to vector<4x648xf32>
    %63 = vector.broadcast %61 : vector<1x648xf32> to vector<4x648xf32>
    %64 = arith.mulf %62, %63 : vector<4x648xf32>
    %65 = arith.addf %59, %64 : vector<4x648xf32>
    %cst_26 = arith.constant 0.000000e+00 : f32
    %66 = vector.broadcast %cst_26 : f32 to vector<4x648xf32>
    %67 = arith.maximumf %65, %66 : vector<4x648xf32>
    %68 = vector.broadcast %6 : vector<1x648xf32> to vector<4x648xf32>
    %69 = arith.mulf %67, %68 : vector<4x648xf32>
    %c0_27 = arith.constant 0 : index
    %c19_28 = arith.constant 19 : index
    %70 = vector.load %arg6[%c0_27, %c19_28] : memref<4x686xf32, #tpu.memory_space<vmem>>, vector<4x648xf32>
    tpu.vector_store %arg6[%c0_27, %c19_28], %69 {strides = array<i32>} : memref<4x686xf32, #tpu.memory_space<vmem>>, vector<4x648xf32>,
    %c0_29 = arith.constant 0 : index
    %c0_30 = arith.constant 0 : index
    %71 = vector.load %arg6[%c0_29, %c0_30] : memref<4x686xf32, #tpu.memory_space<vmem>>, vector<4x648xf32>
    %c0_31 = arith.constant 0 : index
    %c0_32 = arith.constant 0 : index
    %72 = vector.load %arg7[%c0_31, %c0_32] : memref<36x648xf32, #tpu.memory_space<vmem>>, vector<4x648xf32>
    tpu.vector_store %arg7[%c0_31, %c0_32], %71 {strides = array<i32>} : memref<36x648xf32, #tpu.memory_space<vmem>>, vector<4x648xf32>,
    %c0_33 = arith.constant 0 : index
    %c1_34 = arith.constant 1 : index
    %73 = vector.load %arg6[%c0_33, %c1_34] : memref<4x686xf32, #tpu.memory_space<vmem>>, vector<4x648xf32>
    %c4 = arith.constant 4 : index
    %c0_35 = arith.constant 0 : index
    %74 = vector.load %arg7[%c4, %c0_35] : memref<36x648xf32, #tpu.memory_space<vmem>>, vector<4x648xf32>
    tpu.vector_store %arg7[%c4, %c0_35], %73 {strides = array<i32>} : memref<36x648xf32, #tpu.memory_space<vmem>>, vector<4x648xf32>,
    %c0_36 = arith.constant 0 : index
    %c2_37 = arith.constant 2 : index
    %75 = vector.load %arg6[%c0_36, %c2_37] : memref<4x686xf32, #tpu.memory_space<vmem>>, vector<4x648xf32>
    %c8 = arith.constant 8 : index
    %c0_38 = arith.constant 0 : index
    %76 = vector.load %arg7[%c8, %c0_38] : memref<36x648xf32, #tpu.memory_space<vmem>>, vector<4x648xf32>
    tpu.vector_store %arg7[%c8, %c0_38], %75 {strides = array<i32>} : memref<36x648xf32, #tpu.memory_space<vmem>>, vector<4x648xf32>,
    %c0_39 = arith.constant 0 : index
    %c18_40 = arith.constant 18 : index
    %77 = vector.load %arg6[%c0_39, %c18_40] : memref<4x686xf32, #tpu.memory_space<vmem>>, vector<4x648xf32>
    %c12 = arith.constant 12 : index
    %c0_41 = arith.constant 0 : index
    %78 = vector.load %arg7[%c12, %c0_41] : memref<36x648xf32, #tpu.memory_space<vmem>>, vector<4x648xf32>
    tpu.vector_store %arg7[%c12, %c0_41], %77 {strides = array<i32>} : memref<36x648xf32, #tpu.memory_space<vmem>>, vector<4x648xf32>,
    %c0_42 = arith.constant 0 : index
    %c19_43 = arith.constant 19 : index
    %79 = vector.load %arg6[%c0_42, %c19_43] : memref<4x686xf32, #tpu.memory_space<vmem>>, vector<4x648xf32>
    %c16 = arith.constant 16 : index
    %c0_44 = arith.constant 0 : index
    %80 = vector.load %arg7[%c16, %c0_44] : memref<36x648xf32, #tpu.memory_space<vmem>>, vector<4x648xf32>
    tpu.vector_store %arg7[%c16, %c0_44], %79 {strides = array<i32>} : memref<36x648xf32, #tpu.memory_space<vmem>>, vector<4x648xf32>,
    %c0_45 = arith.constant 0 : index
    %c20_46 = arith.constant 20 : index
    %81 = vector.load %arg6[%c0_45, %c20_46] : memref<4x686xf32, #tpu.memory_space<vmem>>, vector<4x648xf32>
    %c20_47 = arith.constant 20 : index
    %c0_48 = arith.constant 0 : index
    %82 = vector.load %arg7[%c20_47, %c0_48] : memref<36x648xf32, #tpu.memory_space<vmem>>, vector<4x648xf32>
    tpu.vector_store %arg7[%c20_47, %c0_48], %81 {strides = array<i32>} : memref<36x648xf32, #tpu.memory_space<vmem>>, vector<4x648xf32>,
    %c0_49 = arith.constant 0 : index
    %c36_50 = arith.constant 36 : index
    %83 = vector.load %arg6[%c0_49, %c36_50] : memref<4x686xf32, #tpu.memory_space<vmem>>, vector<4x648xf32>
    %c24 = arith.constant 24 : index
    %c0_51 = arith.constant 0 : index
    %84 = vector.load %arg7[%c24, %c0_51] : memref<36x648xf32, #tpu.memory_space<vmem>>, vector<4x648xf32>
    tpu.vector_store %arg7[%c24, %c0_51], %83 {strides = array<i32>} : memref<36x648xf32, #tpu.memory_space<vmem>>, vector<4x648xf32>,
    %c0_52 = arith.constant 0 : index
    %c37_53 = arith.constant 37 : index
    %85 = vector.load %arg6[%c0_52, %c37_53] : memref<4x686xf32, #tpu.memory_space<vmem>>, vector<4x648xf32>
    %c28 = arith.constant 28 : index
    %c0_54 = arith.constant 0 : index
    %86 = vector.load %arg7[%c28, %c0_54] : memref<36x648xf32, #tpu.memory_space<vmem>>, vector<4x648xf32>
    tpu.vector_store %arg7[%c28, %c0_54], %85 {strides = array<i32>} : memref<36x648xf32, #tpu.memory_space<vmem>>, vector<4x648xf32>,
    %c0_55 = arith.constant 0 : index
    %c38_56 = arith.constant 38 : index
    %87 = vector.load %arg6[%c0_55, %c38_56] : memref<4x686xf32, #tpu.memory_space<vmem>>, vector<4x648xf32>
    %c32 = arith.constant 32 : index
    %c0_57 = arith.constant 0 : index
    %88 = vector.load %arg7[%c32, %c0_57] : memref<36x648xf32, #tpu.memory_space<vmem>>, vector<4x648xf32>
    tpu.vector_store %arg7[%c32, %c0_57], %87 {strides = array<i32>} : memref<36x648xf32, #tpu.memory_space<vmem>>, vector<4x648xf32>,
    %c0_58 = arith.constant 0 : index
    %c0_59 = arith.constant 0 : index
    %89 = vector.load %arg7[%c0_58, %c0_59] : memref<36x648xf32, #tpu.memory_space<vmem>>, vector<36x648xf32>
    %cst_60 = arith.constant dense<0.000000e+00> : vector<1x648xf32>
    %90 = tpu.matmul %8, %89, %cst_60 {dimension_numbers = #tpu.dot_dimension_numbers<[1], [0], [0], [1], [0, 0, 1, 1], [], []>} : vector<1x36xf32>, vector<36x648xf32>, vector<1x648xf32> -> vector<1x648xf32>
    %91 = vector.broadcast %9 : vector<1x1xf32> to vector<1x648xf32>
    %92 = arith.addf %90, %91 : vector<1x648xf32>
    %93 = arith.addf %92, %5 : vector<1x648xf32>
    %c0_61 = arith.constant 0 : index
    %c0_62 = arith.constant 0 : index
    %c0_63 = arith.constant 0 : index
    %94 = vector.load %arg5[%c0_61, %c0_62, %c0_63] : memref<1x1x648xf32, #tpu.memory_space<vmem>>, vector<1x1x648xf32>
    %95 = vector.shape_cast %94 : vector<1x1x648xf32> to vector<1x648xf32>
    %96 = vector.shape_cast %93 : vector<1x648xf32> to vector<1x1x648xf32>
    tpu.vector_store %arg5[%c0_61, %c0_62, %c0_63], %96 {strides = array<i32>} : memref<1x1x648xf32, #tpu.memory_space<vmem>>, vector<1x1x648xf32>,
    return
  }
  func.func @transform_0(%arg0: i32) -> (i32, i32, i32) {
    %c0_i32 = arith.constant 0 : i32
    %c0_i32_0 = arith.constant 0 : i32
    %c0_i32_1 = arith.constant 0 : i32
    return %arg0, %c0_i32, %c0_i32_0 : i32, i32, i32
  }
  func.func @transform_1(%arg0: i32) -> (i32, i32) {
    %c0_i32 = arith.constant 0 : i32
    %c0_i32_0 = arith.constant 0 : i32
    %c0_i32_1 = arith.constant 0 : i32
    return %c0_i32, %c0_i32_0 : i32, i32
  }
  func.func @transform_2(%arg0: i32) -> (i32, i32) {
    %c0_i32 = arith.constant 0 : i32
    %c0_i32_0 = arith.constant 0 : i32
    %c0_i32_1 = arith.constant 0 : i32
    return %c0_i32, %c0_i32_0 : i32, i32
  }
  func.func @transform_3(%arg0: i32) -> (i32, i32) {
    %c0_i32 = arith.constant 0 : i32
    %c0_i32_0 = arith.constant 0 : i32
    %c0_i32_1 = arith.constant 0 : i32
    return %c0_i32, %c0_i32_0 : i32, i32
  }
  func.func @transform_4(%arg0: i32) -> (i32, i32, i32) {
    %c0_i32 = arith.constant 0 : i32
    %c0_i32_0 = arith.constant 0 : i32
    %c0_i32_1 = arith.constant 0 : i32
    return %arg0, %c0_i32, %c0_i32_0 : i32, i32, i32
  }
}

</mosaic_0001>

<llo_original>
// kernel: tile.5
$region0: #{tile.5}
  %s0 = inlined_call_operand.vmem [shape: f32[18,18], index: 0, kind: input, shape index: {}]
  %s1 = inlined_call_operand.vmem [shape: f32[324], index: 1, kind: output, shape index: {}]
  $region1: #{tile.5} parent=0
    #allocation0 [shape = 'u8[4096]{0}', space=vmem, size = 0x1000, scoped, tag = 'scoped mem for output reshape']
    %v2 = vld [vmem:[%s0] sm:$0x1]
    %vm3 = vcmask 146432
    %4 = vst.msk [vmem:[#allocation0] sm:$0x1] %vm3, %v2
    %s5 = scalar_lea.vmem %s0, 7
    %v6 = vld [vmem:[%s5] sm:$0x1]
    %s7 = scalar_lea.vmem %s0, 7
    %v8 = vld [vmem:[%s7] sm:$0x1]
    %vm9 = vcmask 15360
    %v10 = vsel %vm9, %v8, %v6
    %11 = vrot.lane.b32.xlu0 %v10, 126
    %v12 = vpop.permute.xlu0 %11
    %vm13 = vcmask 130048
    %s14 = scalar_lea.vmem [#allocation0], 1
    %15 = vst.msk [vmem:[%s14] sm:$0x1] %vm13, %v12
    %vm16 = vcmask 1048560
    %17 = vst.msk [vmem:[#allocation0] sm:$0x1] %vm16, %v12
    %s18 = scalar_lea.vmem %s0, 14
    %v19 = vld [vmem:[%s18] sm:$0x1]
    %s20 = scalar_lea.vmem %s0, 14
    %v21 = vld [vmem:[%s20] sm:$0x1]
    %vm22 = vcmask 31744
    %v23 = vsel %vm22, %v21, %v19
    %24 = vrot.lane.b32.xlu0 %v23, 124
    %v25 = vpop.permute.xlu0 %24
    %vm26 = vcmask 113664
    %s27 = scalar_lea.vmem [#allocation0], 2
    %28 = vst.msk [vmem:[%s27] sm:$0x1] %vm26, %v25
    %vm29 = vcmask 1048544
    %s30 = scalar_lea.vmem [#allocation0], 1
    %31 = vst.msk [vmem:[%s30] sm:$0x1] %vm29, %v25
    %s32 = scalar_lea.vmem %s0, 6
    %v33 = vld [vmem:[%s32] sm:$0x1]
    %34 = vrot.lane.b32.xlu0 %v33, 108
    %v35 = vpop.permute.xlu0 %34
    %vm36 = vcmask 1032032
    %37 = vst.msk [vmem:[#allocation0] sm:$0x1] %vm36, %v35
    %s38 = scalar_lea.vmem %s0, 13
    %v39 = vld [vmem:[%s38] sm:$0x1]
    %40 = vrot.lane.b32.xlu0 %v39, 106
    %v41 = vpop.permute.xlu0 %40
    %vm42 = vcmask 1015632
    %s43 = scalar_lea.vmem [#allocation0], 1
    %44 = vst.msk [vmem:[%s43] sm:$0x1] %vm42, %v41
    %s45 = scalar_lea.vmem %s0, 5
    %v46 = vld [vmem:[%s45] sm:$0x1]
    %47 = vrot.lane.b32.xlu0 %v46, 90
    %v48 = vpop.permute.xlu0 %47
    %vm49 = vcmask 884432
    %50 = vst.msk [vmem:[#allocation0] sm:$0x1] %vm49, %v48
    %s51 = scalar_lea.vmem %s0, 12
    %v52 = vld [vmem:[%s51] sm:$0x1]
    %53 = vrot.lane.b32.xlu0 %v52, 88
    %v54 = vpop.permute.xlu0 %53
    %vm55 = vcmask 868032
    %s56 = scalar_lea.vmem [#allocation0], 1
    %57 = vst.msk [vmem:[%s56] sm:$0x1] %vm55, %v54
    %s58 = scalar_lea.vmem %s0, 4
    %v59 = vld [vmem:[%s58] sm:$0x1]
    %60 = vrot.lane.b32.xlu0 %v59, 72
    %v61 = vpop.permute.xlu0 %60
    %vm62 = vcmask 736832
    %63 = vst.msk [vmem:[#allocation0] sm:$0x1] %vm62, %v61
    %s64 = scalar_lea.vmem %s0, 11
    %v65 = vld [vmem:[%s64] sm:$0x1]
    %66 = vrot.lane.b32.xlu0 %v65, 70
    %v67 = vpop.permute.xlu0 %66
    %vm68 = vcmask 720432
    %s69 = scalar_lea.vmem [#allocation0], 1
    %70 = vst.msk [vmem:[%s69] sm:$0x1] %vm68, %v67
    %s71 = scalar_lea.vmem %s0, 3
    %v72 = vld [vmem:[%s71] sm:$0x1]
    %73 = vrot.lane.b32.xlu0 %v72, 54
    %v74 = vpop.permute.xlu0 %73
    %vm75 = vcmask 589232
    %76 = vst.msk [vmem:[#allocation0] sm:$0x1] %vm75, %v74
    %s77 = scalar_lea.vmem %s0, 10
    %v78 = vld [vmem:[%s77] sm:$0x1]
    %79 = vrot.lane.b32.xlu0 %v78, 52
    %v80 = vpop.permute.xlu0 %79
    %vm81 = vcmask 572832
    %s82 = scalar_lea.vmem [#allocation0], 1
    %83 = vst.msk [vmem:[%s82] sm:$0x1] %vm81, %v80
    %s84 = scalar_lea.vmem %s0, 17
    %v85 = vld [vmem:[%s84] sm:$0x1]
    %86 = vrot.lane.b32.xlu0 %v85, 50
    %v87 = vpop.permute.xlu0 %86
    %vm88 = vcmask 556432
    %s89 = scalar_lea.vmem [#allocation0], 2
    %90 = vst.msk [vmem:[%s89] sm:$0x1] %vm88, %v87
    %s91 = scalar_lea.vmem %s0, 2
    %v92 = vld [vmem:[%s91] sm:$0x1]
    %93 = vrot.lane.b32.xlu0 %v92, 36
    %v94 = vpop.permute.xlu0 %93
    %vm95 = vcmask 441632
    %96 = vst.msk [vmem:[#allocation0] sm:$0x1] %vm95, %v94
    %s97 = scalar_lea.vmem %s0, 9
    %v98 = vld [vmem:[%s97] sm:$0x1]
    %99 = vrot.lane.b32.xlu0 %v98, 34
    %v100 = vpop.permute.xlu0 %99
    %vm101 = vcmask 425232
    %s102 = scalar_lea.vmem [#allocation0], 1
    %103 = vst.msk [vmem:[%s102] sm:$0x1] %vm101, %v100
    %s104 = scalar_lea.vmem %s0, 16
    %v105 = vld [vmem:[%s104] sm:$0x1]
    %106 = vrot.lane.b32.xlu0 %v105, 32
    %v107 = vpop.permute.xlu0 %106
    %vm108 = vcmask 408832
    %s109 = scalar_lea.vmem [#allocation0], 2
    %110 = vst.msk [vmem:[%s109] sm:$0x1] %vm108, %v107
    %s111 = scalar_lea.vmem %s0, 1
    %v112 = vld [vmem:[%s111] sm:$0x1]
    %113 = vrot.lane.b32.xlu0 %v112, 18
    %v114 = vpop.permute.xlu0 %113
    %vm115 = vcmask 294032
    %116 = vst.msk [vmem:[#allocation0] sm:$0x1] %vm115, %v114
    %s117 = scalar_lea.vmem %s0, 8
    %v118 = vld [vmem:[%s117] sm:$0x1]
    %119 = vrot.lane.b32.xlu0 %v118, 16
    %v120 = vpop.permute.xlu0 %119
    %vm121 = vcmask 277632
    %s122 = scalar_lea.vmem [#allocation0], 1
    %123 = vst.msk [vmem:[%s122] sm:$0x1] %vm121, %v120
    %s124 = scalar_lea.vmem %s0, 15
    %v125 = vld [vmem:[%s124] sm:$0x1]
    %126 = vrot.lane.b32.xlu0 %v125, 14
    %v127 = vpop.permute.xlu0 %126
    %vm128 = vcmask 261232
    %s129 = scalar_lea.vmem [#allocation0], 2
    %130 = vst.msk [vmem:[%s129] sm:$0x1] %vm128, %v127
    %s132 = sshllo.u32 0, 4
    %v134 = vld [vmem:[#allocation0] sm:%s132]
    %s135 = sshllo.u32 0, 4
    %136 = vst [vmem:[%s1] sm:%s135] %v134

// kernel: tile.6
$region0: #{tile.6}
  #allocation0 [shape = 's32[1]{0}', space=sflag, size = 0x4, scoped, tag = 'scoped memory for tile.6']
  %s0 = inlined_call_operand.vmem [shape: f32[324], index: 0, kind: input, shape index: {}]
  %s1 = inlined_call_operand.vmem [shape: f32[2,324], index: 1, kind: output, shape index: {}]
  // Predicated region
  $region2: #{tile.6} parent=0 // pred_check
    _
  $region3: #{tile.6} parent=0 // pred_check_branch
    %3 = sbr.rel (0) target = $region5
  $region4: #{tile.6} parent=0 // pred_region
    _
  $region5: #{tile.6} parent=0 // pred_fallthru
    _
  %v4 = vld [vmem:[%s0] ss:$0 sm:$0xff]
  %5 = vst [vmem:[%s1] sm:$0x3] %v4
  %s6 = scalar_lea.vmem %s0, 1
  %v7 = vld [vmem:[%s6] ss:$0 sm:$0xff]
  %s8 = scalar_lea.vmem %s1, 2
  %9 = vst [vmem:[%s8] sm:$0x3] %v7
  %s10 = scalar_lea.vmem %s0, 2
  %v11 = vld [vmem:[%s10] ss:$0 sm:$0xff]
  %s12 = scalar_lea.vmem %s1, 4
  %13 = vst [vmem:[%s12] sm:$0x3] %v11

// kernel: tile.7
$region0: #{tile.7}
  %s0 = inlined_call_operand.vmem [shape: f32[2,324], index: 0, kind: input, shape index: {}]
  %s1 = inlined_call_operand.vmem [shape: f32[1,648], index: 1, kind: output, shape index: {}]
  $region1: #{tile.7} parent=0
    #allocation0 [shape = 'u8[24576]{0}', space=vmem, size = 0x6000, scoped, tag = 'scoped mem for output reshape']
    #allocation1 [shape = 'u8[12288]{0}', space=vmem, size = 0x3000, scoped, tag = 'scoped mem for input reshape']
    %s3 = sshllo.u32 0, 2
    %s4 = smul.addr 2, 2
    %s5 = scalar_lea.vmem %s0, %s4
    %v6 = vld [vmem:[%s5] sm:%s3]
    %s7 = scalar_lea.vmem [#allocation1], 16
    %8 = vst [vmem:[%s7] sm:%s3] %v6
    %s9 = scalar_lea.vmem %s0, 2
    %v10 = vld [vmem:[%s9] sm:%s3]
    %s11 = scalar_lea.vmem [#allocation1], 8
    %12 = vst [vmem:[%s11] sm:%s3] %v10
    %v13 = vld [vmem:[%s0] sm:%s3]
    %14 = vst [vmem:[#allocation1] sm:%s3] %v13
    %s15 = scalar_lea.vmem [#allocation1], 16
    %v16 = vld [vmem:[%s15] sm:$0x1]
    %vm17 = vcmask 556032
    %s18 = scalar_lea.vmem [#allocation0], 16
    %19 = vst.msk [vmem:[%s18] sm:$0x1] %vm17, %v16
    %s20 = smov 3
    %v21 = vld [vmem:[#allocation1] ss:$8 sm:%s20]
    %22 = vst [vmem:[#allocation0] ss:$8 sm:$0x3] %v21
    %s23 = scalar_lea.vmem [#allocation1], 17
    %v24 = vld [vmem:[%s23] sm:$0x1]
    %s25 = scalar_lea.vmem [#allocation1], 17
    %s26 = smov 3
    %v27 = vld [vmem:[%s25] ss:$-16 sm:%s26]
    %s28 = scalar_lea.vmem [#allocation1], 7
    %v29 = vld [vmem:[%s28] sm:$0x4]
    %vm30 = vcmask 1042434
    %v31 = vsel %vm30, %v29, %v27
    %vm32 = vcmask 490496
    %v33 = vsel %vm32, %v31, %v24
    %34 = vrot.lane.b32.xlu0 %v33, 68
    %v35 = vpop.permute.xlu0 %34
    %vm36 = vcmask 64512
    %s37 = scalar_lea.vmem [#allocation0], 40
    %38 = vst.msk [vmem:[%s37] sm:$0x1] %vm36, %v35
    %vm39 = vcmask 1048096
    %s40 = scalar_lea.vmem [#allocation0], 32
    %41 = vst.msk [vmem:[%s40] ss:$-16 sm:$0x3] %vm39, %v35
    %s42 = scalar_lea.vmem [#allocation0], 22
    %43 = vst.msk [vmem:[%s42] sm:$0x4] %vm39, %v35
    %s44 = scalar_lea.vmem [#allocation1], 9
    %s45 = smov 3
    %v46 = vld [vmem:[%s44] ss:$-8 sm:%s45]
    %47 = vrot.lane.b32.xlu0 %v46, 68
    %v48 = vpop.permute.xlu0 %47
    %vm49 = vcmask 556032
    %s50 = scalar_lea.vmem [#allocation0], 32
    %51 = vst.msk [vmem:[%s50] ss:$-8 sm:$0x3] %vm49, %v48
    %s53 = sshllo.u32 0, 1
    %v55 = vld [vmem:[#allocation0] sm:%s53]
    %s56 = sshllo.u32 0, 1
    %57 = vst [vmem:[%s1] sm:%s56] %v55
    %s58 = scalar_lea.vmem [#allocation0], 8
    %v59 = vld [vmem:[%s58] sm:%s53]
    %s60 = sshllo.u32 0, 1
    %s61 = scalar_lea.vmem %s1, 1
    %62 = vst [vmem:[%s61] sm:%s60] %v59
    %s63 = scalar_lea.vmem [#allocation0], 16
    %v64 = vld [vmem:[%s63] sm:%s53]
    %s65 = sshllo.u32 0, 1
    %s66 = smul.addr 1, 2
    %s67 = scalar_lea.vmem %s1, %s66
    %68 = vst [vmem:[%s67] sm:%s65] %v64
    %s69 = scalar_lea.vmem [#allocation0], 24
    %v70 = vld [vmem:[%s69] sm:%s53]
    %s71 = sshllo.u32 0, 1
    %s72 = smul.addr 1, 3
    %s73 = scalar_lea.vmem %s1, %s72
    %74 = vst [vmem:[%s73] sm:%s71] %v70
    %s75 = scalar_lea.vmem [#allocation0], 32
    %v76 = vld [vmem:[%s75] sm:%s53]
    %s77 = sshllo.u32 0, 1
    %s78 = smul.addr 1, 4
    %s79 = scalar_lea.vmem %s1, %s78
    %80 = vst [vmem:[%s79] sm:%s77] %v76
    %s81 = scalar_lea.vmem [#allocation0], 40
    %v82 = vld [vmem:[%s81] sm:%s53]
    %s83 = sshllo.u32 0, 1
    %s84 = smul.addr 1, 5
    %s85 = scalar_lea.vmem %s1, %s84
    %86 = vst [vmem:[%s85] sm:%s83] %v82

// kernel: s2s_hsid_forward.3
$region0: #{s2s_hsid_forward.3}
  #allocation0 [shape = 'u32[]', space=smem, size = 0x4, offset = 0x4, fixed_abs, tag = 'smem constant byte address 0x4 - core index']
  #allocation1 [shape = 'u32[144,128]{1,0:T(1,128)}', space=vmem, size = 0x12000, scoped, tag = 'internal scratch']
  #allocation2 [shape = 'f32[4,686]{1,0:T(4,128)}', space=vmem, size = 0x3000, scoped, tag = 'scratch operand']
  #allocation3 [shape = 'f32[36,648]{1,0:T(8,128)}', space=vmem, size = 0x1e000, scoped, tag = 'scratch operand']
  %s0 = inlined_call_operand.vmem [shape: f32[8,1,648], index: 0, kind: input, shape index: {}]
  %s1 = inlined_call_operand.vmem [shape: f32[4,648], index: 1, kind: input, shape index: {}]
  %s2 = inlined_call_operand.vmem [shape: f32[1,648], index: 2, kind: input, shape index: {}]
  %s3 = inlined_call_operand.vmem [shape: f32[4,46], index: 3, kind: input, shape index: {}]
  %s4 = inlined_call_operand.vmem [shape: f32[8,1,648], index: 4, kind: output, shape index: {}]
  %s5 = sld [smem:[#allocation0]]
  $region49: #{s2s_hsid_forward.3} parent=0
    _
  %s7 = ssub.s32 1, %s5
  %s8 = scalar_select 0, %s7, %s5
  loop: start=0, step=1, limit=10
  $region2: #{s2s_hsid_forward.3} parent=0 // loop_pre_header
    _
  $region3: #{s2s_hsid_forward.3} parent=0 // loop_header
    %s10 = sphi 0, %s14
    %p11 = scmp.ge.s32.totalorder %s10, 10
    %s20 = sphi 0, %s22
    %s23 = sphi 0, %s20
    %s24 = sphi 0, %s23
    %s40 = sphi 0, %s24
    %s44 = sphi 0, %s44
    %s46 = sphi 0, %s44
    %s47 = sphi 0, %s46
    %s61 = sphi 0, %s47
    %s65 = sphi 0, %s65
    %s67 = sphi 0, %s65
    %s68 = sphi 0, %s67
    %s82 = sphi 0, %s68
    %s86 = sphi 0, %s86
    %s88 = sphi 0, %s86
    %s89 = sphi 0, %s88
    %s103 = sphi 0, %s89
    %s109 = sphi 0, %s111
    %s112 = sphi 0, %s109
    %s113 = sphi 0, %s112
    %s129 = sphi 0, %s113
  $region4: #{s2s_hsid_forward.3} parent=0 // loop_header_branch
    %13 = sbr.rel (%p11) target = $region8
  $region5: #{s2s_hsid_forward.3} parent=0 // loop_body
    %s15 = ssub.s32 %s10, 1
    %s16 = ssub.s32 %s10, 2
    %s17 = sadd.s32 %s10, 1
    %s18 = ssub.s32 %s10, %s17
    %p19 = scmp.eq.s32.totalorder %s18, 0
    %s21 = sadd.s32 %s20, 1
    %s22 = scalar_select %p19, %s20, %s21
    %p25 = pneg %p19
    %p26 = scmp.eq.s32.totalorder %s10, 7
    %p27 = por %p25, %p26
    %p28 = scmp.ne.s32.totalorder %s20, %s23
    %p29 = scmp.eq.s32.totalorder %s10, 0
    %p30 = por %p28, %p29
    %p31 = scmp.ne.s32.totalorder %s20, %s23
    %p32 = scmp.eq.s32.totalorder %s15, 7
    %p33 = por %p31, %p32
    %p34 = scmp.ne.s32.totalorder %s23, %s24
    %p35 = scmp.eq.s32.totalorder %s15, 0
    %p36 = por %p34, %p35
    %p37 = scmp.ne.s32.totalorder %s23, %s24
    %p38 = scmp.eq.s32.totalorder %s16, 7
    %p39 = por %p37, %p38
    %p41 = scmp.ne.s32.totalorder %s24, %s40
    %p42 = scmp.eq.s32.totalorder %s16, 0
    %p43 = por %p41, %p42
    %s45 = sadd.s32 %s44, 1
    %p48 = scmp.eq.s32.totalorder %s10, 7
    %p49 = scmp.ne.s32.totalorder %s44, %s46
    %p50 = scmp.eq.s32.totalorder %s10, 0
    %p51 = por %p49, %p50
    %p52 = scmp.ne.s32.totalorder %s44, %s46
    %p53 = scmp.eq.s32.totalorder %s15, 7
    %p54 = por %p52, %p53
    %p55 = scmp.ne.s32.totalorder %s46, %s47
    %p56 = scmp.eq.s32.totalorder %s15, 0
    %p57 = por %p55, %p56
    %p58 = scmp.ne.s32.totalorder %s46, %s47
    %p59 = scmp.eq.s32.totalorder %s16, 7
    %p60 = por %p58, %p59
    %p62 = scmp.ne.s32.totalorder %s47, %s61
    %p63 = scmp.eq.s32.totalorder %s16, 0
    %p64 = por %p62, %p63
    %s66 = sadd.s32 %s65, 1
    %p69 = scmp.eq.s32.totalorder %s10, 7
    %p70 = scmp.ne.s32.totalorder %s65, %s67
    %p71 = scmp.eq.s32.totalorder %s10, 0
    %p72 = por %p70, %p71
    %p73 = scmp.ne.s32.totalorder %s65, %s67
    %p74 = scmp.eq.s32.totalorder %s15, 7
    %p75 = por %p73, %p74
    %p76 = scmp.ne.s32.totalorder %s67, %s68
    %p77 = scmp.eq.s32.totalorder %s15, 0
    %p78 = por %p76, %p77
    %p79 = scmp.ne.s32.totalorder %s67, %s68
    %p80 = scmp.eq.s32.totalorder %s16, 7
    %p81 = por %p79, %p80
    %p83 = scmp.ne.s32.totalorder %s68, %s82
    %p84 = scmp.eq.s32.totalorder %s16, 0
    %p85 = por %p83, %p84
    %s87 = sadd.s32 %s86, 1
    %p90 = scmp.eq.s32.totalorder %s10, 7
    %p91 = scmp.ne.s32.totalorder %s86, %s88
    %p92 = scmp.eq.s32.totalorder %s10, 0
    %p93 = por %p91, %p92
    %p94 = scmp.ne.s32.totalorder %s86, %s88
    %p95 = scmp.eq.s32.totalorder %s15, 7
    %p96 = por %p94, %p95
    %p97 = scmp.ne.s32.totalorder %s88, %s89
    %p98 = scmp.eq.s32.totalorder %s15, 0
    %p99 = por %p97, %p98
    %p100 = scmp.ne.s32.totalorder %s88, %s89
    %p101 = scmp.eq.s32.totalorder %s16, 7
    %p102 = por %p100, %p101
    %p104 = scmp.ne.s32.totalorder %s89, %s103
    %p105 = scmp.eq.s32.totalorder %s16, 0
    %p106 = por %p104, %p105
    %s107 = ssub.s32 %s10, %s17
    %p108 = scmp.eq.s32.totalorder %s107, 0
    %s110 = sadd.s32 %s109, 1
    %s111 = scalar_select %p108, %s109, %s110
    %p114 = pneg %p108
    %p115 = scmp.eq.s32.totalorder %s10, 7
    %p116 = por %p114, %p115
    %p117 = scmp.ne.s32.totalorder %s109, %s112
    %p118 = scmp.eq.s32.totalorder %s10, 0
    %p119 = por %p117, %p118
    %p120 = scmp.ne.s32.totalorder %s109, %s112
    %p121 = scmp.eq.s32.totalorder %s15, 7
    %p122 = por %p120, %p121
    %p123 = scmp.ne.s32.totalorder %s112, %s113
    %p124 = scmp.eq.s32.totalorder %s15, 0
    %p125 = por %p123, %p124
    %p126 = scmp.ne.s32.totalorder %s112, %s113
    %p127 = scmp.eq.s32.totalorder %s16, 7
    %p128 = por %p126, %p127
    %p130 = scmp.ne.s32.totalorder %s113, %s129
    %p131 = scmp.eq.s32.totalorder %s16, 0
    %p132 = por %p130, %p131
    %p133 = scmp.le.s32.totalorder 1, %s10
    %p134 = scmp.lt.s32.totalorder %s10, 9
    %p135 = pnand %p133, %p134
    %p136 = pneg %p135
    // Predicated region
    $region9: #{s2s_hsid_forward.3} parent=5 // pred_check
      _
    $region10: #{s2s_hsid_forward.3} parent=5 // pred_check_branch
      %138 = sbr.rel (%p135) target = $region12
    $region11: #{s2s_hsid_forward.3} parent=5 // pred_region
      %s139 = ssub.s32 %s10, 1
      // Predicated region
      $region13: #{s2s_hsid_forward.3} parent=11 // pred_check
        %p140 = pneg %p57
      $region14: #{s2s_hsid_forward.3} parent=11 // pred_check_branch
        %142 = sbr.rel (%p140) target = $region16
      $region15: #{s2s_hsid_forward.3} parent=11 // pred_region
        _
      $region16: #{s2s_hsid_forward.3} parent=11 // pred_fallthru
        _
      // Predicated region
      $region17: #{s2s_hsid_forward.3} parent=11 // pred_check
        %p143 = pneg %p78
      $region18: #{s2s_hsid_forward.3} parent=11 // pred_check_branch
        %145 = sbr.rel (%p143) target = $region20
      $region19: #{s2s_hsid_forward.3} parent=11 // pred_region
        _
      $region20: #{s2s_hsid_forward.3} parent=11 // pred_fallthru
        _
      // Predicated region
      $region21: #{s2s_hsid_forward.3} parent=11 // pred_check
        %p146 = pneg %p99
      $region22: #{s2s_hsid_forward.3} parent=11 // pred_check_branch
        %148 = sbr.rel (%p146) target = $region24
      $region23: #{s2s_hsid_forward.3} parent=11 // pred_region
        _
      $region24: #{s2s_hsid_forward.3} parent=11 // pred_fallthru
        _
    $region12: #{s2s_hsid_forward.3} parent=5 // pred_fallthru
      _
    %p149 = scmp.lt.s32.totalorder %s10, 8
    // Predicated region
    $region25: #{s2s_hsid_forward.3} parent=5 // pred_check
      %p150 = pneg %p149
    $region26: #{s2s_hsid_forward.3} parent=5 // pred_check_branch
      %152 = sbr.rel (%p150) target = $region28
    $region27: #{s2s_hsid_forward.3} parent=5 // pred_region
      // Predicated region
      $region29: #{s2s_hsid_forward.3} parent=27 // pred_check
        %p153 = pneg %p30
      $region30: #{s2s_hsid_forward.3} parent=27 // pred_check_branch
        %155 = sbr.rel (%p153) target = $region32
      $region31: #{s2s_hsid_forward.3} parent=27 // pred_region
        %p156 = scmp.lt.s32.totalorder %s10, 7
        %s157 = scalar_select %p156, %s10, 7
        %s158 = smul.addr %s157, 6
        %s159 = scalar_lea.vmem %s0, %s158
      $region32: #{s2s_hsid_forward.3} parent=27 // pred_fallthru
        _
    $region28: #{s2s_hsid_forward.3} parent=5 // pred_fallthru
      _
    %p160 = scmp.le.s32.totalorder 1, %s10
    %p161 = scmp.lt.s32.totalorder %s10, 9
    %p162 = pnand %p160, %p161
    %p163 = pneg %p162
    // Predicated region
    $region33: #{s2s_hsid_forward.3} parent=5 // pred_check
      _
    $region34: #{s2s_hsid_forward.3} parent=5 // pred_check_branch
      %165 = sbr.rel (%p162) target = $region36
    $region35: #{s2s_hsid_forward.3} parent=5 // pred_region
      %s166 = ssub.s32 %s10, 1
      %p167 = scmp.lt.s32.totalorder %s15, 7
      %s168 = scalar_select %p167, %s15, 7
      %s169 = smul.addr %s168, 6
      %s170 = scalar_lea.vmem %s0, %s169
      %p171 = pneg %p36
      %p172 = pneg %p33
      %p173 = pneg %p57
      %p174 = pneg %p54
      %p175 = pneg %p78
      %p176 = pneg %p75
      %p177 = pneg %p99
      %p178 = pneg %p96
      %p179 = pneg %p125
      %p180 = pneg %p122
      %p181 = scmp.lt.s32.totalorder %s15, 7
      %s182 = scalar_select %p181, %s15, 7
      %s183 = smul.addr %s182, 6
      %s184 = scalar_lea.vmem %s4, %s183
      %p185 = scmp.lt.s32.totalorder %s15, 7
      %s186 = scalar_select %p185, %s15, 7
      %s187 = smul.addr %s186, 6
      %s188 = scalar_lea.vmem %s0, %s187
      %p189 = scmp.lt.s32.totalorder %s15, 7
      %s190 = scalar_select %p189, %s15, 7
      %s191 = smul.addr %s190, 6
      %s192 = scalar_lea.vmem %s4, %s191
      %vm193 = vcmask 150528
      %194 = vst.msk [vmem:[#allocation2] sm:$0xf] %vm193, 0.0
      %vm195 = vcmask 371928
      %196 = vst.msk [vmem:[#allocation2 + $0x14] sm:$0xf] %vm195, 0.0
      %v197 = vld [vmem:[%s188] sm:$0x3f]
      %v198 = vld [vmem:[%s2] sm:$0x3f]
      %v199 = vld [vmem:[%s3] sm:$0xf]
      %v200 = vld [vmem:[%s3] sm:$0x1]
      %202 = vrot.lane.b32.xlu0 %v197, 19
      %v203 = vpop.permute.xlu0 %202
      %v204 = vrot.slane %v203, 7
      %vm205 = vcmask 154624
      %v206 = vsel %vm205, %v204, %v203
      %v208 = vlaneseq
      %vm209 = vcmp.ge.s32.totalorder %v208, 19
      %vm210 = vcmp.lt.s32.totalorder %v208, 667
      %vm211 = vmand %vm209, %vm210
      %212 = vst.msk [vmem:[#allocation2] ss:$4 sm:$0x3f] %vm211, %v206
      %v213 = vld [vmem:[%s1] sm:$0xff]
      %v214 = vld [vmem:[%s1 + $0x8] sm:$0xff]
      %v215 = vld [vmem:[%s1 + $0x10] sm:$0xff]
      %v216 = vld [vmem:[#allocation2] ss:$4 sm:$0x3f]
      %218 = vset.pattern.permute.xlu0 0
      %219 = vperm.xlu0 %218, %v199
      %v220 = vpop.permute.xlu0 %219
      %v223 = vlaneseq
      %v224 = vshrl.u32 %v223, 7
      %v225 = vsub.s32 0, %v224
      %v226 = vrot.slane %v216, %v225
      %v227 = vlaneseq
      %v228 = vshrl.u32 %v227, 7
      %v229 = vsub.s32 1, %v228
      %v230 = vrot.slane %v216, %v229
      %v231 = vlaneseq
      %v232 = vshrl.u32 %v231, 7
      %v233 = vsub.s32 2, %v232
      %v234 = vrot.slane %v216, %v233
      %v235 = vlaneseq
      %v236 = vshrl.u32 %v235, 7
      %v237 = vsub.s32 3, %v236
      %v238 = vrot.slane %v216, %v237
      %v239 = vlaneseq
      %v240 = vshrl.u32 %v239, 7
      %v241 = vsub.s32 4, %v240
      %v242 = vrot.slane %v216, %v241
      %v243 = vlaneseq
      %v244 = vshrl.u32 %v243, 7
      %v245 = vsub.s32 5, %v244
      %v246 = vrot.slane %v216, %v245
      %v253 = vmul.f32 %v220, %v226
      %v254 = vmul.f32 %v220, %v230
      %v255 = vmul.f32 %v220, %v234
      %v256 = vmul.f32 %v220, %v238
      %v257 = vmul.f32 %v220, %v242
      %v258 = vmul.f32 %v220, %v246
      %v265 = vcombine.low %v253, %v254
      %v266 = vcombine.low %v255, %v256
      %v267 = vcombine.low %v257, %v258
      %v271 = vadd.f32 %v213, %v265
      %v272 = vadd.f32 %v214, %v266
      %v273 = vadd.f32 %v215, %v267
      %v274 = vld [vmem:[#allocation2] ss:$4 sm:$0x3f]
      %275 = vset.pattern.permute.xlu0 1
      %276 = vperm.xlu0 %275, %v199
      %v277 = vpop.permute.xlu0 %276
      %v280 = vlaneseq
      %v281 = vshrl.u32 %v280, 7
      %v282 = vsub.s32 0, %v281
      %v283 = vrot.slane %v274, %v282
      %v284 = vlaneseq
      %v285 = vshrl.u32 %v284, 7
      %v286 = vsub.s32 1, %v285
      %v287 = vrot.slane %v274, %v286
      %v288 = vlaneseq
      %v289 = vshrl.u32 %v288, 7
      %v290 = vsub.s32 2, %v289
      %v291 = vrot.slane %v274, %v290
      %v292 = vlaneseq
      %v293 = vshrl.u32 %v292, 7
      %v294 = vsub.s32 3, %v293
      %v295 = vrot.slane %v274, %v294
      %v296 = vlaneseq
      %v297 = vshrl.u32 %v296, 7
      %v298 = vsub.s32 4, %v297
      %v299 = vrot.slane %v274, %v298
      %v300 = vlaneseq
      %v301 = vshrl.u32 %v300, 7
      %v302 = vsub.s32 5, %v301
      %v303 = vrot.slane %v274, %v302
      %v310 = vmul.f32 %v277, %v283
      %v311 = vmul.f32 %v277, %v287
      %v312 = vmul.f32 %v277, %v291
      %v313 = vmul.f32 %v277, %v295
      %v314 = vmul.f32 %v277, %v299
      %v315 = vmul.f32 %v277, %v303
      %v322 = vcombine.low %v310, %v311
      %v323 = vcombine.low %v312, %v313
      %v324 = vcombine.low %v314, %v315
      %325 = vrot.lane.b32.xlu0 %v322, 127
      %v326 = vpop.permute.xlu0 %325
      %327 = vrot.lane.b32.xlu0 %v323, 127
      %v328 = vpop.permute.xlu0 %327
      %329 = vrot.lane.b32.xlu0 %v324, 127
      %v330 = vpop.permute.xlu0 %329
      %v331 = vrot.slane %v326, 4
      %v332 = vrot.slane %v328, 4
      %v333 = vrot.slane %v330, 4
      %vm334 = vcmask 1043456
      %v335 = vsel %vm334, %v331, %v332
      %vm336 = vcmask 1039360
      %v337 = vsel %vm336, %v326, %v335
      %v338 = vsel %vm334, %v332, %v333
      %v339 = vsel %vm336, %v328, %v338
      %v340 = vsel %vm336, %v330, %v333
      %v344 = vadd.f32 %v271, %v337
      %v345 = vadd.f32 %v272, %v339
      %v346 = vadd.f32 %v273, %v340
      %v347 = vld [vmem:[#allocation2] ss:$4 sm:$0x3f]
      %348 = vset.pattern.permute.xlu0 2
      %349 = vperm.xlu0 %348, %v199
      %v350 = vpop.permute.xlu0 %349
      %v353 = vlaneseq
      %v354 = vshrl.u32 %v353, 7
      %v355 = vsub.s32 0, %v354
      %v356 = vrot.slane %v347, %v355
      %v357 = vlaneseq
      %v358 = vshrl.u32 %v357, 7
      %v359 = vsub.s32 1, %v358
      %v360 = vrot.slane %v347, %v359
      %v361 = vlaneseq
      %v362 = vshrl.u32 %v361, 7
      %v363 = vsub.s32 2, %v362
      %v364 = vrot.slane %v347, %v363
      %v365 = vlaneseq
      %v366 = vshrl.u32 %v365, 7
      %v367 = vsub.s32 3, %v366
      %v368 = vrot.slane %v347, %v367
      %v369 = vlaneseq
      %v370 = vshrl.u32 %v369, 7
      %v371 = vsub.s32 4, %v370
      %v372 = vrot.slane %v347, %v371
      %v373 = vlaneseq
      %v374 = vshrl.u32 %v373, 7
      %v375 = vsub.s32 5, %v374
      %v376 = vrot.slane %v347, %v375
      %v383 = vmul.f32 %v350, %v356
      %v384 = vmul.f32 %v350, %v360
      %v385 = vmul.f32 %v350, %v364
      %v386 = vmul.f32 %v350, %v368
      %v387 = vmul.f32 %v350, %v372
      %v388 = vmul.f32 %v350, %v376
      %v395 = vcombine.low %v383, %v384
      %v396 = vcombine.low %v385, %v386
      %v397 = vcombine.low %v387, %v388
      %398 = vrot.lane.b32.xlu0 %v395, 126
      %v399 = vpop.permute.xlu0 %398
      %400 = vrot.lane.b32.xlu0 %v396, 126
      %v401 = vpop.permute.xlu0 %400
      %402 = vrot.lane.b32.xlu0 %v397, 126
      %v403 = vpop.permute.xlu0 %402
      %v404 = vrot.slane %v399, 4
      %v405 = vrot.slane %v401, 4
      %v406 = vrot.slane %v403, 4
      %v407 = vsel %vm334, %v404, %v405
      %vm408 = vcmask 1031168
      %v409 = vsel %vm408, %v399, %v407
      %v410 = vsel %vm334, %v405, %v406
      %v411 = vsel %vm408, %v401, %v410
      %v412 = vsel %vm408, %v403, %v406
      %v416 = vadd.f32 %v344, %v409
      %v417 = vadd.f32 %v345, %v411
      %v418 = vadd.f32 %v346, %v412
      %v419 = vld [vmem:[#allocation2] ss:$4 sm:$0x3f]
      %420 = vset.pattern.permute.xlu0 3
      %421 = vperm.xlu0 %420, %v199
      %v422 = vpop.permute.xlu0 %421
      %v425 = vlaneseq
      %v426 = vshrl.u32 %v425, 7
      %v427 = vsub.s32 0, %v426
      %v428 = vrot.slane %v419, %v427
      %v429 = vlaneseq
      %v430 = vshrl.u32 %v429, 7
      %v431 = vsub.s32 1, %v430
      %v432 = vrot.slane %v419, %v431
      %v433 = vlaneseq
      %v434 = vshrl.u32 %v433, 7
      %v435 = vsub.s32 2, %v434
      %v436 = vrot.slane %v419, %v435
      %v437 = vlaneseq
      %v438 = vshrl.u32 %v437, 7
      %v439 = vsub.s32 3, %v438
      %v440 = vrot.slane %v419, %v439
      %v441 = vlaneseq
      %v442 = vshrl.u32 %v441, 7
      %v443 = vsub.s32 4, %v442
      %v444 = vrot.slane %v419, %v443
      %v445 = vlaneseq
      %v446 = vshrl.u32 %v445, 7
      %v447 = vsub.s32 5, %v446
      %v448 = vrot.slane %v419, %v447
      %v455 = vmul.f32 %v422, %v428
      %v456 = vmul.f32 %v422, %v432
      %v457 = vmul.f32 %v422, %v436
      %v458 = vmul.f32 %v422, %v440
      %v459 = vmul.f32 %v422, %v444
      %v460 = vmul.f32 %v422, %v448
      %v467 = vcombine.low %v455, %v456
      %v468 = vcombine.low %v457, %v458
      %v469 = vcombine.low %v459, %v460
      %470 = vrot.lane.b32.xlu0 %v467, 110
      %v471 = vpop.permute.xlu0 %470
      %472 = vrot.lane.b32.xlu0 %v468, 110
      %v473 = vpop.permute.xlu0 %472
      %474 = vrot.lane.b32.xlu0 %v469, 110
      %v475 = vpop.permute.xlu0 %474
      %v476 = vrot.slane %v471, 4
      %v477 = vrot.slane %v473, 4
      %v478 = vrot.slane %v475, 4
      %v479 = vsel %vm334, %v476, %v477
      %vm480 = vcmask 900096
      %v481 = vsel %vm480, %v471, %v479
      %v482 = vsel %vm334, %v477, %v478
      %v483 = vsel %vm480, %v473, %v482
      %v484 = vsel %vm480, %v475, %v478
      %v488 = vadd.f32 %v416, %v481
      %v489 = vadd.f32 %v417, %v483
      %v490 = vadd.f32 %v418, %v484
      %v491 = vld [vmem:[#allocation2] ss:$4 sm:$0x3f]
      %492 = vset.pattern.permute.xlu0 4
      %493 = vperm.xlu0 %492, %v199
      %v494 = vpop.permute.xlu0 %493
      %v497 = vlaneseq
      %v498 = vshrl.u32 %v497, 7
      %v499 = vsub.s32 0, %v498
      %v500 = vrot.slane %v491, %v499
      %v501 = vlaneseq
      %v502 = vshrl.u32 %v501, 7
      %v503 = vsub.s32 1, %v502
      %v504 = vrot.slane %v491, %v503
      %v505 = vlaneseq
      %v506 = vshrl.u32 %v505, 7
      %v507 = vsub.s32 2, %v506
      %v508 = vrot.slane %v491, %v507
      %v509 = vlaneseq
      %v510 = vshrl.u32 %v509, 7
      %v511 = vsub.s32 3, %v510
      %v512 = vrot.slane %v491, %v511
      %v513 = vlaneseq
      %v514 = vshrl.u32 %v513, 7
      %v515 = vsub.s32 4, %v514
      %v516 = vrot.slane %v491, %v515
      %v517 = vlaneseq
      %v518 = vshrl.u32 %v517, 7
      %v519 = vsub.s32 5, %v518
      %v520 = vrot.slane %v491, %v519
      %v527 = vmul.f32 %v494, %v500
      %v528 = vmul.f32 %v494, %v504
      %v529 = vmul.f32 %v494, %v508
      %v530 = vmul.f32 %v494, %v512
      %v531 = vmul.f32 %v494, %v516
      %v532 = vmul.f32 %v494, %v520
      %v539 = vcombine.low %v527, %v528
      %v540 = vcombine.low %v529, %v530
      %v541 = vcombine.low %v531, %v532
      %542 = vrot.lane.b32.xlu0 %v539, 109
      %v543 = vpop.permute.xlu0 %542
      %544 = vrot.lane.b32.xlu0 %v540, 109
      %v545 = vpop.permute.xlu0 %544
      %546 = vrot.lane.b32.xlu0 %v541, 109
      %v547 = vpop.permute.xlu0 %546
      %v548 = vrot.slane %v543, 4
      %v549 = vrot.slane %v545, 4
      %v550 = vrot.slane %v547, 4
      %v551 = vsel %vm334, %v548, %v549
      %vm552 = vcmask 891904
      %v553 = vsel %vm552, %v543, %v551
      %v554 = vsel %vm334, %v549, %v550
      %v555 = vsel %vm552, %v545, %v554
      %v556 = vsel %vm552, %v547, %v550
      %v560 = vadd.f32 %v488, %v553
      %v561 = vadd.f32 %v489, %v555
      %v562 = vadd.f32 %v490, %v556
      %v563 = vld [vmem:[#allocation2] ss:$4 sm:$0x3f]
      %564 = vset.pattern.permute.xlu0 5
      %565 = vperm.xlu0 %564, %v199
      %v566 = vpop.permute.xlu0 %565
      %v569 = vlaneseq
      %v570 = vshrl.u32 %v569, 7
      %v571 = vsub.s32 0, %v570
      %v572 = vrot.slane %v563, %v571
      %v573 = vlaneseq
      %v574 = vshrl.u32 %v573, 7
      %v575 = vsub.s32 1, %v574
      %v576 = vrot.slane %v563, %v575
      %v577 = vlaneseq
      %v578 = vshrl.u32 %v577, 7
      %v579 = vsub.s32 2, %v578
      %v580 = vrot.slane %v563, %v579
      %v581 = vlaneseq
      %v582 = vshrl.u32 %v581, 7
      %v583 = vsub.s32 3, %v582
      %v584 = vrot.slane %v563, %v583
      %v585 = vlaneseq
      %v586 = vshrl.u32 %v585, 7
      %v587 = vsub.s32 4, %v586
      %v588 = vrot.slane %v563, %v587
      %v589 = vlaneseq
      %v590 = vshrl.u32 %v589, 7
      %v591 = vsub.s32 5, %v590
      %v592 = vrot.slane %v563, %v591
      %v599 = vmul.f32 %v566, %v572
      %v600 = vmul.f32 %v566, %v576
      %v601 = vmul.f32 %v566, %v580
      %v602 = vmul.f32 %v566, %v584
      %v603 = vmul.f32 %v566, %v588
      %v604 = vmul.f32 %v566, %v592
      %v611 = vcombine.low %v599, %v600
      %v612 = vcombine.low %v601, %v602
      %v613 = vcombine.low %v603, %v604
      %614 = vrot.lane.b32.xlu0 %v611, 108
      %v615 = vpop.permute.xlu0 %614
      %616 = vrot.lane.b32.xlu0 %v612, 108
      %v617 = vpop.permute.xlu0 %616
      %618 = vrot.lane.b32.xlu0 %v613, 108
      %v619 = vpop.permute.xlu0 %618
      %v620 = vrot.slane %v615, 4
      %v621 = vrot.slane %v617, 4
      %v622 = vrot.slane %v619, 4
      %v623 = vsel %vm334, %v620, %v621
      %vm624 = vcmask 883712
      %v625 = vsel %vm624, %v615, %v623
      %v626 = vsel %vm334, %v621, %v622
      %v627 = vsel %vm624, %v617, %v626
      %v628 = vsel %vm624, %v619, %v622
      %v632 = vadd.f32 %v560, %v625
      %v633 = vadd.f32 %v561, %v627
      %v634 = vadd.f32 %v562, %v628
      %v635 = vld [vmem:[#allocation2] ss:$4 sm:$0x3f]
      %636 = vset.pattern.permute.xlu0 6
      %637 = vperm.xlu0 %636, %v199
      %v638 = vpop.permute.xlu0 %637
      %v641 = vlaneseq
      %v642 = vshrl.u32 %v641, 7
      %v643 = vsub.s32 0, %v642
      %v644 = vrot.slane %v635, %v643
      %v645 = vlaneseq
      %v646 = vshrl.u32 %v645, 7
      %v647 = vsub.s32 1, %v646
      %v648 = vrot.slane %v635, %v647
      %v649 = vlaneseq
      %v650 = vshrl.u32 %v649, 7
      %v651 = vsub.s32 2, %v650
      %v652 = vrot.slane %v635, %v651
      %v653 = vlaneseq
      %v654 = vshrl.u32 %v653, 7
      %v655 = vsub.s32 3, %v654
      %v656 = vrot.slane %v635, %v655
      %v657 = vlaneseq
      %v658 = vshrl.u32 %v657, 7
      %v659 = vsub.s32 4, %v658
      %v660 = vrot.slane %v635, %v659
      %v661 = vlaneseq
      %v662 = vshrl.u32 %v661, 7
      %v663 = vsub.s32 5, %v662
      %v664 = vrot.slane %v635, %v663
      %v671 = vmul.f32 %v638, %v644
      %v672 = vmul.f32 %v638, %v648
      %v673 = vmul.f32 %v638, %v652
      %v674 = vmul.f32 %v638, %v656
      %v675 = vmul.f32 %v638, %v660
      %v676 = vmul.f32 %v638, %v664
      %v683 = vcombine.low %v671, %v672
      %v684 = vcombine.low %v673, %v674
      %v685 = vcombine.low %v675, %v676
      %686 = vrot.lane.b32.xlu0 %v683, 92
      %v687 = vpop.permute.xlu0 %686
      %688 = vrot.lane.b32.xlu0 %v684, 92
      %v689 = vpop.permute.xlu0 %688
      %690 = vrot.lane.b32.xlu0 %v685, 92
      %v691 = vpop.permute.xlu0 %690
      %v692 = vrot.slane %v687, 4
      %v693 = vrot.slane %v689, 4
      %v694 = vrot.slane %v691, 4
      %v695 = vsel %vm334, %v692, %v693
      %vm696 = vcmask 752640
      %v697 = vsel %vm696, %v687, %v695
      %v698 = vsel %vm334, %v693, %v694
      %v699 = vsel %vm696, %v689, %v698
      %v700 = vsel %vm696, %v691, %v694
      %v704 = vadd.f32 %v632, %v697
      %v705 = vadd.f32 %v633, %v699
      %v706 = vadd.f32 %v634, %v700
      %v707 = vld [vmem:[#allocation2] ss:$4 sm:$0x3f]
      %708 = vset.pattern.permute.xlu0 7
      %709 = vperm.xlu0 %708, %v199
      %v710 = vpop.permute.xlu0 %709
      %v713 = vlaneseq
      %v714 = vshrl.u32 %v713, 7
      %v715 = vsub.s32 0, %v714
      %v716 = vrot.slane %v707, %v715
      %v717 = vlaneseq
      %v718 = vshrl.u32 %v717, 7
      %v719 = vsub.s32 1, %v718
      %v720 = vrot.slane %v707, %v719
      %v721 = vlaneseq
      %v722 = vshrl.u32 %v721, 7
      %v723 = vsub.s32 2, %v722
      %v724 = vrot.slane %v707, %v723
      %v725 = vlaneseq
      %v726 = vshrl.u32 %v725, 7
      %v727 = vsub.s32 3, %v726
      %v728 = vrot.slane %v707, %v727
      %v729 = vlaneseq
      %v730 = vshrl.u32 %v729, 7
      %v731 = vsub.s32 4, %v730
      %v732 = vrot.slane %v707, %v731
      %v733 = vlaneseq
      %v734 = vshrl.u32 %v733, 7
      %v735 = vsub.s32 5, %v734
      %v736 = vrot.slane %v707, %v735
      %v743 = vmul.f32 %v710, %v716
      %v744 = vmul.f32 %v710, %v720
      %v745 = vmul.f32 %v710, %v724
      %v746 = vmul.f32 %v710, %v728
      %v747 = vmul.f32 %v710, %v732
      %v748 = vmul.f32 %v710, %v736
      %v755 = vcombine.low %v743, %v744
      %v756 = vcombine.low %v745, %v746
      %v757 = vcombine.low %v747, %v748
      %758 = vrot.lane.b32.xlu0 %v755, 91
      %v759 = vpop.permute.xlu0 %758
      %760 = vrot.lane.b32.xlu0 %v756, 91
      %v761 = vpop.permute.xlu0 %760
      %762 = vrot.lane.b32.xlu0 %v757, 91
      %v763 = vpop.permute.xlu0 %762
      %v764 = vrot.slane %v759, 4
      %v765 = vrot.slane %v761, 4
      %v766 = vrot.slane %v763, 4
      %v767 = vsel %vm334, %v764, %v765
      %vm768 = vcmask 744448
      %v769 = vsel %vm768, %v759, %v767
      %v770 = vsel %vm334, %v765, %v766
      %v771 = vsel %vm768, %v761, %v770
      %v772 = vsel %vm768, %v763, %v766
      %v776 = vadd.f32 %v704, %v769
      %v777 = vadd.f32 %v705, %v771
      %v778 = vadd.f32 %v706, %v772
      %v779 = vld [vmem:[#allocation2] ss:$4 sm:$0x3f]
      %780 = vset.pattern.permute.xlu0 8
      %781 = vperm.xlu0 %780, %v199
      %v782 = vpop.permute.xlu0 %781
      %v785 = vlaneseq
      %v786 = vshrl.u32 %v785, 7
      %v787 = vsub.s32 0, %v786
      %v788 = vrot.slane %v779, %v787
      %v789 = vlaneseq
      %v790 = vshrl.u32 %v789, 7
      %v791 = vsub.s32 1, %v790
      %v792 = vrot.slane %v779, %v791
      %v793 = vlaneseq
      %v794 = vshrl.u32 %v793, 7
      %v795 = vsub.s32 2, %v794
      %v796 = vrot.slane %v779, %v795
      %v797 = vlaneseq
      %v798 = vshrl.u32 %v797, 7
      %v799 = vsub.s32 3, %v798
      %v800 = vrot.slane %v779, %v799
      %v801 = vlaneseq
      %v802 = vshrl.u32 %v801, 7
      %v803 = vsub.s32 4, %v802
      %v804 = vrot.slane %v779, %v803
      %v805 = vlaneseq
      %v806 = vshrl.u32 %v805, 7
      %v807 = vsub.s32 5, %v806
      %v808 = vrot.slane %v779, %v807
      %v815 = vmul.f32 %v782, %v788
      %v816 = vmul.f32 %v782, %v792
      %v817 = vmul.f32 %v782, %v796
      %v818 = vmul.f32 %v782, %v800
      %v819 = vmul.f32 %v782, %v804
      %v820 = vmul.f32 %v782, %v808
      %v827 = vcombine.low %v815, %v816
      %v828 = vcombine.low %v817, %v818
      %v829 = vcombine.low %v819, %v820
      %830 = vrot.lane.b32.xlu0 %v827, 90
      %v831 = vpop.permute.xlu0 %830
      %832 = vrot.lane.b32.xlu0 %v828, 90
      %v833 = vpop.permute.xlu0 %832
      %834 = vrot.lane.b32.xlu0 %v829, 90
      %v835 = vpop.permute.xlu0 %834
      %v836 = vrot.slane %v831, 4
      %v837 = vrot.slane %v833, 4
      %v838 = vrot.slane %v835, 4
      %v839 = vsel %vm334, %v836, %v837
      %vm840 = vcmask 736256
      %v841 = vsel %vm840, %v831, %v839
      %v842 = vsel %vm334, %v837, %v838
      %v843 = vsel %vm840, %v833, %v842
      %v844 = vsel %vm840, %v835, %v838
      %v848 = vadd.f32 %v776, %v841
      %v849 = vadd.f32 %v777, %v843
      %v850 = vadd.f32 %v778, %v844
      %v851 = vmax.f32 %v848, 0.0
      %v852 = vmax.f32 %v849, 0.0
      %v853 = vmax.f32 %v850, 0.0
      %v855 = vlaneseq
      %v856 = vshrl.u32 %v855, 7
      %v857 = vsub.s32 0, %v856
      %v858 = vrot.slane %v198, %v857
      %v859 = vlaneseq
      %v860 = vshrl.u32 %v859, 7
      %v861 = vsub.s32 1, %v860
      %v862 = vrot.slane %v198, %v861
      %v863 = vlaneseq
      %v864 = vshrl.u32 %v863, 7
      %v865 = vsub.s32 2, %v864
      %v866 = vrot.slane %v198, %v865
      %v867 = vlaneseq
      %v868 = vshrl.u32 %v867, 7
      %v869 = vsub.s32 3, %v868
      %v870 = vrot.slane %v198, %v869
      %v871 = vlaneseq
      %v872 = vshrl.u32 %v871, 7
      %v873 = vsub.s32 4, %v872
      %v874 = vrot.slane %v198, %v873
      %v875 = vlaneseq
      %v876 = vshrl.u32 %v875, 7
      %v877 = vsub.s32 5, %v876
      %v878 = vrot.slane %v198, %v877
      %v879 = vcombine.low %v858, %v862
      %v880 = vcombine.low %v866, %v870
      %v881 = vcombine.low %v874, %v878
      %v885 = vmul.f32 %v851, %v879
      %v886 = vmul.f32 %v852, %v880
      %v887 = vmul.f32 %v853, %v881
      %891 = vrot.lane.b32.xlu0 %v885, 19
      %v892 = vpop.permute.xlu0 %891
      %893 = vrot.lane.b32.xlu0 %v886, 19
      %v894 = vpop.permute.xlu0 %893
      %895 = vrot.lane.b32.xlu0 %v887, 19
      %v896 = vpop.permute.xlu0 %895
      %v897 = vrot.slane %v892, 4
      %v898 = vrot.slane %v894, 4
      %v899 = vrot.slane %v896, 4
      %v900 = vsel %vm205, %v897, %v892
      %v901 = vsel %vm334, %v897, %v898
      %v902 = vsel %vm205, %v901, %v894
      %v903 = vsel %vm334, %v898, %v899
      %v904 = vsel %vm205, %v903, %v896
      %vm908 = vcmask 1043608
      %vm909 = vcmask 1047556
      %vm910 = vmor %vm909, %vm908
      %911 = vst.msk [vmem:[#allocation2] sm:$0xff] %vm910, %v900
      %912 = vst [vmem:[#allocation2 + $0x8] sm:$0xff] %v902
      %vm913 = vcmask 220164
      %vm914 = vmor %vm913, %vm334
      %915 = vst.msk [vmem:[#allocation2 + $0x10] sm:$0xff] %vm914, %v904
      %v916 = vld [vmem:[#allocation2] sm:$0xff]
      %v917 = vld [vmem:[#allocation2 + $0x8] sm:$0xff]
      %v918 = vld [vmem:[#allocation2 + $0x10] sm:$0xff]
      %v922 = vcombine.high %v916, %v916
      %v923 = vcombine.high %v917, %v917
      %v924 = vcombine.high %v918, %v918
      %928 = vst [vmem:[#allocation3] sm:$0xf] %v916
      %929 = vst [vmem:[#allocation3 + $0x8] sm:$0xf] %v922
      %930 = vst [vmem:[#allocation3 + $0x10] sm:$0xf] %v917
      %931 = vst [vmem:[#allocation3 + $0x18] sm:$0xf] %v923
      %932 = vst [vmem:[#allocation3 + $0x20] sm:$0xf] %v918
      %vm933 = vcmask 60416
      %934 = vst.msk [vmem:[#allocation3 + $0x28] sm:$0xf] %vm933, %v924
      %v935 = vld [vmem:[#allocation2] sm:$0xff]
      %v936 = vld [vmem:[#allocation2 + $0x8] sm:$0xff]
      %v937 = vld [vmem:[#allocation2 + $0x10] sm:$0xff]
      %v941 = vcombine.low %v935, %v935
      %v942 = vcombine.low %v936, %v936
      %v943 = vcombine.low %v937, %v937
      %944 = vrot.lane.b32.xlu0 %v941, 127
      %v945 = vpop.permute.xlu0 %944
      %946 = vrot.lane.b32.xlu0 %v935, 127
      %v947 = vpop.permute.xlu0 %946
      %948 = vrot.lane.b32.xlu0 %v942, 127
      %v949 = vpop.permute.xlu0 %948
      %950 = vrot.lane.b32.xlu0 %v936, 127
      %v951 = vpop.permute.xlu0 %950
      %952 = vrot.lane.b32.xlu0 %v943, 127
      %v953 = vpop.permute.xlu0 %952
      %954 = vrot.lane.b32.xlu0 %v937, 127
      %v955 = vpop.permute.xlu0 %954
      %v956 = vsel %vm336, %v945, %v947
      %v957 = vsel %vm336, %v947, %v949
      %v958 = vsel %vm336, %v949, %v951
      %v959 = vsel %vm336, %v951, %v953
      %v960 = vsel %vm336, %v953, %v955
      %967 = vst [vmem:[#allocation3] sm:$0xf0] %v956
      %968 = vst [vmem:[#allocation3 + $0x8] sm:$0xf0] %v957
      %969 = vst [vmem:[#allocation3 + $0x10] sm:$0xf0] %v958
      %970 = vst [vmem:[#allocation3 + $0x18] sm:$0xf0] %v959
      %971 = vst [vmem:[#allocation3 + $0x20] sm:$0xf0] %v960
      %vm972 = vcmask 64516
      %973 = vst.msk [vmem:[#allocation3 + $0x28] sm:$0xf0] %vm972, %v955
      %v974 = vld [vmem:[#allocation2] sm:$0xff]
      %v975 = vld [vmem:[#allocation2 + $0x8] sm:$0xff]
      %v976 = vld [vmem:[#allocation2 + $0x10] sm:$0xff]
      %v980 = vcombine.high %v974, %v974
      %v981 = vcombine.high %v975, %v975
      %v982 = vcombine.high %v976, %v976
      %983 = vrot.lane.b32.xlu0 %v974, 126
      %v984 = vpop.permute.xlu0 %983
      %985 = vrot.lane.b32.xlu0 %v980, 126
      %v986 = vpop.permute.xlu0 %985
      %987 = vrot.lane.b32.xlu0 %v975, 126
      %v988 = vpop.permute.xlu0 %987
      %989 = vrot.lane.b32.xlu0 %v981, 126
      %v990 = vpop.permute.xlu0 %989
      %991 = vrot.lane.b32.xlu0 %v976, 126
      %v992 = vpop.permute.xlu0 %991
      %993 = vrot.lane.b32.xlu0 %v982, 126
      %v994 = vpop.permute.xlu0 %993
      %v995 = vsel %vm408, %v984, %v986
      %v996 = vsel %vm408, %v986, %v988
      %v997 = vsel %vm408, %v988, %v990
      %v998 = vsel %vm408, %v990, %v992
      %v999 = vsel %vm408, %v992, %v994
      %1006 = vst [vmem:[#allocation3 + $0x30] sm:$0xf] %v995
      %1007 = vst [vmem:[#allocation3 + $0x38] sm:$0xf] %v996
      %1008 = vst [vmem:[#allocation3 + $0x40] sm:$0xf] %v997
      %1009 = vst [vmem:[#allocation3 + $0x48] sm:$0xf] %v998
      %1010 = vst [vmem:[#allocation3 + $0x50] sm:$0xf] %v999
      %1011 = vst.msk [vmem:[#allocation3 + $0x58] sm:$0xf] %vm933, %v994
      %v1012 = vld [vmem:[#allocation2] sm:$0xff]
      %v1013 = vld [vmem:[#allocation2 + $0x8] sm:$0xff]
      %v1014 = vld [vmem:[#allocation2 + $0x10] sm:$0xff]
      %v1018 = vcombine.low %v1012, %v1012
      %v1019 = vcombine.low %v1013, %v1013
      %v1020 = vcombine.low %v1014, %v1014
      %1021 = vrot.lane.b32.xlu0 %v1018, 110
      %v1022 = vpop.permute.xlu0 %1021
      %1023 = vrot.lane.b32.xlu0 %v1012, 110
      %v1024 = vpop.permute.xlu0 %1023
      %1025 = vrot.lane.b32.xlu0 %v1019, 110
      %v1026 = vpop.permute.xlu0 %1025
      %1027 = vrot.lane.b32.xlu0 %v1013, 110
      %v1028 = vpop.permute.xlu0 %1027
      %1029 = vrot.lane.b32.xlu0 %v1020, 110
      %v1030 = vpop.permute.xlu0 %1029
      %1031 = vrot.lane.b32.xlu0 %v1014, 110
      %v1032 = vpop.permute.xlu0 %1031
      %v1033 = vsel %vm480, %v1022, %v1024
      %v1034 = vsel %vm480, %v1024, %v1026
      %v1035 = vsel %vm480, %v1026, %v1028
      %v1036 = vsel %vm480, %v1028, %v1030
      %v1037 = vsel %vm480, %v1030, %v1032
      %1044 = vst [vmem:[#allocation3 + $0x30] sm:$0xf0] %v1033
      %1045 = vst [vmem:[#allocation3 + $0x38] sm:$0xf0] %v1034
      %1046 = vst [vmem:[#allocation3 + $0x40] sm:$0xf0] %v1035
      %1047 = vst [vmem:[#allocation3 + $0x48] sm:$0xf0] %v1036
      %1048 = vst [vmem:[#allocation3 + $0x50] sm:$0xf0] %v1037
      %1049 = vst.msk [vmem:[#allocation3 + $0x58] sm:$0xf0] %vm972, %v1032
      %v1050 = vld [vmem:[#allocation2] sm:$0xff]
      %v1051 = vld [vmem:[#allocation2 + $0x8] sm:$0xff]
      %v1052 = vld [vmem:[#allocation2 + $0x10] sm:$0xff]
      %v1056 = vcombine.high %v1050, %v1050
      %v1057 = vcombine.high %v1051, %v1051
      %v1058 = vcombine.high %v1052, %v1052
      %1059 = vrot.lane.b32.xlu0 %v1050, 109
      %v1060 = vpop.permute.xlu0 %1059
      %1061 = vrot.lane.b32.xlu0 %v1056, 109
      %v1062 = vpop.permute.xlu0 %1061
      %1063 = vrot.lane.b32.xlu0 %v1051, 109
      %v1064 = vpop.permute.xlu0 %1063
      %1065 = vrot.lane.b32.xlu0 %v1057, 109
      %v1066 = vpop.permute.xlu0 %1065
      %1067 = vrot.lane.b32.xlu0 %v1052, 109
      %v1068 = vpop.permute.xlu0 %1067
      %1069 = vrot.lane.b32.xlu0 %v1058, 109
      %v1070 = vpop.permute.xlu0 %1069
      %v1071 = vsel %vm552, %v1060, %v1062
      %v1072 = vsel %vm552, %v1062, %v1064
      %v1073 = vsel %vm552, %v1064, %v1066
      %v1074 = vsel %vm552, %v1066, %v1068
      %v1075 = vsel %vm552, %v1068, %v1070
      %1082 = vst [vmem:[#allocation3 + $0x60] sm:$0xf] %v1071
      %1083 = vst [vmem:[#allocation3 + $0x68] sm:$0xf] %v1072
      %1084 = vst [vmem:[#allocation3 + $0x70] sm:$0xf] %v1073
      %1085 = vst [vmem:[#allocation3 + $0x78] sm:$0xf] %v1074
      %1086 = vst [vmem:[#allocation3 + $0x80] sm:$0xf] %v1075
      %1087 = vst.msk [vmem:[#allocation3 + $0x88] sm:$0xf] %vm933, %v1070
      %v1088 = vld [vmem:[#allocation2] sm:$0xff]
      %v1089 = vld [vmem:[#allocation2 + $0x8] sm:$0xff]
      %v1090 = vld [vmem:[#allocation2 + $0x10] sm:$0xff]
      %v1094 = vcombine.low %v1088, %v1088
      %v1095 = vcombine.low %v1089, %v1089
      %v1096 = vcombine.low %v1090, %v1090
      %1097 = vrot.lane.b32.xlu0 %v1094, 108
      %v1098 = vpop.permute.xlu0 %1097
      %1099 = vrot.lane.b32.xlu0 %v1088, 108
      %v1100 = vpop.permute.xlu0 %1099
      %1101 = vrot.lane.b32.xlu0 %v1095, 108
      %v1102 = vpop.permute.xlu0 %1101
      %1103 = vrot.lane.b32.xlu0 %v1089, 108
      %v1104 = vpop.permute.xlu0 %1103
      %1105 = vrot.lane.b32.xlu0 %v1096, 108
      %v1106 = vpop.permute.xlu0 %1105
      %1107 = vrot.lane.b32.xlu0 %v1090, 108
      %v1108 = vpop.permute.xlu0 %1107
      %v1109 = vsel %vm624, %v1098, %v1100
      %v1110 = vsel %vm624, %v1100, %v1102
      %v1111 = vsel %vm624, %v1102, %v1104
      %v1112 = vsel %vm624, %v1104, %v1106
      %v1113 = vsel %vm624, %v1106, %v1108
      %1120 = vst [vmem:[#allocation3 + $0x60] sm:$0xf0] %v1109
      %1121 = vst [vmem:[#allocation3 + $0x68] sm:$0xf0] %v1110
      %1122 = vst [vmem:[#allocation3 + $0x70] sm:$0xf0] %v1111
      %1123 = vst [vmem:[#allocation3 + $0x78] sm:$0xf0] %v1112
      %1124 = vst [vmem:[#allocation3 + $0x80] sm:$0xf0] %v1113
      %1125 = vst.msk [vmem:[#allocation3 + $0x88] sm:$0xf0] %vm972, %v1108
      %v1126 = vld [vmem:[#allocation2] sm:$0xff]
      %v1127 = vld [vmem:[#allocation2 + $0x8] sm:$0xff]
      %v1128 = vld [vmem:[#allocation2 + $0x10] sm:$0xff]
      %v1132 = vcombine.high %v1126, %v1126
      %v1133 = vcombine.high %v1127, %v1127
      %v1134 = vcombine.high %v1128, %v1128
      %1135 = vrot.lane.b32.xlu0 %v1126, 92
      %v1136 = vpop.permute.xlu0 %1135
      %1137 = vrot.lane.b32.xlu0 %v1132, 92
      %v1138 = vpop.permute.xlu0 %1137
      %1139 = vrot.lane.b32.xlu0 %v1127, 92
      %v1140 = vpop.permute.xlu0 %1139
      %1141 = vrot.lane.b32.xlu0 %v1133, 92
      %v1142 = vpop.permute.xlu0 %1141
      %1143 = vrot.lane.b32.xlu0 %v1128, 92
      %v1144 = vpop.permute.xlu0 %1143
      %1145 = vrot.lane.b32.xlu0 %v1134, 92
      %v1146 = vpop.permute.xlu0 %1145
      %v1147 = vsel %vm696, %v1136, %v1138
      %v1148 = vsel %vm696, %v1138, %v1140
      %v1149 = vsel %vm696, %v1140, %v1142
      %v1150 = vsel %vm696, %v1142, %v1144
      %v1151 = vsel %vm696, %v1144, %v1146
      %1158 = vst [vmem:[#allocation3 + $0x90] sm:$0xf] %v1147
      %1159 = vst [vmem:[#allocation3 + $0x98] sm:$0xf] %v1148
      %1160 = vst [vmem:[#allocation3 + $0xa0] sm:$0xf] %v1149
      %1161 = vst [vmem:[#allocation3 + $0xa8] sm:$0xf] %v1150
      %1162 = vst [vmem:[#allocation3 + $0xb0] sm:$0xf] %v1151
      %1163 = vst.msk [vmem:[#allocation3 + $0xb8] sm:$0xf] %vm933, %v1146
      %v1164 = vld [vmem:[#allocation2] sm:$0xff]
      %v1165 = vld [vmem:[#allocation2 + $0x8] sm:$0xff]
      %v1166 = vld [vmem:[#allocation2 + $0x10] sm:$0xff]
      %v1170 = vcombine.low %v1164, %v1164
      %v1171 = vcombine.low %v1165, %v1165
      %v1172 = vcombine.low %v1166, %v1166
      %1173 = vrot.lane.b32.xlu0 %v1170, 91
      %v1174 = vpop.permute.xlu0 %1173
      %1175 = vrot.lane.b32.xlu0 %v1164, 91
      %v1176 = vpop.permute.xlu0 %1175
      %1177 = vrot.lane.b32.xlu0 %v1171, 91
      %v1178 = vpop.permute.xlu0 %1177
      %1179 = vrot.lane.b32.xlu0 %v1165, 91
      %v1180 = vpop.permute.xlu0 %1179
      %1181 = vrot.lane.b32.xlu0 %v1172, 91
      %v1182 = vpop.permute.xlu0 %1181
      %1183 = vrot.lane.b32.xlu0 %v1166, 91
      %v1184 = vpop.permute.xlu0 %1183
      %v1185 = vsel %vm768, %v1174, %v1176
      %v1186 = vsel %vm768, %v1176, %v1178
      %v1187 = vsel %vm768, %v1178, %v1180
      %v1188 = vsel %vm768, %v1180, %v1182
      %v1189 = vsel %vm768, %v1182, %v1184
      %1196 = vst [vmem:[#allocation3 + $0x90] sm:$0xf0] %v1185
      %1197 = vst [vmem:[#allocation3 + $0x98] sm:$0xf0] %v1186
      %1198 = vst [vmem:[#allocation3 + $0xa0] sm:$0xf0] %v1187
      %1199 = vst [vmem:[#allocation3 + $0xa8] sm:$0xf0] %v1188
      %1200 = vst [vmem:[#allocation3 + $0xb0] sm:$0xf0] %v1189
      %1201 = vst.msk [vmem:[#allocation3 + $0xb8] sm:$0xf0] %vm972, %v1184
      %v1202 = vld [vmem:[#allocation2] sm:$0xff]
      %v1203 = vld [vmem:[#allocation2 + $0x8] sm:$0xff]
      %v1204 = vld [vmem:[#allocation2 + $0x10] sm:$0xff]
      %v1208 = vcombine.high %v1202, %v1202
      %v1209 = vcombine.high %v1203, %v1203
      %v1210 = vcombine.high %v1204, %v1204
      %1211 = vrot.lane.b32.xlu0 %v1202, 90
      %v1212 = vpop.permute.xlu0 %1211
      %1213 = vrot.lane.b32.xlu0 %v1208, 90
      %v1214 = vpop.permute.xlu0 %1213
      %1215 = vrot.lane.b32.xlu0 %v1203, 90
      %v1216 = vpop.permute.xlu0 %1215
      %1217 = vrot.lane.b32.xlu0 %v1209, 90
      %v1218 = vpop.permute.xlu0 %1217
      %1219 = vrot.lane.b32.xlu0 %v1204, 90
      %v1220 = vpop.permute.xlu0 %1219
      %1221 = vrot.lane.b32.xlu0 %v1210, 90
      %v1222 = vpop.permute.xlu0 %1221
      %v1223 = vsel %vm840, %v1212, %v1214
      %v1224 = vsel %vm840, %v1214, %v1216
      %v1225 = vsel %vm840, %v1216, %v1218
      %v1226 = vsel %vm840, %v1218, %v1220
      %v1227 = vsel %vm840, %v1220, %v1222
      %1234 = vst [vmem:[#allocation3 + $0xc0] sm:$0xf] %v1223
      %1235 = vst [vmem:[#allocation3 + $0xc8] sm:$0xf] %v1224
      %1236 = vst [vmem:[#allocation3 + $0xd0] sm:$0xf] %v1225
      %1237 = vst [vmem:[#allocation3 + $0xd8] sm:$0xf] %v1226
      %1238 = vst [vmem:[#allocation3 + $0xe0] sm:$0xf] %v1227
      %1239 = vst.msk [vmem:[#allocation3 + $0xe8] sm:$0xf] %vm933, %v1222
      %v1240 = vld [vmem:[#allocation3] sm:$0xff]
      %v1241 = vld [vmem:[#allocation3 + $0x8] sm:$0xff]
      %v1242 = vld [vmem:[#allocation3 + $0x10] sm:$0xff]
      %v1243 = vld [vmem:[#allocation3 + $0x18] sm:$0xff]
      %v1244 = vld [vmem:[#allocation3 + $0x20] sm:$0xff]
      %v1245 = vld [vmem:[#allocation3 + $0x28] sm:$0xff]
      %v1246 = vld [vmem:[#allocation3 + $0x30] sm:$0xff]
      %v1247 = vld [vmem:[#allocation3 + $0x38] sm:$0xff]
      %v1248 = vld [vmem:[#allocation3 + $0x40] sm:$0xff]
      %v1249 = vld [vmem:[#allocation3 + $0x48] sm:$0xff]
      %v1250 = vld [vmem:[#allocation3 + $0x50] sm:$0xff]
      %v1251 = vld [vmem:[#allocation3 + $0x58] sm:$0xff]
      %v1252 = vld [vmem:[#allocation3 + $0x60] sm:$0xff]
      %v1253 = vld [vmem:[#allocation3 + $0x68] sm:$0xff]
      %v1254 = vld [vmem:[#allocation3 + $0x70] sm:$0xff]
      %v1255 = vld [vmem:[#allocation3 + $0x78] sm:$0xff]
      %v1256 = vld [vmem:[#allocation3 + $0x80] sm:$0xff]
      %v1257 = vld [vmem:[#allocation3 + $0x88] sm:$0xff]
      %v1258 = vld [vmem:[#allocation3 + $0x90] sm:$0xff]
      %v1259 = vld [vmem:[#allocation3 + $0x98] sm:$0xff]
      %v1260 = vld [vmem:[#allocation3 + $0xa0] sm:$0xff]
      %v1261 = vld [vmem:[#allocation3 + $0xa8] sm:$0xff]
      %v1262 = vld [vmem:[#allocation3 + $0xb0] sm:$0xff]
      %v1263 = vld [vmem:[#allocation3 + $0xb8] sm:$0xff]
      %v1264 = vld [vmem:[#allocation3 + $0xc0] sm:$0xf]
      %v1265 = vld [vmem:[#allocation3 + $0xc8] sm:$0xf]
      %v1266 = vld [vmem:[#allocation3 + $0xd0] sm:$0xf]
      %v1267 = vld [vmem:[#allocation3 + $0xd8] sm:$0xf]
      %v1268 = vld [vmem:[#allocation3 + $0xe0] sm:$0xf]
      %v1269 = vld [vmem:[#allocation3 + $0xe8] sm:$0xf]
      %1271 = vset.pattern.permute.xlu0 45
      %1272 = vperm.xlu0 %1271, %v200
      %v1273 = vpop.permute.xlu0 %1272
      %1275 = vrot.lane.b32.xlu0 %v200, 119
      %v1276 = vpop.permute.xlu0 %1275
      %vm1277 = vcmask 293888
      %v1278 = vsel %vm1277, %v1276, 0
      %v1281 = vsel %vm334, %v1264, 0
      %v1284 = vsel %vm334, %v1265, 0
      %v1287 = vsel %vm334, %v1266, 0
      %v1290 = vsel %vm334, %v1267, 0
      %v1293 = vsel %vm334, %v1268, 0
      %v1296 = vsel %vm334, %v1269, 0
      %1298 = vmatprep.subr.mxu0 %v1241
      %1299 = vmatpush1.msra.mxu0 %v1240
      %1300 = vmatprep.subr.mxu0 %v1247
      %1301 = vmatpush1.msra.mxu0 %v1246
      %1302 = vmatprep.subr.mxu0 %v1253
      %1303 = vmatpush1.msra.mxu0 %v1252
      %1304 = vmatprep.subr.mxu0 %v1259
      %1305 = vmatpush1.msra.mxu0 %v1258
      %1306 = vmatprep.subr.mxu0 %v1284
      %1307 = vmatpush1.msra.mxu0 %v1281
      %1308 = vmatprep.subr.mxu0 0.0
      %1309 = vmatpush1.msra.mxu0 0.0
      %1310 = vmatprep.subr.mxu0 0.0
      %1311 = vmatpush1.msra.mxu0 0.0
      %1312 = vmatprep.subr.mxu0 0.0
      %1313 = vmatpush1.msra.mxu0 0.0
      %1314 = vmatprep.subr.mxu0 0.0
      %1315 = vmatpush1.msra.mxu0 0.0
      %1316 = vmatprep.subr.mxu0 0.0
      %1317 = vmatpush1.msra.mxu0 0.0
      %1318 = vmatprep.subr.mxu0 0.0
      %1319 = vmatpush1.msra.mxu0 0.0
      %1320 = vmatprep.subr.mxu0 0.0
      %1321 = vmatpush1.msra.mxu0 0.0
      %1322 = vmatprep.subr.mxu0 0.0
      %1323 = vmatpush1.msra.mxu0 0.0
      %1324 = vmatprep.subr.mxu0 0.0
      %1325 = vmatpush1.msra.mxu0 0.0
      %1326 = vmatprep.subr.mxu0 0.0
      %1327 = vmatpush1.msra.mxu0 0.0
      %1328 = vmatprep.subr.mxu0 0.0
      %1329 = vmatpush1.msra.mxu0 0.0
      %1330 = vmatprep.subr.mxu0 0.0
      %1331 = vmatpush1.msra.mxu0 0.0
      %1332 = vmatprep.subr.mxu0 0.0
      %1333 = vmatpush1.msra.mxu0 0.0
      %1334 = vmatprep.subr.mxu0 0.0
      %1335 = vmatpush1.msra.mxu0 0.0
      %1336 = vmatprep.subr.mxu0 0.0
      %1337 = vmatpush1.msra.mxu0 0.0
      %1338 = vmatprep.subr.mxu0 0.0
      %1339 = vmatpush1.msra.mxu0 0.0
      %1340 = vmatprep.subr.mxu0 0.0
      %1341 = vmatpush1.msra.mxu0 0.0
      %1342 = vmatprep.subr.mxu0 0.0
      %1343 = vmatpush1.msra.mxu0 0.0
      %1344 = vmatprep.subr.mxu0 0.0
      %1345 = vmatpush1.msra.mxu0 0.0
      %1346 = vmatprep.subr.mxu0 0.0
      %1347 = vmatpush1.msra.mxu0 0.0
      %1348 = vmatprep.subr.mxu0 0.0
      %1349 = vmatpush1.msra.mxu0 0.0
      %1350 = vmatprep.subr.mxu0 0.0
      %1351 = vmatpush1.msra.mxu0 0.0
      %1352 = vmatprep.subr.mxu0 0.0
      %1353 = vmatpush1.msra.mxu0 0.0
      %1354 = vmatprep.subr.mxu0 0.0
      %1355 = vmatpush1.msra.mxu0 0.0
      %1356 = vmatprep.subr.mxu0 0.0
      %1357 = vmatpush1.msra.mxu0 0.0
      %1358 = vmatprep.subr.mxu0 0.0
      %1359 = vmatpush1.msra.mxu0 0.0
      %1360 = vmatprep.subr.mxu0 0.0
      %1361 = vmatpush1.msra.mxu0 0.0
      %1362 = vmatprep.mubr.f32.mxu0 0.0
      %1363 = vmatmul.mubr.f32.gmra.mrb[0].mxu0 %v1278
      %v1364 = vpop.f32.mrb[0].mxu0
      %v1365 = vadd.f32 %v1273, %v1364
      %v1366 = vpop.f32.mrb[0].mxu0
      %v1367 = vadd.f32 %v1273, %v1366
      %1368 = vdwg.mxu0
      %1369 = vmatprep.subr.mxu0 %v1243
      %1370 = vmatpush1.msra.mxu0 %v1242
      %1371 = vmatprep.subr.mxu0 %v1249
      %1372 = vmatpush1.msra.mxu0 %v1248
      %1373 = vmatprep.subr.mxu0 %v1255
      %1374 = vmatpush1.msra.mxu0 %v1254
      %1375 = vmatprep.subr.mxu0 %v1261
      %1376 = vmatpush1.msra.mxu0 %v1260
      %1377 = vmatprep.subr.mxu0 %v1290
      %1378 = vmatpush1.msra.mxu0 %v1287
      %1379 = vmatprep.subr.mxu0 0.0
      %1380 = vmatpush1.msra.mxu0 0.0
      %1381 = vmatprep.subr.mxu0 0.0
      %1382 = vmatpush1.msra.mxu0 0.0
      %1383 = vmatprep.subr.mxu0 0.0
      %1384 = vmatpush1.msra.mxu0 0.0
      %1385 = vmatprep.subr.mxu0 0.0
      %1386 = vmatpush1.msra.mxu0 0.0
      %1387 = vmatprep.subr.mxu0 0.0
      %1388 = vmatpush1.msra.mxu0 0.0
      %1389 = vmatprep.subr.mxu0 0.0
      %1390 = vmatpush1.msra.mxu0 0.0
      %1391 = vmatprep.subr.mxu0 0.0
      %1392 = vmatpush1.msra.mxu0 0.0
      %1393 = vmatprep.subr.mxu0 0.0
      %1394 = vmatpush1.msra.mxu0 0.0
      %1395 = vmatprep.subr.mxu0 0.0
      %1396 = vmatpush1.msra.mxu0 0.0
      %1397 = vmatprep.subr.mxu0 0.0
      %1398 = vmatpush1.msra.mxu0 0.0
      %1399 = vmatprep.subr.mxu0 0.0
      %1400 = vmatpush1.msra.mxu0 0.0
      %1401 = vmatprep.subr.mxu0 0.0
      %1402 = vmatpush1.msra.mxu0 0.0
      %1403 = vmatprep.subr.mxu0 0.0
      %1404 = vmatpush1.msra.mxu0 0.0
      %1405 = vmatprep.subr.mxu0 0.0
      %1406 = vmatpush1.msra.mxu0 0.0
      %1407 = vmatprep.subr.mxu0 0.0
      %1408 = vmatpush1.msra.mxu0 0.0
      %1409 = vmatprep.subr.mxu0 0.0
      %1410 = vmatpush1.msra.mxu0 0.0
      %1411 = vmatprep.subr.mxu0 0.0
      %1412 = vmatpush1.msra.mxu0 0.0
      %1413 = vmatprep.subr.mxu0 0.0
      %1414 = vmatpush1.msra.mxu0 0.0
      %1415 = vmatprep.subr.mxu0 0.0
      %1416 = vmatpush1.msra.mxu0 0.0
      %1417 = vmatprep.subr.mxu0 0.0
      %1418 = vmatpush1.msra.mxu0 0.0
      %1419 = vmatprep.subr.mxu0 0.0
      %1420 = vmatpush1.msra.mxu0 0.0
      %1421 = vmatprep.subr.mxu0 0.0
      %1422 = vmatpush1.msra.mxu0 0.0
      %1423 = vmatprep.subr.mxu0 0.0
      %1424 = vmatpush1.msra.mxu0 0.0
      %1425 = vmatprep.subr.mxu0 0.0
      %1426 = vmatpush1.msra.mxu0 0.0
      %1427 = vmatprep.subr.mxu0 0.0
      %1428 = vmatpush1.msra.mxu0 0.0
      %1429 = vmatprep.subr.mxu0 0.0
      %1430 = vmatpush1.msra.mxu0 0.0
      %1431 = vmatprep.subr.mxu0 0.0
      %1432 = vmatpush1.msra.mxu0 0.0
      %1433 = vmatprep.mubr.f32.mxu0 0.0
      %1434 = vmatmul.mubr.f32.gmra.mrb[0].mxu0 %v1278
      %v1435 = vpop.f32.mrb[0].mxu0
      %v1436 = vadd.f32 %v1273, %v1435
      %v1437 = vpop.f32.mrb[0].mxu0
      %v1438 = vadd.f32 %v1273, %v1437
      %1439 = vdwg.mxu0
      %1440 = vmatprep.subr.mxu0 %v1245
      %1441 = vmatpush1.msra.mxu0 %v1244
      %1442 = vmatprep.subr.mxu0 %v1251
      %1443 = vmatpush1.msra.mxu0 %v1250
      %1444 = vmatprep.subr.mxu0 %v1257
      %1445 = vmatpush1.msra.mxu0 %v1256
      %1446 = vmatprep.subr.mxu0 %v1263
      %1447 = vmatpush1.msra.mxu0 %v1262
      %1448 = vmatprep.subr.mxu0 %v1296
      %1449 = vmatpush1.msra.mxu0 %v1293
      %1450 = vmatprep.subr.mxu0 0.0
      %1451 = vmatpush1.msra.mxu0 0.0
      %1452 = vmatprep.subr.mxu0 0.0
      %1453 = vmatpush1.msra.mxu0 0.0
      %1454 = vmatprep.subr.mxu0 0.0
      %1455 = vmatpush1.msra.mxu0 0.0
      %1456 = vmatprep.subr.mxu0 0.0
      %1457 = vmatpush1.msra.mxu0 0.0
      %1458 = vmatprep.subr.mxu0 0.0
      %1459 = vmatpush1.msra.mxu0 0.0
      %1460 = vmatprep.subr.mxu0 0.0
      %1461 = vmatpush1.msra.mxu0 0.0
      %1462 = vmatprep.subr.mxu0 0.0
      %1463 = vmatpush1.msra.mxu0 0.0
      %1464 = vmatprep.subr.mxu0 0.0
      %1465 = vmatpush1.msra.mxu0 0.0
      %1466 = vmatprep.subr.mxu0 0.0
      %1467 = vmatpush1.msra.mxu0 0.0
      %1468 = vmatprep.subr.mxu0 0.0
      %1469 = vmatpush1.msra.mxu0 0.0
      %1470 = vmatprep.subr.mxu0 0.0
      %1471 = vmatpush1.msra.mxu0 0.0
      %1472 = vmatprep.subr.mxu0 0.0
      %1473 = vmatpush1.msra.mxu0 0.0
      %1474 = vmatprep.subr.mxu0 0.0
      %1475 = vmatpush1.msra.mxu0 0.0
      %1476 = vmatprep.subr.mxu0 0.0
      %1477 = vmatpush1.msra.mxu0 0.0
      %1478 = vmatprep.subr.mxu0 0.0
      %1479 = vmatpush1.msra.mxu0 0.0
      %1480 = vmatprep.subr.mxu0 0.0
      %1481 = vmatpush1.msra.mxu0 0.0
      %1482 = vmatprep.subr.mxu0 0.0
      %1483 = vmatpush1.msra.mxu0 0.0
      %1484 = vmatprep.subr.mxu0 0.0
      %1485 = vmatpush1.msra.mxu0 0.0
      %1486 = vmatprep.subr.mxu0 0.0
      %1487 = vmatpush1.msra.mxu0 0.0
      %1488 = vmatprep.subr.mxu0 0.0
      %1489 = vmatpush1.msra.mxu0 0.0
      %1490 = vmatprep.subr.mxu0 0.0
      %1491 = vmatpush1.msra.mxu0 0.0
      %1492 = vmatprep.subr.mxu0 0.0
      %1493 = vmatpush1.msra.mxu0 0.0
      %1494 = vmatprep.subr.mxu0 0.0
      %1495 = vmatpush1.msra.mxu0 0.0
      %1496 = vmatprep.subr.mxu0 0.0
      %1497 = vmatpush1.msra.mxu0 0.0
      %1498 = vmatprep.subr.mxu0 0.0
      %1499 = vmatpush1.msra.mxu0 0.0
      %1500 = vmatprep.subr.mxu0 0.0
      %1501 = vmatpush1.msra.mxu0 0.0
      %1502 = vmatprep.subr.mxu0 0.0
      %1503 = vmatpush1.msra.mxu0 0.0
      %1504 = vmatprep.mubr.f32.mxu0 0.0
      %1505 = vmatmul.mubr.f32.gmra.mrb[0].mxu0 %v1278
      %v1506 = vpop.f32.mrb[0].mxu0
      %v1507 = vadd.f32 %v1273, %v1506
      %v1508 = vpop.f32.mrb[0].mxu0
      %v1509 = vadd.f32 %v1273, %v1508
      %1510 = vdwg.mxu0
      %v1511 = vlaneseq
      %v1512 = vshrl.u32 %v1511, 7
      %v1513 = vsub.s32 0, %v1512
      %v1514 = vrot.slane %v197, %v1513
      %v1515 = vlaneseq
      %v1516 = vshrl.u32 %v1515, 7
      %v1517 = vsub.s32 1, %v1516
      %v1518 = vrot.slane %v197, %v1517
      %v1519 = vlaneseq
      %v1520 = vshrl.u32 %v1519, 7
      %v1521 = vsub.s32 2, %v1520
      %v1522 = vrot.slane %v197, %v1521
      %v1523 = vlaneseq
      %v1524 = vshrl.u32 %v1523, 7
      %v1525 = vsub.s32 3, %v1524
      %v1526 = vrot.slane %v197, %v1525
      %v1527 = vlaneseq
      %v1528 = vshrl.u32 %v1527, 7
      %v1529 = vsub.s32 4, %v1528
      %v1530 = vrot.slane %v197, %v1529
      %v1531 = vlaneseq
      %v1532 = vshrl.u32 %v1531, 7
      %v1533 = vsub.s32 5, %v1532
      %v1534 = vrot.slane %v197, %v1533
      %v1541 = vadd.f32 %v1365, %v1514
      %v1542 = vadd.f32 %v1367, %v1518
      %v1543 = vadd.f32 %v1436, %v1522
      %v1544 = vadd.f32 %v1438, %v1526
      %v1545 = vadd.f32 %v1507, %v1530
      %v1546 = vadd.f32 %v1509, %v1534
      %v1553 = vcombine.low %v1541, %v1542
      %v1554 = vcombine.low %v1543, %v1544
      %v1555 = vcombine.low %v1545, %v1546
      %v1557 = vunpack.c.l.s4 1966171168
      %v1558 = vunpack.c.0.s8 %v1557
      %v1559 = vlaneseq
      %v1560 = vshrl.u32 %v1559, 7
      %v1561 = vsub.s32 %v1558, %v1560
      %v1562 = vrot.slane %v1553, %v1561
      %v1564 = vunpack.c.l.s4 1966171168
      %v1565 = vunpack.c.0.s8 %v1564
      %v1566 = vlaneseq
      %v1567 = vshrl.u32 %v1566, 7
      %v1568 = vsub.s32 %v1565, %v1567
      %v1569 = vrot.slane %v1554, %v1568
      %v1571 = vunpack.c.l.s4 1966171168
      %v1572 = vunpack.c.0.s8 %v1571
      %v1573 = vlaneseq
      %v1574 = vshrl.u32 %v1573, 7
      %v1575 = vsub.s32 %v1572, %v1574
      %v1576 = vrot.slane %v1555, %v1575
      %v1577 = vcombine.low %v1562, %v1569
      %v1579 = vunpack.c.l.s4 1966171168
      %v1580 = vunpack.c.0.s8 %v1579
      %v1581 = vlaneseq
      %v1582 = vshrl.u32 %v1581, 7
      %v1583 = vsub.s32 %v1580, %v1582
      %v1584 = vrot.slane %v1577, %v1583
      %v1586 = vunpack.c.l.s4 1966171168
      %v1587 = vunpack.c.0.s8 %v1586
      %v1588 = vlaneseq
      %v1589 = vshrl.u32 %v1588, 7
      %v1590 = vsub.s32 %v1587, %v1589
      %v1591 = vrot.slane %v1576, %v1590
      %v1592 = vcombine.low %v1584, %v1591
      %vm1594 = vcmp.ge.s32.totalorder %v208, 0
      %vm1595 = vcmp.lt.s32.totalorder %v208, 648
      %vm1596 = vmand %vm1594, %vm1595
      %1597 = vst.msk [vmem:[%s192] sm:$0x3f] %vm1596, %v1592
      %p1598 = scmp.lt.s32.totalorder %s15, 7
      %s1599 = scalar_select %p1598, %s15, 7
      %s1600 = smul.addr %s1599, 6
      %s1601 = scalar_lea.vmem %s4, %s1600
      // Predicated region
      $region37: #{s2s_hsid_forward.3} parent=35 // pred_check
        %p1602 = pneg %p122
      $region38: #{s2s_hsid_forward.3} parent=35 // pred_check_branch
        %1604 = sbr.rel (%p1602) target = $region40
      $region39: #{s2s_hsid_forward.3} parent=35 // pred_region
        _
      $region40: #{s2s_hsid_forward.3} parent=35 // pred_fallthru
        _
    $region36: #{s2s_hsid_forward.3} parent=5 // pred_fallthru
      _
    %p1605 = scmp.le.s32.totalorder 2, %s10
    // Predicated region
    $region41: #{s2s_hsid_forward.3} parent=5 // pred_check
      %p1606 = pneg %p1605
    $region42: #{s2s_hsid_forward.3} parent=5 // pred_check_branch
      %1608 = sbr.rel (%p1606) target = $region44
    $region43: #{s2s_hsid_forward.3} parent=5 // pred_region
      %s1609 = ssub.s32 %s10, 2
      // Predicated region
      $region45: #{s2s_hsid_forward.3} parent=43 // pred_check
        %p1610 = pneg %p128
      $region46: #{s2s_hsid_forward.3} parent=43 // pred_check_branch
        %1612 = sbr.rel (%p1610) target = $region48
      $region47: #{s2s_hsid_forward.3} parent=43 // pred_region
        %p1613 = scmp.lt.s32.totalorder %s16, 7
        %s1614 = scalar_select %p1613, %s16, 7
        %s1615 = smul.addr %s1614, 6
        %s1616 = scalar_lea.vmem %s4, %s1615
      $region48: #{s2s_hsid_forward.3} parent=43 // pred_fallthru
        _
    $region44: #{s2s_hsid_forward.3} parent=5 // pred_fallthru
      _
  $region6: #{s2s_hsid_forward.3} parent=0 // loop_footer
    %s14 = sadd.s32 1, %s10
  $region7: #{s2s_hsid_forward.3} parent=0 // loop_footer_branch
    %9 = sbr.rel target = $region3
  $region8: #{s2s_hsid_forward.3} parent=0 // loop_exit
    _

// kernel: s2s_hsid_forward.2
$region0: #{s2s_hsid_forward.2}
  #allocation0 [shape = 'u32[]', space=smem, size = 0x4, offset = 0x4, fixed_abs, tag = 'smem constant byte address 0x4 - core index']
  #allocation1 [shape = 'u32[144,128]{1,0:T(1,128)}', space=vmem, size = 0x12000, scoped, tag = 'internal scratch']
  #allocation2 [shape = 'f32[5,686]{1,0:T(8,128)}', space=vmem, size = 0x6000, scoped, tag = 'scratch operand']
  #allocation3 [shape = 'f32[36,648]{1,0:T(8,128)}', space=vmem, size = 0x1e000, scoped, tag = 'scratch operand']
  %s0 = inlined_call_operand.vmem [shape: f32[8,1,648], index: 0, kind: input, shape index: {}]
  %s1 = inlined_call_operand.vmem [shape: f32[1,648], index: 1, kind: input, shape index: {}]
  %s2 = inlined_call_operand.vmem [shape: f32[4,83], index: 2, kind: input, shape index: {}]
  %s3 = inlined_call_operand.vmem [shape: f32[4,648], index: 3, kind: output, shape index: {}]
  %s4 = sld [smem:[#allocation0]]
  $region53: #{s2s_hsid_forward.2} parent=0
    _
  %s6 = ssub.s32 1, %s4
  %s7 = scalar_select 0, %s6, %s4
  loop: start=0, step=1, limit=10
  $region2: #{s2s_hsid_forward.2} parent=0 // loop_pre_header
    _
  $region3: #{s2s_hsid_forward.2} parent=0 // loop_header
    %s9 = sphi 0, %s13
    %p10 = scmp.ge.s32.totalorder %s9, 10
    %s19 = sphi 0, %s21
    %s22 = sphi 0, %s19
    %s23 = sphi 0, %s22
    %s39 = sphi 0, %s23
    %s43 = sphi 0, %s43
    %s45 = sphi 0, %s43
    %s46 = sphi 0, %s45
    %s60 = sphi 0, %s46
    %s64 = sphi 0, %s64
    %s66 = sphi 0, %s64
    %s67 = sphi 0, %s66
    %s81 = sphi 0, %s67
    %s85 = sphi 0, %s85
    %s87 = sphi 0, %s85
    %s88 = sphi 0, %s87
    %s102 = sphi 0, %s88
  $region4: #{s2s_hsid_forward.2} parent=0 // loop_header_branch
    %12 = sbr.rel (%p10) target = $region8
  $region5: #{s2s_hsid_forward.2} parent=0 // loop_body
    %s14 = ssub.s32 %s9, 1
    %s15 = ssub.s32 %s9, 2
    %s16 = sadd.s32 %s9, 1
    %s17 = ssub.s32 %s9, %s16
    %p18 = scmp.eq.s32.totalorder %s17, 0
    %s20 = sadd.s32 %s19, 1
    %s21 = scalar_select %p18, %s19, %s20
    %p24 = pneg %p18
    %p25 = scmp.eq.s32.totalorder %s9, 7
    %p26 = por %p24, %p25
    %p27 = scmp.ne.s32.totalorder %s19, %s22
    %p28 = scmp.eq.s32.totalorder %s9, 0
    %p29 = por %p27, %p28
    %p30 = scmp.ne.s32.totalorder %s19, %s22
    %p31 = scmp.eq.s32.totalorder %s14, 7
    %p32 = por %p30, %p31
    %p33 = scmp.ne.s32.totalorder %s22, %s23
    %p34 = scmp.eq.s32.totalorder %s14, 0
    %p35 = por %p33, %p34
    %p36 = scmp.ne.s32.totalorder %s22, %s23
    %p37 = scmp.eq.s32.totalorder %s15, 7
    %p38 = por %p36, %p37
    %p40 = scmp.ne.s32.totalorder %s23, %s39
    %p41 = scmp.eq.s32.totalorder %s15, 0
    %p42 = por %p40, %p41
    %s44 = sadd.s32 %s43, 1
    %p47 = scmp.eq.s32.totalorder %s9, 7
    %p48 = scmp.ne.s32.totalorder %s43, %s45
    %p49 = scmp.eq.s32.totalorder %s9, 0
    %p50 = por %p48, %p49
    %p51 = scmp.ne.s32.totalorder %s43, %s45
    %p52 = scmp.eq.s32.totalorder %s14, 7
    %p53 = por %p51, %p52
    %p54 = scmp.ne.s32.totalorder %s45, %s46
    %p55 = scmp.eq.s32.totalorder %s14, 0
    %p56 = por %p54, %p55
    %p57 = scmp.ne.s32.totalorder %s45, %s46
    %p58 = scmp.eq.s32.totalorder %s15, 7
    %p59 = por %p57, %p58
    %p61 = scmp.ne.s32.totalorder %s46, %s60
    %p62 = scmp.eq.s32.totalorder %s15, 0
    %p63 = por %p61, %p62
    %s65 = sadd.s32 %s64, 1
    %p68 = scmp.eq.s32.totalorder %s9, 7
    %p69 = scmp.ne.s32.totalorder %s64, %s66
    %p70 = scmp.eq.s32.totalorder %s9, 0
    %p71 = por %p69, %p70
    %p72 = scmp.ne.s32.totalorder %s64, %s66
    %p73 = scmp.eq.s32.totalorder %s14, 7
    %p74 = por %p72, %p73
    %p75 = scmp.ne.s32.totalorder %s66, %s67
    %p76 = scmp.eq.s32.totalorder %s14, 0
    %p77 = por %p75, %p76
    %p78 = scmp.ne.s32.totalorder %s66, %s67
    %p79 = scmp.eq.s32.totalorder %s15, 7
    %p80 = por %p78, %p79
    %p82 = scmp.ne.s32.totalorder %s67, %s81
    %p83 = scmp.eq.s32.totalorder %s15, 0
    %p84 = por %p82, %p83
    %s86 = sadd.s32 %s85, 1
    %p89 = scmp.eq.s32.totalorder %s9, 7
    %p90 = scmp.ne.s32.totalorder %s85, %s87
    %p91 = scmp.eq.s32.totalorder %s9, 0
    %p92 = por %p90, %p91
    %p93 = scmp.ne.s32.totalorder %s85, %s87
    %p94 = scmp.eq.s32.totalorder %s14, 7
    %p95 = por %p93, %p94
    %p96 = scmp.ne.s32.totalorder %s87, %s88
    %p97 = scmp.eq.s32.totalorder %s14, 0
    %p98 = por %p96, %p97
    %p99 = scmp.ne.s32.totalorder %s87, %s88
    %p100 = scmp.eq.s32.totalorder %s15, 7
    %p101 = por %p99, %p100
    %p103 = scmp.ne.s32.totalorder %s88, %s102
    %p104 = scmp.eq.s32.totalorder %s15, 0
    %p105 = por %p103, %p104
    %p106 = scmp.le.s32.totalorder 1, %s9
    %p107 = scmp.lt.s32.totalorder %s9, 9
    %p108 = pnand %p106, %p107
    %p109 = pneg %p108
    // Predicated region
    $region9: #{s2s_hsid_forward.2} parent=5 // pred_check
      _
    $region10: #{s2s_hsid_forward.2} parent=5 // pred_check_branch
      %111 = sbr.rel (%p108) target = $region12
    $region11: #{s2s_hsid_forward.2} parent=5 // pred_region
      %s112 = ssub.s32 %s9, 1
      // Predicated region
      $region13: #{s2s_hsid_forward.2} parent=11 // pred_check
        %p113 = pneg %p56
      $region14: #{s2s_hsid_forward.2} parent=11 // pred_check_branch
        %115 = sbr.rel (%p113) target = $region16
      $region15: #{s2s_hsid_forward.2} parent=11 // pred_region
        _
      $region16: #{s2s_hsid_forward.2} parent=11 // pred_fallthru
        _
      // Predicated region
      $region17: #{s2s_hsid_forward.2} parent=11 // pred_check
        %p116 = pneg %p77
      $region18: #{s2s_hsid_forward.2} parent=11 // pred_check_branch
        %118 = sbr.rel (%p116) target = $region20
      $region19: #{s2s_hsid_forward.2} parent=11 // pred_region
        _
      $region20: #{s2s_hsid_forward.2} parent=11 // pred_fallthru
        _
    $region12: #{s2s_hsid_forward.2} parent=5 // pred_fallthru
      _
    %p119 = scmp.lt.s32.totalorder %s9, 8
    // Predicated region
    $region21: #{s2s_hsid_forward.2} parent=5 // pred_check
      %p120 = pneg %p119
    $region22: #{s2s_hsid_forward.2} parent=5 // pred_check_branch
      %122 = sbr.rel (%p120) target = $region24
    $region23: #{s2s_hsid_forward.2} parent=5 // pred_region
      // Predicated region
      $region25: #{s2s_hsid_forward.2} parent=23 // pred_check
        %p123 = pneg %p29
      $region26: #{s2s_hsid_forward.2} parent=23 // pred_check_branch
        %125 = sbr.rel (%p123) target = $region28
      $region27: #{s2s_hsid_forward.2} parent=23 // pred_region
        %p126 = scmp.lt.s32.totalorder %s9, 7
        %s127 = scalar_select %p126, %s9, 7
        %s128 = smul.addr %s127, 6
        %s129 = scalar_lea.vmem %s0, %s128
      $region28: #{s2s_hsid_forward.2} parent=23 // pred_fallthru
        _
    $region24: #{s2s_hsid_forward.2} parent=5 // pred_fallthru
      _
    %p130 = scmp.le.s32.totalorder 1, %s9
    %p131 = scmp.lt.s32.totalorder %s9, 9
    %p132 = pnand %p130, %p131
    %p133 = pneg %p132
    // Predicated region
    $region29: #{s2s_hsid_forward.2} parent=5 // pred_check
      _
    $region30: #{s2s_hsid_forward.2} parent=5 // pred_check_branch
      %135 = sbr.rel (%p132) target = $region32
    $region31: #{s2s_hsid_forward.2} parent=5 // pred_region
      %s136 = ssub.s32 %s9, 1
      %p137 = scmp.lt.s32.totalorder %s14, 7
      %s138 = scalar_select %p137, %s14, 7
      %s139 = smul.addr %s138, 6
      %s140 = scalar_lea.vmem %s0, %s139
      %p141 = pneg %p35
      %p142 = pneg %p32
      %p143 = pneg %p56
      %p144 = pneg %p53
      %p145 = pneg %p77
      %p146 = pneg %p74
      %p147 = pneg %p98
      %p148 = pneg %p95
      %p149 = scmp.lt.s32.totalorder %s14, 7
      %s150 = scalar_select %p149, %s14, 7
      %s151 = smul.addr %s150, 6
      %s152 = scalar_lea.vmem %s0, %s151
      %vm153 = vcmask 151552
      %154 = vst.msk [vmem:[#allocation2] sm:$0x1f] %vm153, 0.0
      %vm155 = vcmask 372952
      %156 = vst.msk [vmem:[#allocation2 + $0x28] sm:$0x1f] %vm155, 0.0
      %p157 = scmp.eq.s32.totalorder %s14, 0
      // Predicated region
      $region33: #{s2s_hsid_forward.2} parent=31 // pred_check
        %p158 = pneg %p157
      $region34: #{s2s_hsid_forward.2} parent=31 // pred_check_branch
        %160 = sbr.rel (%p158) target = $region36
      $region35: #{s2s_hsid_forward.2} parent=31 // pred_region
        %vm161 = vcmask 1044633
        %162 = vst.msk [vmem:[#allocation2] sm:$0x1e] %vm161, 0.0
        %163 = vst [vmem:[#allocation2 + $0x8] sm:$0x1e] 0.0
        %164 = vst [vmem:[#allocation2 + $0x10] sm:$0x1e] 0.0
        %165 = vst [vmem:[#allocation2 + $0x18] sm:$0x1e] 0.0
        %166 = vst [vmem:[#allocation2 + $0x20] sm:$0x1e] 0.0
        %vm167 = vcmask 217089
        %168 = vst.msk [vmem:[#allocation2 + $0x28] sm:$0x1e] %vm167, 0.0
      $region36: #{s2s_hsid_forward.2} parent=31 // pred_fallthru
        _
      %v169 = vld [vmem:[%s152] sm:$0x3f]
      %171 = vrot.lane.b32.xlu0 %v169, 19
      %v172 = vpop.permute.xlu0 %171
      %v173 = vrot.slane %v172, 7
      %vm174 = vcmask 154624
      %v175 = vsel %vm174, %v173, %v172
      %v177 = vlaneseq
      %vm178 = vcmp.ge.s32.totalorder %v177, 19
      %vm179 = vcmp.lt.s32.totalorder %v177, 667
      %vm180 = vmand %vm178, %vm179
      %181 = vst.msk [vmem:[#allocation2] ss:$8 sm:$0xf] %vm180, %v175
      %182 = vst.msk [vmem:[#allocation2] ss:$8 sm:$0x30] %vm180, %v175
      %v183 = vld [vmem:[%s1] sm:$0x3f]
      %v184 = vld [vmem:[%s2] sm:$0xf]
      %v185 = vld [vmem:[#allocation2] sm:$0x1e]
      %v186 = vld [vmem:[#allocation2 + $0x8] sm:$0x1e]
      %v187 = vld [vmem:[#allocation2 + $0x10] sm:$0x1e]
      %v188 = vld [vmem:[#allocation2 + $0x18] sm:$0x1e]
      %v189 = vld [vmem:[#allocation2 + $0x20] sm:$0x1e]
      %v190 = vld [vmem:[#allocation2 + $0x28] sm:$0x1e]
      %v197 = vrot.slane %v185, 1
      %v198 = vrot.slane %v186, 1
      %v199 = vrot.slane %v187, 1
      %v200 = vrot.slane %v188, 1
      %v201 = vrot.slane %v189, 1
      %v202 = vrot.slane %v190, 1
      %209 = vst [vmem:[#allocation3] sm:$0xf] %v197
      %210 = vst [vmem:[#allocation3 + $0x8] sm:$0xf] %v198
      %211 = vst [vmem:[#allocation3 + $0x10] sm:$0xf] %v199
      %212 = vst [vmem:[#allocation3 + $0x18] sm:$0xf] %v200
      %213 = vst [vmem:[#allocation3 + $0x20] sm:$0xf] %v201
      %vm214 = vcmask 60416
      %215 = vst.msk [vmem:[#allocation3 + $0x28] sm:$0xf] %vm214, %v202
      %v216 = vld [vmem:[#allocation2] sm:$0x1e]
      %v217 = vld [vmem:[#allocation2 + $0x8] sm:$0x1e]
      %v218 = vld [vmem:[#allocation2 + $0x10] sm:$0x1e]
      %v219 = vld [vmem:[#allocation2 + $0x18] sm:$0x1e]
      %v220 = vld [vmem:[#allocation2 + $0x20] sm:$0x1e]
      %v221 = vld [vmem:[#allocation2 + $0x28] sm:$0x1e]
      %v228 = vrot.slane %v216, 5
      %v229 = vrot.slane %v217, 5
      %v230 = vrot.slane %v218, 5
      %v231 = vrot.slane %v219, 5
      %v232 = vrot.slane %v220, 5
      %v233 = vrot.slane %v221, 5
      %234 = vrot.lane.b32.xlu0 %v228, 127
      %v235 = vpop.permute.xlu0 %234
      %236 = vrot.lane.b32.xlu0 %v229, 127
      %v237 = vpop.permute.xlu0 %236
      %238 = vrot.lane.b32.xlu0 %v230, 127
      %v239 = vpop.permute.xlu0 %238
      %240 = vrot.lane.b32.xlu0 %v231, 127
      %v241 = vpop.permute.xlu0 %240
      %242 = vrot.lane.b32.xlu0 %v232, 127
      %v243 = vpop.permute.xlu0 %242
      %244 = vrot.lane.b32.xlu0 %v233, 127
      %v245 = vpop.permute.xlu0 %244
      %vm246 = vcmask 1039360
      %v247 = vsel %vm246, %v235, %v237
      %v248 = vsel %vm246, %v237, %v239
      %v249 = vsel %vm246, %v239, %v241
      %v250 = vsel %vm246, %v241, %v243
      %v251 = vsel %vm246, %v243, %v245
      %258 = vst [vmem:[#allocation3] sm:$0xf0] %v247
      %259 = vst [vmem:[#allocation3 + $0x8] sm:$0xf0] %v248
      %260 = vst [vmem:[#allocation3 + $0x10] sm:$0xf0] %v249
      %261 = vst [vmem:[#allocation3 + $0x18] sm:$0xf0] %v250
      %262 = vst [vmem:[#allocation3 + $0x20] sm:$0xf0] %v251
      %vm263 = vcmask 64516
      %264 = vst.msk [vmem:[#allocation3 + $0x28] sm:$0xf0] %vm263, %v245
      %v265 = vld [vmem:[#allocation2] sm:$0x1e]
      %v266 = vld [vmem:[#allocation2 + $0x8] sm:$0x1e]
      %v267 = vld [vmem:[#allocation2 + $0x10] sm:$0x1e]
      %v268 = vld [vmem:[#allocation2 + $0x18] sm:$0x1e]
      %v269 = vld [vmem:[#allocation2 + $0x20] sm:$0x1e]
      %v270 = vld [vmem:[#allocation2 + $0x28] sm:$0x1e]
      %v277 = vrot.slane %v265, 1
      %v278 = vrot.slane %v266, 1
      %v279 = vrot.slane %v267, 1
      %v280 = vrot.slane %v268, 1
      %v281 = vrot.slane %v269, 1
      %v282 = vrot.slane %v270, 1
      %283 = vrot.lane.b32.xlu0 %v277, 126
      %v284 = vpop.permute.xlu0 %283
      %285 = vrot.lane.b32.xlu0 %v278, 126
      %v286 = vpop.permute.xlu0 %285
      %287 = vrot.lane.b32.xlu0 %v279, 126
      %v288 = vpop.permute.xlu0 %287
      %289 = vrot.lane.b32.xlu0 %v280, 126
      %v290 = vpop.permute.xlu0 %289
      %291 = vrot.lane.b32.xlu0 %v281, 126
      %v292 = vpop.permute.xlu0 %291
      %293 = vrot.lane.b32.xlu0 %v282, 126
      %v294 = vpop.permute.xlu0 %293
      %vm295 = vcmask 1031168
      %v296 = vsel %vm295, %v284, %v286
      %v297 = vsel %vm295, %v286, %v288
      %v298 = vsel %vm295, %v288, %v290
      %v299 = vsel %vm295, %v290, %v292
      %v300 = vsel %vm295, %v292, %v294
      %307 = vst [vmem:[#allocation3 + $0x30] sm:$0xf] %v296
      %308 = vst [vmem:[#allocation3 + $0x38] sm:$0xf] %v297
      %309 = vst [vmem:[#allocation3 + $0x40] sm:$0xf] %v298
      %310 = vst [vmem:[#allocation3 + $0x48] sm:$0xf] %v299
      %311 = vst [vmem:[#allocation3 + $0x50] sm:$0xf] %v300
      %312 = vst.msk [vmem:[#allocation3 + $0x58] sm:$0xf] %vm214, %v294
      %v313 = vld [vmem:[#allocation2] sm:$0x1e]
      %v314 = vld [vmem:[#allocation2 + $0x8] sm:$0x1e]
      %v315 = vld [vmem:[#allocation2 + $0x10] sm:$0x1e]
      %v316 = vld [vmem:[#allocation2 + $0x18] sm:$0x1e]
      %v317 = vld [vmem:[#allocation2 + $0x20] sm:$0x1e]
      %v318 = vld [vmem:[#allocation2 + $0x28] sm:$0x1e]
      %v325 = vrot.slane %v313, 5
      %v326 = vrot.slane %v314, 5
      %v327 = vrot.slane %v315, 5
      %v328 = vrot.slane %v316, 5
      %v329 = vrot.slane %v317, 5
      %v330 = vrot.slane %v318, 5
      %331 = vrot.lane.b32.xlu0 %v325, 110
      %v332 = vpop.permute.xlu0 %331
      %333 = vrot.lane.b32.xlu0 %v326, 110
      %v334 = vpop.permute.xlu0 %333
      %335 = vrot.lane.b32.xlu0 %v327, 110
      %v336 = vpop.permute.xlu0 %335
      %337 = vrot.lane.b32.xlu0 %v328, 110
      %v338 = vpop.permute.xlu0 %337
      %339 = vrot.lane.b32.xlu0 %v329, 110
      %v340 = vpop.permute.xlu0 %339
      %341 = vrot.lane.b32.xlu0 %v330, 110
      %v342 = vpop.permute.xlu0 %341
      %vm343 = vcmask 900096
      %v344 = vsel %vm343, %v332, %v334
      %v345 = vsel %vm343, %v334, %v336
      %v346 = vsel %vm343, %v336, %v338
      %v347 = vsel %vm343, %v338, %v340
      %v348 = vsel %vm343, %v340, %v342
      %355 = vst [vmem:[#allocation3 + $0x30] sm:$0xf0] %v344
      %356 = vst [vmem:[#allocation3 + $0x38] sm:$0xf0] %v345
      %357 = vst [vmem:[#allocation3 + $0x40] sm:$0xf0] %v346
      %358 = vst [vmem:[#allocation3 + $0x48] sm:$0xf0] %v347
      %359 = vst [vmem:[#allocation3 + $0x50] sm:$0xf0] %v348
      %360 = vst.msk [vmem:[#allocation3 + $0x58] sm:$0xf0] %vm263, %v342
      %v361 = vld [vmem:[#allocation2] sm:$0x1e]
      %v362 = vld [vmem:[#allocation2 + $0x8] sm:$0x1e]
      %v363 = vld [vmem:[#allocation2 + $0x10] sm:$0x1e]
      %v364 = vld [vmem:[#allocation2 + $0x18] sm:$0x1e]
      %v365 = vld [vmem:[#allocation2 + $0x20] sm:$0x1e]
      %v366 = vld [vmem:[#allocation2 + $0x28] sm:$0x1e]
      %v373 = vrot.slane %v361, 1
      %v374 = vrot.slane %v362, 1
      %v375 = vrot.slane %v363, 1
      %v376 = vrot.slane %v364, 1
      %v377 = vrot.slane %v365, 1
      %v378 = vrot.slane %v366, 1
      %379 = vrot.lane.b32.xlu0 %v373, 109
      %v380 = vpop.permute.xlu0 %379
      %381 = vrot.lane.b32.xlu0 %v374, 109
      %v382 = vpop.permute.xlu0 %381
      %383 = vrot.lane.b32.xlu0 %v375, 109
      %v384 = vpop.permute.xlu0 %383
      %385 = vrot.lane.b32.xlu0 %v376, 109
      %v386 = vpop.permute.xlu0 %385
      %387 = vrot.lane.b32.xlu0 %v377, 109
      %v388 = vpop.permute.xlu0 %387
      %389 = vrot.lane.b32.xlu0 %v378, 109
      %v390 = vpop.permute.xlu0 %389
      %vm391 = vcmask 891904
      %v392 = vsel %vm391, %v380, %v382
      %v393 = vsel %vm391, %v382, %v384
      %v394 = vsel %vm391, %v384, %v386
      %v395 = vsel %vm391, %v386, %v388
      %v396 = vsel %vm391, %v388, %v390
      %403 = vst [vmem:[#allocation3 + $0x60] sm:$0xf] %v392
      %404 = vst [vmem:[#allocation3 + $0x68] sm:$0xf] %v393
      %405 = vst [vmem:[#allocation3 + $0x70] sm:$0xf] %v394
      %406 = vst [vmem:[#allocation3 + $0x78] sm:$0xf] %v395
      %407 = vst [vmem:[#allocation3 + $0x80] sm:$0xf] %v396
      %408 = vst.msk [vmem:[#allocation3 + $0x88] sm:$0xf] %vm214, %v390
      %v409 = vld [vmem:[#allocation2] sm:$0x1e]
      %v410 = vld [vmem:[#allocation2 + $0x8] sm:$0x1e]
      %v411 = vld [vmem:[#allocation2 + $0x10] sm:$0x1e]
      %v412 = vld [vmem:[#allocation2 + $0x18] sm:$0x1e]
      %v413 = vld [vmem:[#allocation2 + $0x20] sm:$0x1e]
      %v414 = vld [vmem:[#allocation2 + $0x28] sm:$0x1e]
      %v421 = vrot.slane %v409, 5
      %v422 = vrot.slane %v410, 5
      %v423 = vrot.slane %v411, 5
      %v424 = vrot.slane %v412, 5
      %v425 = vrot.slane %v413, 5
      %v426 = vrot.slane %v414, 5
      %427 = vrot.lane.b32.xlu0 %v421, 108
      %v428 = vpop.permute.xlu0 %427
      %429 = vrot.lane.b32.xlu0 %v422, 108
      %v430 = vpop.permute.xlu0 %429
      %431 = vrot.lane.b32.xlu0 %v423, 108
      %v432 = vpop.permute.xlu0 %431
      %433 = vrot.lane.b32.xlu0 %v424, 108
      %v434 = vpop.permute.xlu0 %433
      %435 = vrot.lane.b32.xlu0 %v425, 108
      %v436 = vpop.permute.xlu0 %435
      %437 = vrot.lane.b32.xlu0 %v426, 108
      %v438 = vpop.permute.xlu0 %437
      %vm439 = vcmask 883712
      %v440 = vsel %vm439, %v428, %v430
      %v441 = vsel %vm439, %v430, %v432
      %v442 = vsel %vm439, %v432, %v434
      %v443 = vsel %vm439, %v434, %v436
      %v444 = vsel %vm439, %v436, %v438
      %451 = vst [vmem:[#allocation3 + $0x60] sm:$0xf0] %v440
      %452 = vst [vmem:[#allocation3 + $0x68] sm:$0xf0] %v441
      %453 = vst [vmem:[#allocation3 + $0x70] sm:$0xf0] %v442
      %454 = vst [vmem:[#allocation3 + $0x78] sm:$0xf0] %v443
      %455 = vst [vmem:[#allocation3 + $0x80] sm:$0xf0] %v444
      %456 = vst.msk [vmem:[#allocation3 + $0x88] sm:$0xf0] %vm263, %v438
      %v457 = vld [vmem:[#allocation2] sm:$0x1e]
      %v458 = vld [vmem:[#allocation2 + $0x8] sm:$0x1e]
      %v459 = vld [vmem:[#allocation2 + $0x10] sm:$0x1e]
      %v460 = vld [vmem:[#allocation2 + $0x18] sm:$0x1e]
      %v461 = vld [vmem:[#allocation2 + $0x20] sm:$0x1e]
      %v462 = vld [vmem:[#allocation2 + $0x28] sm:$0x1e]
      %v469 = vrot.slane %v457, 1
      %v470 = vrot.slane %v458, 1
      %v471 = vrot.slane %v459, 1
      %v472 = vrot.slane %v460, 1
      %v473 = vrot.slane %v461, 1
      %v474 = vrot.slane %v462, 1
      %475 = vrot.lane.b32.xlu0 %v469, 92
      %v476 = vpop.permute.xlu0 %475
      %477 = vrot.lane.b32.xlu0 %v470, 92
      %v478 = vpop.permute.xlu0 %477
      %479 = vrot.lane.b32.xlu0 %v471, 92
      %v480 = vpop.permute.xlu0 %479
      %481 = vrot.lane.b32.xlu0 %v472, 92
      %v482 = vpop.permute.xlu0 %481
      %483 = vrot.lane.b32.xlu0 %v473, 92
      %v484 = vpop.permute.xlu0 %483
      %485 = vrot.lane.b32.xlu0 %v474, 92
      %v486 = vpop.permute.xlu0 %485
      %vm487 = vcmask 752640
      %v488 = vsel %vm487, %v476, %v478
      %v489 = vsel %vm487, %v478, %v480
      %v490 = vsel %vm487, %v480, %v482
      %v491 = vsel %vm487, %v482, %v484
      %v492 = vsel %vm487, %v484, %v486
      %499 = vst [vmem:[#allocation3 + $0x90] sm:$0xf] %v488
      %500 = vst [vmem:[#allocation3 + $0x98] sm:$0xf] %v489
      %501 = vst [vmem:[#allocation3 + $0xa0] sm:$0xf] %v490
      %502 = vst [vmem:[#allocation3 + $0xa8] sm:$0xf] %v491
      %503 = vst [vmem:[#allocation3 + $0xb0] sm:$0xf] %v492
      %504 = vst.msk [vmem:[#allocation3 + $0xb8] sm:$0xf] %vm214, %v486
      %v505 = vld [vmem:[#allocation2] sm:$0x1e]
      %v506 = vld [vmem:[#allocation2 + $0x8] sm:$0x1e]
      %v507 = vld [vmem:[#allocation2 + $0x10] sm:$0x1e]
      %v508 = vld [vmem:[#allocation2 + $0x18] sm:$0x1e]
      %v509 = vld [vmem:[#allocation2 + $0x20] sm:$0x1e]
      %v510 = vld [vmem:[#allocation2 + $0x28] sm:$0x1e]
      %v517 = vrot.slane %v505, 5
      %v518 = vrot.slane %v506, 5
      %v519 = vrot.slane %v507, 5
      %v520 = vrot.slane %v508, 5
      %v521 = vrot.slane %v509, 5
      %v522 = vrot.slane %v510, 5
      %523 = vrot.lane.b32.xlu0 %v517, 91
      %v524 = vpop.permute.xlu0 %523
      %525 = vrot.lane.b32.xlu0 %v518, 91
      %v526 = vpop.permute.xlu0 %525
      %527 = vrot.lane.b32.xlu0 %v519, 91
      %v528 = vpop.permute.xlu0 %527
      %529 = vrot.lane.b32.xlu0 %v520, 91
      %v530 = vpop.permute.xlu0 %529
      %531 = vrot.lane.b32.xlu0 %v521, 91
      %v532 = vpop.permute.xlu0 %531
      %533 = vrot.lane.b32.xlu0 %v522, 91
      %v534 = vpop.permute.xlu0 %533
      %vm535 = vcmask 744448
      %v536 = vsel %vm535, %v524, %v526
      %v537 = vsel %vm535, %v526, %v528
      %v538 = vsel %vm535, %v528, %v530
      %v539 = vsel %vm535, %v530, %v532
      %v540 = vsel %vm535, %v532, %v534
      %547 = vst [vmem:[#allocation3 + $0x90] sm:$0xf0] %v536
      %548 = vst [vmem:[#allocation3 + $0x98] sm:$0xf0] %v537
      %549 = vst [vmem:[#allocation3 + $0xa0] sm:$0xf0] %v538
      %550 = vst [vmem:[#allocation3 + $0xa8] sm:$0xf0] %v539
      %551 = vst [vmem:[#allocation3 + $0xb0] sm:$0xf0] %v540
      %552 = vst.msk [vmem:[#allocation3 + $0xb8] sm:$0xf0] %vm263, %v534
      %v553 = vld [vmem:[#allocation2] sm:$0x1e]
      %v554 = vld [vmem:[#allocation2 + $0x8] sm:$0x1e]
      %v555 = vld [vmem:[#allocation2 + $0x10] sm:$0x1e]
      %v556 = vld [vmem:[#allocation2 + $0x18] sm:$0x1e]
      %v557 = vld [vmem:[#allocation2 + $0x20] sm:$0x1e]
      %v558 = vld [vmem:[#allocation2 + $0x28] sm:$0x1e]
      %v565 = vrot.slane %v553, 1
      %v566 = vrot.slane %v554, 1
      %v567 = vrot.slane %v555, 1
      %v568 = vrot.slane %v556, 1
      %v569 = vrot.slane %v557, 1
      %v570 = vrot.slane %v558, 1
      %571 = vrot.lane.b32.xlu0 %v565, 90
      %v572 = vpop.permute.xlu0 %571
      %573 = vrot.lane.b32.xlu0 %v566, 90
      %v574 = vpop.permute.xlu0 %573
      %575 = vrot.lane.b32.xlu0 %v567, 90
      %v576 = vpop.permute.xlu0 %575
      %577 = vrot.lane.b32.xlu0 %v568, 90
      %v578 = vpop.permute.xlu0 %577
      %579 = vrot.lane.b32.xlu0 %v569, 90
      %v580 = vpop.permute.xlu0 %579
      %581 = vrot.lane.b32.xlu0 %v570, 90
      %v582 = vpop.permute.xlu0 %581
      %vm583 = vcmask 736256
      %v584 = vsel %vm583, %v572, %v574
      %v585 = vsel %vm583, %v574, %v576
      %v586 = vsel %vm583, %v576, %v578
      %v587 = vsel %vm583, %v578, %v580
      %v588 = vsel %vm583, %v580, %v582
      %595 = vst [vmem:[#allocation3 + $0xc0] sm:$0xf] %v584
      %596 = vst [vmem:[#allocation3 + $0xc8] sm:$0xf] %v585
      %597 = vst [vmem:[#allocation3 + $0xd0] sm:$0xf] %v586
      %598 = vst [vmem:[#allocation3 + $0xd8] sm:$0xf] %v587
      %599 = vst [vmem:[#allocation3 + $0xe0] sm:$0xf] %v588
      %600 = vst.msk [vmem:[#allocation3 + $0xe8] sm:$0xf] %vm214, %v582
      %v601 = vld [vmem:[#allocation3] sm:$0xff]
      %v602 = vld [vmem:[#allocation3 + $0x8] sm:$0xff]
      %v603 = vld [vmem:[#allocation3 + $0x10] sm:$0xff]
      %v604 = vld [vmem:[#allocation3 + $0x18] sm:$0xff]
      %v605 = vld [vmem:[#allocation3 + $0x20] sm:$0xff]
      %v606 = vld [vmem:[#allocation3 + $0x28] sm:$0xff]
      %v607 = vld [vmem:[#allocation3 + $0x30] sm:$0xff]
      %v608 = vld [vmem:[#allocation3 + $0x38] sm:$0xff]
      %v609 = vld [vmem:[#allocation3 + $0x40] sm:$0xff]
      %v610 = vld [vmem:[#allocation3 + $0x48] sm:$0xff]
      %v611 = vld [vmem:[#allocation3 + $0x50] sm:$0xff]
      %v612 = vld [vmem:[#allocation3 + $0x58] sm:$0xff]
      %v613 = vld [vmem:[#allocation3 + $0x60] sm:$0xff]
      %v614 = vld [vmem:[#allocation3 + $0x68] sm:$0xff]
      %v615 = vld [vmem:[#allocation3 + $0x70] sm:$0xff]
      %v616 = vld [vmem:[#allocation3 + $0x78] sm:$0xff]
      %v617 = vld [vmem:[#allocation3 + $0x80] sm:$0xff]
      %v618 = vld [vmem:[#allocation3 + $0x88] sm:$0xff]
      %v619 = vld [vmem:[#allocation3 + $0x90] sm:$0xff]
      %v620 = vld [vmem:[#allocation3 + $0x98] sm:$0xff]
      %v621 = vld [vmem:[#allocation3 + $0xa0] sm:$0xff]
      %v622 = vld [vmem:[#allocation3 + $0xa8] sm:$0xff]
      %v623 = vld [vmem:[#allocation3 + $0xb0] sm:$0xff]
      %v624 = vld [vmem:[#allocation3 + $0xb8] sm:$0xff]
      %v625 = vld [vmem:[#allocation3 + $0xc0] sm:$0xf]
      %v626 = vld [vmem:[#allocation3 + $0xc8] sm:$0xf]
      %v627 = vld [vmem:[#allocation3 + $0xd0] sm:$0xf]
      %v628 = vld [vmem:[#allocation3 + $0xd8] sm:$0xf]
      %v629 = vld [vmem:[#allocation3 + $0xe0] sm:$0xf]
      %v630 = vld [vmem:[#allocation3 + $0xe8] sm:$0xf]
      %632 = vset.pattern.permute.xlu0 81
      %633 = vperm.xlu0 %632, %v184
      %v634 = vpop.permute.xlu0 %633
      %636 = vrot.lane.b32.xlu0 %v184, 119
      %v637 = vpop.permute.xlu0 %636
      %vm638 = vcmask 293888
      %v639 = vsel %vm638, %v637, 0
      %vm641 = vcmask 1043456
      %v643 = vsel %vm641, %v625, 0
      %v646 = vsel %vm641, %v626, 0
      %v649 = vsel %vm641, %v627, 0
      %v652 = vsel %vm641, %v628, 0
      %v655 = vsel %vm641, %v629, 0
      %v658 = vsel %vm641, %v630, 0
      %660 = vmatprep.subr.mxu0 %v602
      %661 = vmatpush1.msra.mxu0 %v601
      %662 = vmatprep.subr.mxu0 %v608
      %663 = vmatpush1.msra.mxu0 %v607
      %664 = vmatprep.subr.mxu0 %v614
      %665 = vmatpush1.msra.mxu0 %v613
      %666 = vmatprep.subr.mxu0 %v620
      %667 = vmatpush1.msra.mxu0 %v619
      %668 = vmatprep.subr.mxu0 %v646
      %669 = vmatpush1.msra.mxu0 %v643
      %670 = vmatprep.subr.mxu0 0.0
      %671 = vmatpush1.msra.mxu0 0.0
      %672 = vmatprep.subr.mxu0 0.0
      %673 = vmatpush1.msra.mxu0 0.0
      %674 = vmatprep.subr.mxu0 0.0
      %675 = vmatpush1.msra.mxu0 0.0
      %676 = vmatprep.subr.mxu0 0.0
      %677 = vmatpush1.msra.mxu0 0.0
      %678 = vmatprep.subr.mxu0 0.0
      %679 = vmatpush1.msra.mxu0 0.0
      %680 = vmatprep.subr.mxu0 0.0
      %681 = vmatpush1.msra.mxu0 0.0
      %682 = vmatprep.subr.mxu0 0.0
      %683 = vmatpush1.msra.mxu0 0.0
      %684 = vmatprep.subr.mxu0 0.0
      %685 = vmatpush1.msra.mxu0 0.0
      %686 = vmatprep.subr.mxu0 0.0
      %687 = vmatpush1.msra.mxu0 0.0
      %688 = vmatprep.subr.mxu0 0.0
      %689 = vmatpush1.msra.mxu0 0.0
      %690 = vmatprep.subr.mxu0 0.0
      %691 = vmatpush1.msra.mxu0 0.0
      %692 = vmatprep.subr.mxu0 0.0
      %693 = vmatpush1.msra.mxu0 0.0
      %694 = vmatprep.subr.mxu0 0.0
      %695 = vmatpush1.msra.mxu0 0.0
      %696 = vmatprep.subr.mxu0 0.0
      %697 = vmatpush1.msra.mxu0 0.0
      %698 = vmatprep.subr.mxu0 0.0
      %699 = vmatpush1.msra.mxu0 0.0
      %700 = vmatprep.subr.mxu0 0.0
      %701 = vmatpush1.msra.mxu0 0.0
      %702 = vmatprep.subr.mxu0 0.0
      %703 = vmatpush1.msra.mxu0 0.0
      %704 = vmatprep.subr.mxu0 0.0
      %705 = vmatpush1.msra.mxu0 0.0
      %706 = vmatprep.subr.mxu0 0.0
      %707 = vmatpush1.msra.mxu0 0.0
      %708 = vmatprep.subr.mxu0 0.0
      %709 = vmatpush1.msra.mxu0 0.0
      %710 = vmatprep.subr.mxu0 0.0
      %711 = vmatpush1.msra.mxu0 0.0
      %712 = vmatprep.subr.mxu0 0.0
      %713 = vmatpush1.msra.mxu0 0.0
      %714 = vmatprep.subr.mxu0 0.0
      %715 = vmatpush1.msra.mxu0 0.0
      %716 = vmatprep.subr.mxu0 0.0
      %717 = vmatpush1.msra.mxu0 0.0
      %718 = vmatprep.subr.mxu0 0.0
      %719 = vmatpush1.msra.mxu0 0.0
      %720 = vmatprep.subr.mxu0 0.0
      %721 = vmatpush1.msra.mxu0 0.0
      %722 = vmatprep.subr.mxu0 0.0
      %723 = vmatpush1.msra.mxu0 0.0
      %724 = vmatprep.mubr.f32.mxu0 0.0
      %725 = vmatmul.mubr.f32.gmra.mrb[0].mxu0 %v639
      %v726 = vpop.f32.mrb[0].mxu0
      %v727 = vadd.f32 %v634, %v726
      %v728 = vpop.f32.mrb[0].mxu0
      %v729 = vadd.f32 %v634, %v728
      %730 = vdwg.mxu0
      %731 = vmatprep.subr.mxu0 %v604
      %732 = vmatpush1.msra.mxu0 %v603
      %733 = vmatprep.subr.mxu0 %v610
      %734 = vmatpush1.msra.mxu0 %v609
      %735 = vmatprep.subr.mxu0 %v616
      %736 = vmatpush1.msra.mxu0 %v615
      %737 = vmatprep.subr.mxu0 %v622
      %738 = vmatpush1.msra.mxu0 %v621
      %739 = vmatprep.subr.mxu0 %v652
      %740 = vmatpush1.msra.mxu0 %v649
      %741 = vmatprep.subr.mxu0 0.0
      %742 = vmatpush1.msra.mxu0 0.0
      %743 = vmatprep.subr.mxu0 0.0
      %744 = vmatpush1.msra.mxu0 0.0
      %745 = vmatprep.subr.mxu0 0.0
      %746 = vmatpush1.msra.mxu0 0.0
      %747 = vmatprep.subr.mxu0 0.0
      %748 = vmatpush1.msra.mxu0 0.0
      %749 = vmatprep.subr.mxu0 0.0
      %750 = vmatpush1.msra.mxu0 0.0
      %751 = vmatprep.subr.mxu0 0.0
      %752 = vmatpush1.msra.mxu0 0.0
      %753 = vmatprep.subr.mxu0 0.0
      %754 = vmatpush1.msra.mxu0 0.0
      %755 = vmatprep.subr.mxu0 0.0
      %756 = vmatpush1.msra.mxu0 0.0
      %757 = vmatprep.subr.mxu0 0.0
      %758 = vmatpush1.msra.mxu0 0.0
      %759 = vmatprep.subr.mxu0 0.0
      %760 = vmatpush1.msra.mxu0 0.0
      %761 = vmatprep.subr.mxu0 0.0
      %762 = vmatpush1.msra.mxu0 0.0
      %763 = vmatprep.subr.mxu0 0.0
      %764 = vmatpush1.msra.mxu0 0.0
      %765 = vmatprep.subr.mxu0 0.0
      %766 = vmatpush1.msra.mxu0 0.0
      %767 = vmatprep.subr.mxu0 0.0
      %768 = vmatpush1.msra.mxu0 0.0
      %769 = vmatprep.subr.mxu0 0.0
      %770 = vmatpush1.msra.mxu0 0.0
      %771 = vmatprep.subr.mxu0 0.0
      %772 = vmatpush1.msra.mxu0 0.0
      %773 = vmatprep.subr.mxu0 0.0
      %774 = vmatpush1.msra.mxu0 0.0
      %775 = vmatprep.subr.mxu0 0.0
      %776 = vmatpush1.msra.mxu0 0.0
      %777 = vmatprep.subr.mxu0 0.0
      %778 = vmatpush1.msra.mxu0 0.0
      %779 = vmatprep.subr.mxu0 0.0
      %780 = vmatpush1.msra.mxu0 0.0
      %781 = vmatprep.subr.mxu0 0.0
      %782 = vmatpush1.msra.mxu0 0.0
      %783 = vmatprep.subr.mxu0 0.0
      %784 = vmatpush1.msra.mxu0 0.0
      %785 = vmatprep.subr.mxu0 0.0
      %786 = vmatpush1.msra.mxu0 0.0
      %787 = vmatprep.subr.mxu0 0.0
      %788 = vmatpush1.msra.mxu0 0.0
      %789 = vmatprep.subr.mxu0 0.0
      %790 = vmatpush1.msra.mxu0 0.0
      %791 = vmatprep.subr.mxu0 0.0
      %792 = vmatpush1.msra.mxu0 0.0
      %793 = vmatprep.subr.mxu0 0.0
      %794 = vmatpush1.msra.mxu0 0.0
      %795 = vmatprep.mubr.f32.mxu0 0.0
      %796 = vmatmul.mubr.f32.gmra.mrb[0].mxu0 %v639
      %v797 = vpop.f32.mrb[0].mxu0
      %v798 = vadd.f32 %v634, %v797
      %v799 = vpop.f32.mrb[0].mxu0
      %v800 = vadd.f32 %v634, %v799
      %801 = vdwg.mxu0
      %802 = vmatprep.subr.mxu0 %v606
      %803 = vmatpush1.msra.mxu0 %v605
      %804 = vmatprep.subr.mxu0 %v612
      %805 = vmatpush1.msra.mxu0 %v611
      %806 = vmatprep.subr.mxu0 %v618
      %807 = vmatpush1.msra.mxu0 %v617
      %808 = vmatprep.subr.mxu0 %v624
      %809 = vmatpush1.msra.mxu0 %v623
      %810 = vmatprep.subr.mxu0 %v658
      %811 = vmatpush1.msra.mxu0 %v655
      %812 = vmatprep.subr.mxu0 0.0
      %813 = vmatpush1.msra.mxu0 0.0
      %814 = vmatprep.subr.mxu0 0.0
      %815 = vmatpush1.msra.mxu0 0.0
      %816 = vmatprep.subr.mxu0 0.0
      %817 = vmatpush1.msra.mxu0 0.0
      %818 = vmatprep.subr.mxu0 0.0
      %819 = vmatpush1.msra.mxu0 0.0
      %820 = vmatprep.subr.mxu0 0.0
      %821 = vmatpush1.msra.mxu0 0.0
      %822 = vmatprep.subr.mxu0 0.0
      %823 = vmatpush1.msra.mxu0 0.0
      %824 = vmatprep.subr.mxu0 0.0
      %825 = vmatpush1.msra.mxu0 0.0
      %826 = vmatprep.subr.mxu0 0.0
      %827 = vmatpush1.msra.mxu0 0.0
      %828 = vmatprep.subr.mxu0 0.0
      %829 = vmatpush1.msra.mxu0 0.0
      %830 = vmatprep.subr.mxu0 0.0
      %831 = vmatpush1.msra.mxu0 0.0
      %832 = vmatprep.subr.mxu0 0.0
      %833 = vmatpush1.msra.mxu0 0.0
      %834 = vmatprep.subr.mxu0 0.0
      %835 = vmatpush1.msra.mxu0 0.0
      %836 = vmatprep.subr.mxu0 0.0
      %837 = vmatpush1.msra.mxu0 0.0
      %838 = vmatprep.subr.mxu0 0.0
      %839 = vmatpush1.msra.mxu0 0.0
      %840 = vmatprep.subr.mxu0 0.0
      %841 = vmatpush1.msra.mxu0 0.0
      %842 = vmatprep.subr.mxu0 0.0
      %843 = vmatpush1.msra.mxu0 0.0
      %844 = vmatprep.subr.mxu0 0.0
      %845 = vmatpush1.msra.mxu0 0.0
      %846 = vmatprep.subr.mxu0 0.0
      %847 = vmatpush1.msra.mxu0 0.0
      %848 = vmatprep.subr.mxu0 0.0
      %849 = vmatpush1.msra.mxu0 0.0
      %850 = vmatprep.subr.mxu0 0.0
      %851 = vmatpush1.msra.mxu0 0.0
      %852 = vmatprep.subr.mxu0 0.0
      %853 = vmatpush1.msra.mxu0 0.0
      %854 = vmatprep.subr.mxu0 0.0
      %855 = vmatpush1.msra.mxu0 0.0
      %856 = vmatprep.subr.mxu0 0.0
      %857 = vmatpush1.msra.mxu0 0.0
      %858 = vmatprep.subr.mxu0 0.0
      %859 = vmatpush1.msra.mxu0 0.0
      %860 = vmatprep.subr.mxu0 0.0
      %861 = vmatpush1.msra.mxu0 0.0
      %862 = vmatprep.subr.mxu0 0.0
      %863 = vmatpush1.msra.mxu0 0.0
      %864 = vmatprep.subr.mxu0 0.0
      %865 = vmatpush1.msra.mxu0 0.0
      %866 = vmatprep.mubr.f32.mxu0 0.0
      %867 = vmatmul.mubr.f32.gmra.mrb[0].mxu0 %v639
      %v868 = vpop.f32.mrb[0].mxu0
      %v869 = vadd.f32 %v634, %v868
      %v870 = vpop.f32.mrb[0].mxu0
      %v871 = vadd.f32 %v634, %v870
      %872 = vdwg.mxu0
      %v873 = vld [vmem:[#allocation2] ss:$8 sm:$0xf]
      %v874 = vld [vmem:[#allocation2] ss:$8 sm:$0x30]
      %v875 = vor.u32 %v873, %v874
      %876 = vset.pattern.permute.xlu0 0
      %877 = vperm.xlu0 %876, %v184
      %v878 = vpop.permute.xlu0 %877
      %v881 = vlaneseq
      %v882 = vshrl.u32 %v881, 7
      %v883 = vsub.s32 0, %v882
      %v884 = vrot.slane %v875, %v883
      %v885 = vlaneseq
      %v886 = vshrl.u32 %v885, 7
      %v887 = vsub.s32 1, %v886
      %v888 = vrot.slane %v875, %v887
      %v889 = vlaneseq
      %v890 = vshrl.u32 %v889, 7
      %v891 = vsub.s32 2, %v890
      %v892 = vrot.slane %v875, %v891
      %v893 = vlaneseq
      %v894 = vshrl.u32 %v893, 7
      %v895 = vsub.s32 3, %v894
      %v896 = vrot.slane %v875, %v895
      %v897 = vlaneseq
      %v898 = vshrl.u32 %v897, 7
      %v899 = vsub.s32 4, %v898
      %v900 = vrot.slane %v875, %v899
      %v901 = vlaneseq
      %v902 = vshrl.u32 %v901, 7
      %v903 = vsub.s32 5, %v902
      %v904 = vrot.slane %v875, %v903
      %v911 = vmul.f32 %v878, %v884
      %v912 = vmul.f32 %v878, %v888
      %v913 = vmul.f32 %v878, %v892
      %v914 = vmul.f32 %v878, %v896
      %v915 = vmul.f32 %v878, %v900
      %v916 = vmul.f32 %v878, %v904
      %v917 = vadd.f32 %v727, %v911
      %v918 = vadd.f32 %v729, %v912
      %v919 = vadd.f32 %v798, %v913
      %v920 = vadd.f32 %v800, %v914
      %v921 = vadd.f32 %v869, %v915
      %v922 = vadd.f32 %v871, %v916
      %923 = vset.pattern.permute.xlu0 1
      %924 = vperm.xlu0 %923, %v184
      %v925 = vpop.permute.xlu0 %924
      %v927 = vmul.f32 %v925, %v884
      %v928 = vmul.f32 %v925, %v888
      %v929 = vmul.f32 %v925, %v892
      %v930 = vmul.f32 %v925, %v896
      %v931 = vmul.f32 %v925, %v900
      %v932 = vmul.f32 %v925, %v904
      %939 = vrot.lane.b32.xlu0 %v927, 127
      %v940 = vpop.permute.xlu0 %939
      %941 = vrot.lane.b32.xlu0 %v928, 127
      %v942 = vpop.permute.xlu0 %941
      %943 = vrot.lane.b32.xlu0 %v929, 127
      %v944 = vpop.permute.xlu0 %943
      %945 = vrot.lane.b32.xlu0 %v930, 127
      %v946 = vpop.permute.xlu0 %945
      %947 = vrot.lane.b32.xlu0 %v931, 127
      %v948 = vpop.permute.xlu0 %947
      %949 = vrot.lane.b32.xlu0 %v932, 127
      %v950 = vpop.permute.xlu0 %949
      %v951 = vsel %vm246, %v940, %v942
      %v952 = vsel %vm246, %v942, %v944
      %v953 = vsel %vm246, %v944, %v946
      %v954 = vsel %vm246, %v946, %v948
      %v955 = vsel %vm246, %v948, %v950
      %v962 = vadd.f32 %v917, %v951
      %v963 = vadd.f32 %v918, %v952
      %v964 = vadd.f32 %v919, %v953
      %v965 = vadd.f32 %v920, %v954
      %v966 = vadd.f32 %v921, %v955
      %v967 = vadd.f32 %v922, %v950
      %968 = vset.pattern.permute.xlu0 2
      %969 = vperm.xlu0 %968, %v184
      %v970 = vpop.permute.xlu0 %969
      %v972 = vmul.f32 %v970, %v884
      %v973 = vmul.f32 %v970, %v888
      %v974 = vmul.f32 %v970, %v892
      %v975 = vmul.f32 %v970, %v896
      %v976 = vmul.f32 %v970, %v900
      %v977 = vmul.f32 %v970, %v904
      %984 = vrot.lane.b32.xlu0 %v972, 126
      %v985 = vpop.permute.xlu0 %984
      %986 = vrot.lane.b32.xlu0 %v973, 126
      %v987 = vpop.permute.xlu0 %986
      %988 = vrot.lane.b32.xlu0 %v974, 126
      %v989 = vpop.permute.xlu0 %988
      %990 = vrot.lane.b32.xlu0 %v975, 126
      %v991 = vpop.permute.xlu0 %990
      %992 = vrot.lane.b32.xlu0 %v976, 126
      %v993 = vpop.permute.xlu0 %992
      %994 = vrot.lane.b32.xlu0 %v977, 126
      %v995 = vpop.permute.xlu0 %994
      %v996 = vsel %vm295, %v985, %v987
      %v997 = vsel %vm295, %v987, %v989
      %v998 = vsel %vm295, %v989, %v991
      %v999 = vsel %vm295, %v991, %v993
      %v1000 = vsel %vm295, %v993, %v995
      %v1007 = vadd.f32 %v962, %v996
      %v1008 = vadd.f32 %v963, %v997
      %v1009 = vadd.f32 %v964, %v998
      %v1010 = vadd.f32 %v965, %v999
      %v1011 = vadd.f32 %v966, %v1000
      %v1012 = vadd.f32 %v967, %v995
      %1013 = vset.pattern.permute.xlu0 3
      %1014 = vperm.xlu0 %1013, %v184
      %v1015 = vpop.permute.xlu0 %1014
      %v1017 = vmul.f32 %v1015, %v884
      %v1018 = vmul.f32 %v1015, %v888
      %v1019 = vmul.f32 %v1015, %v892
      %v1020 = vmul.f32 %v1015, %v896
      %v1021 = vmul.f32 %v1015, %v900
      %v1022 = vmul.f32 %v1015, %v904
      %1029 = vrot.lane.b32.xlu0 %v1017, 110
      %v1030 = vpop.permute.xlu0 %1029
      %1031 = vrot.lane.b32.xlu0 %v1018, 110
      %v1032 = vpop.permute.xlu0 %1031
      %1033 = vrot.lane.b32.xlu0 %v1019, 110
      %v1034 = vpop.permute.xlu0 %1033
      %1035 = vrot.lane.b32.xlu0 %v1020, 110
      %v1036 = vpop.permute.xlu0 %1035
      %1037 = vrot.lane.b32.xlu0 %v1021, 110
      %v1038 = vpop.permute.xlu0 %1037
      %1039 = vrot.lane.b32.xlu0 %v1022, 110
      %v1040 = vpop.permute.xlu0 %1039
      %v1041 = vsel %vm343, %v1030, %v1032
      %v1042 = vsel %vm343, %v1032, %v1034
      %v1043 = vsel %vm343, %v1034, %v1036
      %v1044 = vsel %vm343, %v1036, %v1038
      %v1045 = vsel %vm343, %v1038, %v1040
      %v1052 = vadd.f32 %v1007, %v1041
      %v1053 = vadd.f32 %v1008, %v1042
      %v1054 = vadd.f32 %v1009, %v1043
      %v1055 = vadd.f32 %v1010, %v1044
      %v1056 = vadd.f32 %v1011, %v1045
      %v1057 = vadd.f32 %v1012, %v1040
      %1058 = vset.pattern.permute.xlu0 4
      %1059 = vperm.xlu0 %1058, %v184
      %v1060 = vpop.permute.xlu0 %1059
      %v1062 = vmul.f32 %v1060, %v884
      %v1063 = vmul.f32 %v1060, %v888
      %v1064 = vmul.f32 %v1060, %v892
      %v1065 = vmul.f32 %v1060, %v896
      %v1066 = vmul.f32 %v1060, %v900
      %v1067 = vmul.f32 %v1060, %v904
      %1074 = vrot.lane.b32.xlu0 %v1062, 109
      %v1075 = vpop.permute.xlu0 %1074
      %1076 = vrot.lane.b32.xlu0 %v1063, 109
      %v1077 = vpop.permute.xlu0 %1076
      %1078 = vrot.lane.b32.xlu0 %v1064, 109
      %v1079 = vpop.permute.xlu0 %1078
      %1080 = vrot.lane.b32.xlu0 %v1065, 109
      %v1081 = vpop.permute.xlu0 %1080
      %1082 = vrot.lane.b32.xlu0 %v1066, 109
      %v1083 = vpop.permute.xlu0 %1082
      %1084 = vrot.lane.b32.xlu0 %v1067, 109
      %v1085 = vpop.permute.xlu0 %1084
      %v1086 = vsel %vm391, %v1075, %v1077
      %v1087 = vsel %vm391, %v1077, %v1079
      %v1088 = vsel %vm391, %v1079, %v1081
      %v1089 = vsel %vm391, %v1081, %v1083
      %v1090 = vsel %vm391, %v1083, %v1085
      %v1097 = vadd.f32 %v1052, %v1086
      %v1098 = vadd.f32 %v1053, %v1087
      %v1099 = vadd.f32 %v1054, %v1088
      %v1100 = vadd.f32 %v1055, %v1089
      %v1101 = vadd.f32 %v1056, %v1090
      %v1102 = vadd.f32 %v1057, %v1085
      %1103 = vset.pattern.permute.xlu0 5
      %1104 = vperm.xlu0 %1103, %v184
      %v1105 = vpop.permute.xlu0 %1104
      %v1107 = vmul.f32 %v1105, %v884
      %v1108 = vmul.f32 %v1105, %v888
      %v1109 = vmul.f32 %v1105, %v892
      %v1110 = vmul.f32 %v1105, %v896
      %v1111 = vmul.f32 %v1105, %v900
      %v1112 = vmul.f32 %v1105, %v904
      %1119 = vrot.lane.b32.xlu0 %v1107, 108
      %v1120 = vpop.permute.xlu0 %1119
      %1121 = vrot.lane.b32.xlu0 %v1108, 108
      %v1122 = vpop.permute.xlu0 %1121
      %1123 = vrot.lane.b32.xlu0 %v1109, 108
      %v1124 = vpop.permute.xlu0 %1123
      %1125 = vrot.lane.b32.xlu0 %v1110, 108
      %v1126 = vpop.permute.xlu0 %1125
      %1127 = vrot.lane.b32.xlu0 %v1111, 108
      %v1128 = vpop.permute.xlu0 %1127
      %1129 = vrot.lane.b32.xlu0 %v1112, 108
      %v1130 = vpop.permute.xlu0 %1129
      %v1131 = vsel %vm439, %v1120, %v1122
      %v1132 = vsel %vm439, %v1122, %v1124
      %v1133 = vsel %vm439, %v1124, %v1126
      %v1134 = vsel %vm439, %v1126, %v1128
      %v1135 = vsel %vm439, %v1128, %v1130
      %v1142 = vadd.f32 %v1097, %v1131
      %v1143 = vadd.f32 %v1098, %v1132
      %v1144 = vadd.f32 %v1099, %v1133
      %v1145 = vadd.f32 %v1100, %v1134
      %v1146 = vadd.f32 %v1101, %v1135
      %v1147 = vadd.f32 %v1102, %v1130
      %1148 = vset.pattern.permute.xlu0 6
      %1149 = vperm.xlu0 %1148, %v184
      %v1150 = vpop.permute.xlu0 %1149
      %v1152 = vmul.f32 %v1150, %v884
      %v1153 = vmul.f32 %v1150, %v888
      %v1154 = vmul.f32 %v1150, %v892
      %v1155 = vmul.f32 %v1150, %v896
      %v1156 = vmul.f32 %v1150, %v900
      %v1157 = vmul.f32 %v1150, %v904
      %1164 = vrot.lane.b32.xlu0 %v1152, 92
      %v1165 = vpop.permute.xlu0 %1164
      %1166 = vrot.lane.b32.xlu0 %v1153, 92
      %v1167 = vpop.permute.xlu0 %1166
      %1168 = vrot.lane.b32.xlu0 %v1154, 92
      %v1169 = vpop.permute.xlu0 %1168
      %1170 = vrot.lane.b32.xlu0 %v1155, 92
      %v1171 = vpop.permute.xlu0 %1170
      %1172 = vrot.lane.b32.xlu0 %v1156, 92
      %v1173 = vpop.permute.xlu0 %1172
      %1174 = vrot.lane.b32.xlu0 %v1157, 92
      %v1175 = vpop.permute.xlu0 %1174
      %v1176 = vsel %vm487, %v1165, %v1167
      %v1177 = vsel %vm487, %v1167, %v1169
      %v1178 = vsel %vm487, %v1169, %v1171
      %v1179 = vsel %vm487, %v1171, %v1173
      %v1180 = vsel %vm487, %v1173, %v1175
      %v1187 = vadd.f32 %v1142, %v1176
      %v1188 = vadd.f32 %v1143, %v1177
      %v1189 = vadd.f32 %v1144, %v1178
      %v1190 = vadd.f32 %v1145, %v1179
      %v1191 = vadd.f32 %v1146, %v1180
      %v1192 = vadd.f32 %v1147, %v1175
      %1193 = vset.pattern.permute.xlu0 7
      %1194 = vperm.xlu0 %1193, %v184
      %v1195 = vpop.permute.xlu0 %1194
      %v1197 = vmul.f32 %v1195, %v884
      %v1198 = vmul.f32 %v1195, %v888
      %v1199 = vmul.f32 %v1195, %v892
      %v1200 = vmul.f32 %v1195, %v896
      %v1201 = vmul.f32 %v1195, %v900
      %v1202 = vmul.f32 %v1195, %v904
      %1209 = vrot.lane.b32.xlu0 %v1197, 91
      %v1210 = vpop.permute.xlu0 %1209
      %1211 = vrot.lane.b32.xlu0 %v1198, 91
      %v1212 = vpop.permute.xlu0 %1211
      %1213 = vrot.lane.b32.xlu0 %v1199, 91
      %v1214 = vpop.permute.xlu0 %1213
      %1215 = vrot.lane.b32.xlu0 %v1200, 91
      %v1216 = vpop.permute.xlu0 %1215
      %1217 = vrot.lane.b32.xlu0 %v1201, 91
      %v1218 = vpop.permute.xlu0 %1217
      %1219 = vrot.lane.b32.xlu0 %v1202, 91
      %v1220 = vpop.permute.xlu0 %1219
      %v1221 = vsel %vm535, %v1210, %v1212
      %v1222 = vsel %vm535, %v1212, %v1214
      %v1223 = vsel %vm535, %v1214, %v1216
      %v1224 = vsel %vm535, %v1216, %v1218
      %v1225 = vsel %vm535, %v1218, %v1220
      %v1232 = vadd.f32 %v1187, %v1221
      %v1233 = vadd.f32 %v1188, %v1222
      %v1234 = vadd.f32 %v1189, %v1223
      %v1235 = vadd.f32 %v1190, %v1224
      %v1236 = vadd.f32 %v1191, %v1225
      %v1237 = vadd.f32 %v1192, %v1220
      %1238 = vset.pattern.permute.xlu0 8
      %1239 = vperm.xlu0 %1238, %v184
      %v1240 = vpop.permute.xlu0 %1239
      %v1242 = vmul.f32 %v1240, %v884
      %v1243 = vmul.f32 %v1240, %v888
      %v1244 = vmul.f32 %v1240, %v892
      %v1245 = vmul.f32 %v1240, %v896
      %v1246 = vmul.f32 %v1240, %v900
      %v1247 = vmul.f32 %v1240, %v904
      %1254 = vrot.lane.b32.xlu0 %v1242, 90
      %v1255 = vpop.permute.xlu0 %1254
      %1256 = vrot.lane.b32.xlu0 %v1243, 90
      %v1257 = vpop.permute.xlu0 %1256
      %1258 = vrot.lane.b32.xlu0 %v1244, 90
      %v1259 = vpop.permute.xlu0 %1258
      %1260 = vrot.lane.b32.xlu0 %v1245, 90
      %v1261 = vpop.permute.xlu0 %1260
      %1262 = vrot.lane.b32.xlu0 %v1246, 90
      %v1263 = vpop.permute.xlu0 %1262
      %1264 = vrot.lane.b32.xlu0 %v1247, 90
      %v1265 = vpop.permute.xlu0 %1264
      %v1266 = vsel %vm583, %v1255, %v1257
      %v1267 = vsel %vm583, %v1257, %v1259
      %v1268 = vsel %vm583, %v1259, %v1261
      %v1269 = vsel %vm583, %v1261, %v1263
      %v1270 = vsel %vm583, %v1263, %v1265
      %v1277 = vadd.f32 %v1232, %v1266
      %v1278 = vadd.f32 %v1233, %v1267
      %v1279 = vadd.f32 %v1234, %v1268
      %v1280 = vadd.f32 %v1235, %v1269
      %v1281 = vadd.f32 %v1236, %v1270
      %v1282 = vadd.f32 %v1237, %v1265
      %v1283 = vtanh.pop %v1277
      %v1284 = vtanh.pop %v1278
      %v1285 = vtanh.pop %v1279
      %v1286 = vtanh.pop %v1280
      %v1287 = vtanh.pop %v1281
      %v1288 = vtanh.pop %v1282
      %v1290 = vlaneseq
      %v1291 = vshrl.u32 %v1290, 7
      %v1292 = vsub.s32 0, %v1291
      %v1293 = vrot.slane %v183, %v1292
      %v1294 = vlaneseq
      %v1295 = vshrl.u32 %v1294, 7
      %v1296 = vsub.s32 1, %v1295
      %v1297 = vrot.slane %v183, %v1296
      %v1298 = vlaneseq
      %v1299 = vshrl.u32 %v1298, 7
      %v1300 = vsub.s32 2, %v1299
      %v1301 = vrot.slane %v183, %v1300
      %v1302 = vlaneseq
      %v1303 = vshrl.u32 %v1302, 7
      %v1304 = vsub.s32 3, %v1303
      %v1305 = vrot.slane %v183, %v1304
      %v1306 = vlaneseq
      %v1307 = vshrl.u32 %v1306, 7
      %v1308 = vsub.s32 4, %v1307
      %v1309 = vrot.slane %v183, %v1308
      %v1310 = vlaneseq
      %v1311 = vshrl.u32 %v1310, 7
      %v1312 = vsub.s32 5, %v1311
      %v1313 = vrot.slane %v183, %v1312
      %v1320 = vmul.f32 %v1283, %v1293
      %v1321 = vmul.f32 %v1284, %v1297
      %v1322 = vmul.f32 %v1285, %v1301
      %v1323 = vmul.f32 %v1286, %v1305
      %v1324 = vmul.f32 %v1287, %v1309
      %v1325 = vmul.f32 %v1288, %v1313
      %v1332 = vrot.slane %v1320, 7
      %v1333 = vrot.slane %v1321, 7
      %v1334 = vrot.slane %v1322, 7
      %v1335 = vrot.slane %v1323, 7
      %v1336 = vrot.slane %v1324, 7
      %v1337 = vrot.slane %v1325, 7
      %1338 = vrot.lane.b32.xlu0 %v1332, 19
      %v1339 = vpop.permute.xlu0 %1338
      %1340 = vrot.lane.b32.xlu0 %v1333, 19
      %v1341 = vpop.permute.xlu0 %1340
      %1342 = vrot.lane.b32.xlu0 %v1334, 19
      %v1343 = vpop.permute.xlu0 %1342
      %1344 = vrot.lane.b32.xlu0 %v1335, 19
      %v1345 = vpop.permute.xlu0 %1344
      %1346 = vrot.lane.b32.xlu0 %v1336, 19
      %v1347 = vpop.permute.xlu0 %1346
      %1348 = vrot.lane.b32.xlu0 %v1337, 19
      %v1349 = vpop.permute.xlu0 %1348
      %v1350 = vsel %vm174, %v1339, %v1341
      %v1351 = vsel %vm174, %v1341, %v1343
      %v1352 = vsel %vm174, %v1343, %v1345
      %v1353 = vsel %vm174, %v1345, %v1347
      %v1354 = vsel %vm174, %v1347, %v1349
      %vm1361 = vcmask 1044633
      %1362 = vst.msk [vmem:[#allocation2] sm:$0x1e] %vm1361, %v1339
      %1363 = vst [vmem:[#allocation2 + $0x8] sm:$0x1e] %v1350
      %1364 = vst [vmem:[#allocation2 + $0x10] sm:$0x1e] %v1351
      %1365 = vst [vmem:[#allocation2 + $0x18] sm:$0x1e] %v1352
      %1366 = vst [vmem:[#allocation2 + $0x20] sm:$0x1e] %v1353
      %vm1367 = vcmask 217089
      %1368 = vst.msk [vmem:[#allocation2 + $0x28] sm:$0x1e] %vm1367, %v1354
      %p1369 = scmp.eq.s32.totalorder %s14, 7
      // Predicated region
      $region37: #{s2s_hsid_forward.2} parent=31 // pred_check
        %p1370 = pneg %p1369
      $region38: #{s2s_hsid_forward.2} parent=31 // pred_check_branch
        %1372 = sbr.rel (%p1370) target = $region40
      $region39: #{s2s_hsid_forward.2} parent=31 // pred_region
        %v1373 = vld [vmem:[#allocation2] sm:$0x1e]
        %v1374 = vld [vmem:[#allocation2 + $0x8] sm:$0x1e]
        %v1375 = vld [vmem:[#allocation2 + $0x10] sm:$0x1e]
        %v1376 = vld [vmem:[#allocation2 + $0x18] sm:$0x1e]
        %v1377 = vld [vmem:[#allocation2 + $0x20] sm:$0x1e]
        %v1378 = vld [vmem:[#allocation2 + $0x28] sm:$0x1e]
        %v1385 = vrot.slane %v1373, 1
        %v1386 = vrot.slane %v1374, 1
        %v1387 = vrot.slane %v1375, 1
        %v1388 = vrot.slane %v1376, 1
        %v1389 = vrot.slane %v1377, 1
        %v1390 = vrot.slane %v1378, 1
        %1397 = vst [vmem:[#allocation3] sm:$0xf] %v1385
        %1398 = vst [vmem:[#allocation3 + $0x8] sm:$0xf] %v1386
        %1399 = vst [vmem:[#allocation3 + $0x10] sm:$0xf] %v1387
        %1400 = vst [vmem:[#allocation3 + $0x18] sm:$0xf] %v1388
        %1401 = vst [vmem:[#allocation3 + $0x20] sm:$0xf] %v1389
        %1402 = vst.msk [vmem:[#allocation3 + $0x28] sm:$0xf] %vm214, %v1390
        %v1403 = vld [vmem:[#allocation2] sm:$0x1e]
        %v1404 = vld [vmem:[#allocation2 + $0x8] sm:$0x1e]
        %v1405 = vld [vmem:[#allocation2 + $0x10] sm:$0x1e]
        %v1406 = vld [vmem:[#allocation2 + $0x18] sm:$0x1e]
        %v1407 = vld [vmem:[#allocation2 + $0x20] sm:$0x1e]
        %v1408 = vld [vmem:[#allocation2 + $0x28] sm:$0x1e]
        %v1415 = vrot.slane %v1403, 5
        %v1416 = vrot.slane %v1404, 5
        %v1417 = vrot.slane %v1405, 5
        %v1418 = vrot.slane %v1406, 5
        %v1419 = vrot.slane %v1407, 5
        %v1420 = vrot.slane %v1408, 5
        %1421 = vrot.lane.b32.xlu0 %v1415, 127
        %v1422 = vpop.permute.xlu0 %1421
        %1423 = vrot.lane.b32.xlu0 %v1416, 127
        %v1424 = vpop.permute.xlu0 %1423
        %1425 = vrot.lane.b32.xlu0 %v1417, 127
        %v1426 = vpop.permute.xlu0 %1425
        %1427 = vrot.lane.b32.xlu0 %v1418, 127
        %v1428 = vpop.permute.xlu0 %1427
        %1429 = vrot.lane.b32.xlu0 %v1419, 127
        %v1430 = vpop.permute.xlu0 %1429
        %1431 = vrot.lane.b32.xlu0 %v1420, 127
        %v1432 = vpop.permute.xlu0 %1431
        %v1433 = vsel %vm246, %v1422, %v1424
        %v1434 = vsel %vm246, %v1424, %v1426
        %v1435 = vsel %vm246, %v1426, %v1428
        %v1436 = vsel %vm246, %v1428, %v1430
        %v1437 = vsel %vm246, %v1430, %v1432
        %1444 = vst [vmem:[#allocation3] sm:$0xf0] %v1433
        %1445 = vst [vmem:[#allocation3 + $0x8] sm:$0xf0] %v1434
        %1446 = vst [vmem:[#allocation3 + $0x10] sm:$0xf0] %v1435
        %1447 = vst [vmem:[#allocation3 + $0x18] sm:$0xf0] %v1436
        %1448 = vst [vmem:[#allocation3 + $0x20] sm:$0xf0] %v1437
        %1449 = vst.msk [vmem:[#allocation3 + $0x28] sm:$0xf0] %vm263, %v1432
        %v1450 = vld [vmem:[#allocation2] sm:$0x1e]
        %v1451 = vld [vmem:[#allocation2 + $0x8] sm:$0x1e]
        %v1452 = vld [vmem:[#allocation2 + $0x10] sm:$0x1e]
        %v1453 = vld [vmem:[#allocation2 + $0x18] sm:$0x1e]
        %v1454 = vld [vmem:[#allocation2 + $0x20] sm:$0x1e]
        %v1455 = vld [vmem:[#allocation2 + $0x28] sm:$0x1e]
        %v1462 = vrot.slane %v1450, 1
        %v1463 = vrot.slane %v1451, 1
        %v1464 = vrot.slane %v1452, 1
        %v1465 = vrot.slane %v1453, 1
        %v1466 = vrot.slane %v1454, 1
        %v1467 = vrot.slane %v1455, 1
        %1468 = vrot.lane.b32.xlu0 %v1462, 126
        %v1469 = vpop.permute.xlu0 %1468
        %1470 = vrot.lane.b32.xlu0 %v1463, 126
        %v1471 = vpop.permute.xlu0 %1470
        %1472 = vrot.lane.b32.xlu0 %v1464, 126
        %v1473 = vpop.permute.xlu0 %1472
        %1474 = vrot.lane.b32.xlu0 %v1465, 126
        %v1475 = vpop.permute.xlu0 %1474
        %1476 = vrot.lane.b32.xlu0 %v1466, 126
        %v1477 = vpop.permute.xlu0 %1476
        %1478 = vrot.lane.b32.xlu0 %v1467, 126
        %v1479 = vpop.permute.xlu0 %1478
        %v1480 = vsel %vm295, %v1469, %v1471
        %v1481 = vsel %vm295, %v1471, %v1473
        %v1482 = vsel %vm295, %v1473, %v1475
        %v1483 = vsel %vm295, %v1475, %v1477
        %v1484 = vsel %vm295, %v1477, %v1479
        %1491 = vst [vmem:[#allocation3 + $0x30] sm:$0xf] %v1480
        %1492 = vst [vmem:[#allocation3 + $0x38] sm:$0xf] %v1481
        %1493 = vst [vmem:[#allocation3 + $0x40] sm:$0xf] %v1482
        %1494 = vst [vmem:[#allocation3 + $0x48] sm:$0xf] %v1483
        %1495 = vst [vmem:[#allocation3 + $0x50] sm:$0xf] %v1484
        %1496 = vst.msk [vmem:[#allocation3 + $0x58] sm:$0xf] %vm214, %v1479
        %v1497 = vld [vmem:[#allocation2] sm:$0x1e]
        %v1498 = vld [vmem:[#allocation2 + $0x8] sm:$0x1e]
        %v1499 = vld [vmem:[#allocation2 + $0x10] sm:$0x1e]
        %v1500 = vld [vmem:[#allocation2 + $0x18] sm:$0x1e]
        %v1501 = vld [vmem:[#allocation2 + $0x20] sm:$0x1e]
        %v1502 = vld [vmem:[#allocation2 + $0x28] sm:$0x1e]
        %v1509 = vrot.slane %v1497, 5
        %v1510 = vrot.slane %v1498, 5
        %v1511 = vrot.slane %v1499, 5
        %v1512 = vrot.slane %v1500, 5
        %v1513 = vrot.slane %v1501, 5
        %v1514 = vrot.slane %v1502, 5
        %1515 = vrot.lane.b32.xlu0 %v1509, 110
        %v1516 = vpop.permute.xlu0 %1515
        %1517 = vrot.lane.b32.xlu0 %v1510, 110
        %v1518 = vpop.permute.xlu0 %1517
        %1519 = vrot.lane.b32.xlu0 %v1511, 110
        %v1520 = vpop.permute.xlu0 %1519
        %1521 = vrot.lane.b32.xlu0 %v1512, 110
        %v1522 = vpop.permute.xlu0 %1521
        %1523 = vrot.lane.b32.xlu0 %v1513, 110
        %v1524 = vpop.permute.xlu0 %1523
        %1525 = vrot.lane.b32.xlu0 %v1514, 110
        %v1526 = vpop.permute.xlu0 %1525
        %v1527 = vsel %vm343, %v1516, %v1518
        %v1528 = vsel %vm343, %v1518, %v1520
        %v1529 = vsel %vm343, %v1520, %v1522
        %v1530 = vsel %vm343, %v1522, %v1524
        %v1531 = vsel %vm343, %v1524, %v1526
        %1538 = vst [vmem:[#allocation3 + $0x30] sm:$0xf0] %v1527
        %1539 = vst [vmem:[#allocation3 + $0x38] sm:$0xf0] %v1528
        %1540 = vst [vmem:[#allocation3 + $0x40] sm:$0xf0] %v1529
        %1541 = vst [vmem:[#allocation3 + $0x48] sm:$0xf0] %v1530
        %1542 = vst [vmem:[#allocation3 + $0x50] sm:$0xf0] %v1531
        %1543 = vst.msk [vmem:[#allocation3 + $0x58] sm:$0xf0] %vm263, %v1526
        %v1544 = vld [vmem:[#allocation2] sm:$0x1e]
        %v1545 = vld [vmem:[#allocation2 + $0x8] sm:$0x1e]
        %v1546 = vld [vmem:[#allocation2 + $0x10] sm:$0x1e]
        %v1547 = vld [vmem:[#allocation2 + $0x18] sm:$0x1e]
        %v1548 = vld [vmem:[#allocation2 + $0x20] sm:$0x1e]
        %v1549 = vld [vmem:[#allocation2 + $0x28] sm:$0x1e]
        %v1556 = vrot.slane %v1544, 1
        %v1557 = vrot.slane %v1545, 1
        %v1558 = vrot.slane %v1546, 1
        %v1559 = vrot.slane %v1547, 1
        %v1560 = vrot.slane %v1548, 1
        %v1561 = vrot.slane %v1549, 1
        %1562 = vrot.lane.b32.xlu0 %v1556, 109
        %v1563 = vpop.permute.xlu0 %1562
        %1564 = vrot.lane.b32.xlu0 %v1557, 109
        %v1565 = vpop.permute.xlu0 %1564
        %1566 = vrot.lane.b32.xlu0 %v1558, 109
        %v1567 = vpop.permute.xlu0 %1566
        %1568 = vrot.lane.b32.xlu0 %v1559, 109
        %v1569 = vpop.permute.xlu0 %1568
        %1570 = vrot.lane.b32.xlu0 %v1560, 109
        %v1571 = vpop.permute.xlu0 %1570
        %1572 = vrot.lane.b32.xlu0 %v1561, 109
        %v1573 = vpop.permute.xlu0 %1572
        %v1574 = vsel %vm391, %v1563, %v1565
        %v1575 = vsel %vm391, %v1565, %v1567
        %v1576 = vsel %vm391, %v1567, %v1569
        %v1577 = vsel %vm391, %v1569, %v1571
        %v1578 = vsel %vm391, %v1571, %v1573
        %1585 = vst [vmem:[#allocation3 + $0x60] sm:$0xf] %v1574
        %1586 = vst [vmem:[#allocation3 + $0x68] sm:$0xf] %v1575
        %1587 = vst [vmem:[#allocation3 + $0x70] sm:$0xf] %v1576
        %1588 = vst [vmem:[#allocation3 + $0x78] sm:$0xf] %v1577
        %1589 = vst [vmem:[#allocation3 + $0x80] sm:$0xf] %v1578
        %1590 = vst.msk [vmem:[#allocation3 + $0x88] sm:$0xf] %vm214, %v1573
        %v1591 = vld [vmem:[#allocation2] sm:$0x1e]
        %v1592 = vld [vmem:[#allocation2 + $0x8] sm:$0x1e]
        %v1593 = vld [vmem:[#allocation2 + $0x10] sm:$0x1e]
        %v1594 = vld [vmem:[#allocation2 + $0x18] sm:$0x1e]
        %v1595 = vld [vmem:[#allocation2 + $0x20] sm:$0x1e]
        %v1596 = vld [vmem:[#allocation2 + $0x28] sm:$0x1e]
        %v1603 = vrot.slane %v1591, 5
        %v1604 = vrot.slane %v1592, 5
        %v1605 = vrot.slane %v1593, 5
        %v1606 = vrot.slane %v1594, 5
        %v1607 = vrot.slane %v1595, 5
        %v1608 = vrot.slane %v1596, 5
        %1609 = vrot.lane.b32.xlu0 %v1603, 108
        %v1610 = vpop.permute.xlu0 %1609
        %1611 = vrot.lane.b32.xlu0 %v1604, 108
        %v1612 = vpop.permute.xlu0 %1611
        %1613 = vrot.lane.b32.xlu0 %v1605, 108
        %v1614 = vpop.permute.xlu0 %1613
        %1615 = vrot.lane.b32.xlu0 %v1606, 108
        %v1616 = vpop.permute.xlu0 %1615
        %1617 = vrot.lane.b32.xlu0 %v1607, 108
        %v1618 = vpop.permute.xlu0 %1617
        %1619 = vrot.lane.b32.xlu0 %v1608, 108
        %v1620 = vpop.permute.xlu0 %1619
        %v1621 = vsel %vm439, %v1610, %v1612
        %v1622 = vsel %vm439, %v1612, %v1614
        %v1623 = vsel %vm439, %v1614, %v1616
        %v1624 = vsel %vm439, %v1616, %v1618
        %v1625 = vsel %vm439, %v1618, %v1620
        %1632 = vst [vmem:[#allocation3 + $0x60] sm:$0xf0] %v1621
        %1633 = vst [vmem:[#allocation3 + $0x68] sm:$0xf0] %v1622
        %1634 = vst [vmem:[#allocation3 + $0x70] sm:$0xf0] %v1623
        %1635 = vst [vmem:[#allocation3 + $0x78] sm:$0xf0] %v1624
        %1636 = vst [vmem:[#allocation3 + $0x80] sm:$0xf0] %v1625
        %1637 = vst.msk [vmem:[#allocation3 + $0x88] sm:$0xf0] %vm263, %v1620
        %v1638 = vld [vmem:[#allocation2] sm:$0x1e]
        %v1639 = vld [vmem:[#allocation2 + $0x8] sm:$0x1e]
        %v1640 = vld [vmem:[#allocation2 + $0x10] sm:$0x1e]
        %v1641 = vld [vmem:[#allocation2 + $0x18] sm:$0x1e]
        %v1642 = vld [vmem:[#allocation2 + $0x20] sm:$0x1e]
        %v1643 = vld [vmem:[#allocation2 + $0x28] sm:$0x1e]
        %v1650 = vrot.slane %v1638, 1
        %v1651 = vrot.slane %v1639, 1
        %v1652 = vrot.slane %v1640, 1
        %v1653 = vrot.slane %v1641, 1
        %v1654 = vrot.slane %v1642, 1
        %v1655 = vrot.slane %v1643, 1
        %1656 = vrot.lane.b32.xlu0 %v1650, 92
        %v1657 = vpop.permute.xlu0 %1656
        %1658 = vrot.lane.b32.xlu0 %v1651, 92
        %v1659 = vpop.permute.xlu0 %1658
        %1660 = vrot.lane.b32.xlu0 %v1652, 92
        %v1661 = vpop.permute.xlu0 %1660
        %1662 = vrot.lane.b32.xlu0 %v1653, 92
        %v1663 = vpop.permute.xlu0 %1662
        %1664 = vrot.lane.b32.xlu0 %v1654, 92
        %v1665 = vpop.permute.xlu0 %1664
        %1666 = vrot.lane.b32.xlu0 %v1655, 92
        %v1667 = vpop.permute.xlu0 %1666
        %v1668 = vsel %vm487, %v1657, %v1659
        %v1669 = vsel %vm487, %v1659, %v1661
        %v1670 = vsel %vm487, %v1661, %v1663
        %v1671 = vsel %vm487, %v1663, %v1665
        %v1672 = vsel %vm487, %v1665, %v1667
        %1679 = vst [vmem:[#allocation3 + $0x90] sm:$0xf] %v1668
        %1680 = vst [vmem:[#allocation3 + $0x98] sm:$0xf] %v1669
        %1681 = vst [vmem:[#allocation3 + $0xa0] sm:$0xf] %v1670
        %1682 = vst [vmem:[#allocation3 + $0xa8] sm:$0xf] %v1671
        %1683 = vst [vmem:[#allocation3 + $0xb0] sm:$0xf] %v1672
        %1684 = vst.msk [vmem:[#allocation3 + $0xb8] sm:$0xf] %vm214, %v1667
        %v1685 = vld [vmem:[#allocation2] sm:$0x1e]
        %v1686 = vld [vmem:[#allocation2 + $0x8] sm:$0x1e]
        %v1687 = vld [vmem:[#allocation2 + $0x10] sm:$0x1e]
        %v1688 = vld [vmem:[#allocation2 + $0x18] sm:$0x1e]
        %v1689 = vld [vmem:[#allocation2 + $0x20] sm:$0x1e]
        %v1690 = vld [vmem:[#allocation2 + $0x28] sm:$0x1e]
        %v1697 = vrot.slane %v1685, 5
        %v1698 = vrot.slane %v1686, 5
        %v1699 = vrot.slane %v1687, 5
        %v1700 = vrot.slane %v1688, 5
        %v1701 = vrot.slane %v1689, 5
        %v1702 = vrot.slane %v1690, 5
        %1703 = vrot.lane.b32.xlu0 %v1697, 91
        %v1704 = vpop.permute.xlu0 %1703
        %1705 = vrot.lane.b32.xlu0 %v1698, 91
        %v1706 = vpop.permute.xlu0 %1705
        %1707 = vrot.lane.b32.xlu0 %v1699, 91
        %v1708 = vpop.permute.xlu0 %1707
        %1709 = vrot.lane.b32.xlu0 %v1700, 91
        %v1710 = vpop.permute.xlu0 %1709
        %1711 = vrot.lane.b32.xlu0 %v1701, 91
        %v1712 = vpop.permute.xlu0 %1711
        %1713 = vrot.lane.b32.xlu0 %v1702, 91
        %v1714 = vpop.permute.xlu0 %1713
        %v1715 = vsel %vm535, %v1704, %v1706
        %v1716 = vsel %vm535, %v1706, %v1708
        %v1717 = vsel %vm535, %v1708, %v1710
        %v1718 = vsel %vm535, %v1710, %v1712
        %v1719 = vsel %vm535, %v1712, %v1714
        %1726 = vst [vmem:[#allocation3 + $0x90] sm:$0xf0] %v1715
        %1727 = vst [vmem:[#allocation3 + $0x98] sm:$0xf0] %v1716
        %1728 = vst [vmem:[#allocation3 + $0xa0] sm:$0xf0] %v1717
        %1729 = vst [vmem:[#allocation3 + $0xa8] sm:$0xf0] %v1718
        %1730 = vst [vmem:[#allocation3 + $0xb0] sm:$0xf0] %v1719
        %1731 = vst.msk [vmem:[#allocation3 + $0xb8] sm:$0xf0] %vm263, %v1714
        %v1732 = vld [vmem:[#allocation2] sm:$0x1e]
        %v1733 = vld [vmem:[#allocation2 + $0x8] sm:$0x1e]
        %v1734 = vld [vmem:[#allocation2 + $0x10] sm:$0x1e]
        %v1735 = vld [vmem:[#allocation2 + $0x18] sm:$0x1e]
        %v1736 = vld [vmem:[#allocation2 + $0x20] sm:$0x1e]
        %v1737 = vld [vmem:[#allocation2 + $0x28] sm:$0x1e]
        %v1744 = vrot.slane %v1732, 1
        %v1745 = vrot.slane %v1733, 1
        %v1746 = vrot.slane %v1734, 1
        %v1747 = vrot.slane %v1735, 1
        %v1748 = vrot.slane %v1736, 1
        %v1749 = vrot.slane %v1737, 1
        %1750 = vrot.lane.b32.xlu0 %v1744, 90
        %v1751 = vpop.permute.xlu0 %1750
        %1752 = vrot.lane.b32.xlu0 %v1745, 90
        %v1753 = vpop.permute.xlu0 %1752
        %1754 = vrot.lane.b32.xlu0 %v1746, 90
        %v1755 = vpop.permute.xlu0 %1754
        %1756 = vrot.lane.b32.xlu0 %v1747, 90
        %v1757 = vpop.permute.xlu0 %1756
        %1758 = vrot.lane.b32.xlu0 %v1748, 90
        %v1759 = vpop.permute.xlu0 %1758
        %1760 = vrot.lane.b32.xlu0 %v1749, 90
        %v1761 = vpop.permute.xlu0 %1760
        %v1762 = vsel %vm583, %v1751, %v1753
        %v1763 = vsel %vm583, %v1753, %v1755
        %v1764 = vsel %vm583, %v1755, %v1757
        %v1765 = vsel %vm583, %v1757, %v1759
        %v1766 = vsel %vm583, %v1759, %v1761
        %1773 = vst [vmem:[#allocation3 + $0xc0] sm:$0xf] %v1762
        %1774 = vst [vmem:[#allocation3 + $0xc8] sm:$0xf] %v1763
        %1775 = vst [vmem:[#allocation3 + $0xd0] sm:$0xf] %v1764
        %1776 = vst [vmem:[#allocation3 + $0xd8] sm:$0xf] %v1765
        %1777 = vst [vmem:[#allocation3 + $0xe0] sm:$0xf] %v1766
        %1778 = vst.msk [vmem:[#allocation3 + $0xe8] sm:$0xf] %vm214, %v1761
        %v1779 = vld [vmem:[#allocation3] sm:$0xff]
        %v1780 = vld [vmem:[#allocation3 + $0x8] sm:$0xff]
        %v1781 = vld [vmem:[#allocation3 + $0x10] sm:$0xff]
        %v1782 = vld [vmem:[#allocation3 + $0x18] sm:$0xff]
        %v1783 = vld [vmem:[#allocation3 + $0x20] sm:$0xff]
        %v1784 = vld [vmem:[#allocation3 + $0x28] sm:$0xff]
        %v1785 = vld [vmem:[#allocation3 + $0x30] sm:$0xff]
        %v1786 = vld [vmem:[#allocation3 + $0x38] sm:$0xff]
        %v1787 = vld [vmem:[#allocation3 + $0x40] sm:$0xff]
        %v1788 = vld [vmem:[#allocation3 + $0x48] sm:$0xff]
        %v1789 = vld [vmem:[#allocation3 + $0x50] sm:$0xff]
        %v1790 = vld [vmem:[#allocation3 + $0x58] sm:$0xff]
        %v1791 = vld [vmem:[#allocation3 + $0x60] sm:$0xff]
        %v1792 = vld [vmem:[#allocation3 + $0x68] sm:$0xff]
        %v1793 = vld [vmem:[#allocation3 + $0x70] sm:$0xff]
        %v1794 = vld [vmem:[#allocation3 + $0x78] sm:$0xff]
        %v1795 = vld [vmem:[#allocation3 + $0x80] sm:$0xff]
        %v1796 = vld [vmem:[#allocation3 + $0x88] sm:$0xff]
        %v1797 = vld [vmem:[#allocation3 + $0x90] sm:$0xff]
        %v1798 = vld [vmem:[#allocation3 + $0x98] sm:$0xff]
        %v1799 = vld [vmem:[#allocation3 + $0xa0] sm:$0xff]
        %v1800 = vld [vmem:[#allocation3 + $0xa8] sm:$0xff]
        %v1801 = vld [vmem:[#allocation3 + $0xb0] sm:$0xff]
        %v1802 = vld [vmem:[#allocation3 + $0xb8] sm:$0xff]
        %v1803 = vld [vmem:[#allocation3 + $0xc0] sm:$0xf]
        %v1804 = vld [vmem:[#allocation3 + $0xc8] sm:$0xf]
        %v1805 = vld [vmem:[#allocation3 + $0xd0] sm:$0xf]
        %v1806 = vld [vmem:[#allocation3 + $0xd8] sm:$0xf]
        %v1807 = vld [vmem:[#allocation3 + $0xe0] sm:$0xf]
        %v1808 = vld [vmem:[#allocation3 + $0xe8] sm:$0xf]
        %1809 = vset.pattern.permute.xlu0 82
        %1810 = vperm.xlu0 %1809, %v184
        %v1811 = vpop.permute.xlu0 %1810
        %1813 = vrot.lane.b32.xlu0 %v184, 83
        %v1814 = vpop.permute.xlu0 %1813
        %v1815 = vsel %vm638, %v1814, 0
        %v1818 = vsel %vm641, %v1803, 0
        %v1821 = vsel %vm641, %v1804, 0
        %v1824 = vsel %vm641, %v1805, 0
        %v1827 = vsel %vm641, %v1806, 0
        %v1830 = vsel %vm641, %v1807, 0
        %v1833 = vsel %vm641, %v1808, 0
        %1835 = vmatprep.subr.mxu0 %v1780
        %1836 = vmatpush1.msra.mxu0 %v1779
        %1837 = vmatprep.subr.mxu0 %v1786
        %1838 = vmatpush1.msra.mxu0 %v1785
        %1839 = vmatprep.subr.mxu0 %v1792
        %1840 = vmatpush1.msra.mxu0 %v1791
        %1841 = vmatprep.subr.mxu0 %v1798
        %1842 = vmatpush1.msra.mxu0 %v1797
        %1843 = vmatprep.subr.mxu0 %v1821
        %1844 = vmatpush1.msra.mxu0 %v1818
        %1845 = vmatprep.subr.mxu0 0.0
        %1846 = vmatpush1.msra.mxu0 0.0
        %1847 = vmatprep.subr.mxu0 0.0
        %1848 = vmatpush1.msra.mxu0 0.0
        %1849 = vmatprep.subr.mxu0 0.0
        %1850 = vmatpush1.msra.mxu0 0.0
        %1851 = vmatprep.subr.mxu0 0.0
        %1852 = vmatpush1.msra.mxu0 0.0
        %1853 = vmatprep.subr.mxu0 0.0
        %1854 = vmatpush1.msra.mxu0 0.0
        %1855 = vmatprep.subr.mxu0 0.0
        %1856 = vmatpush1.msra.mxu0 0.0
        %1857 = vmatprep.subr.mxu0 0.0
        %1858 = vmatpush1.msra.mxu0 0.0
        %1859 = vmatprep.subr.mxu0 0.0
        %1860 = vmatpush1.msra.mxu0 0.0
        %1861 = vmatprep.subr.mxu0 0.0
        %1862 = vmatpush1.msra.mxu0 0.0
        %1863 = vmatprep.subr.mxu0 0.0
        %1864 = vmatpush1.msra.mxu0 0.0
        %1865 = vmatprep.subr.mxu0 0.0
        %1866 = vmatpush1.msra.mxu0 0.0
        %1867 = vmatprep.subr.mxu0 0.0
        %1868 = vmatpush1.msra.mxu0 0.0
        %1869 = vmatprep.subr.mxu0 0.0
        %1870 = vmatpush1.msra.mxu0 0.0
        %1871 = vmatprep.subr.mxu0 0.0
        %1872 = vmatpush1.msra.mxu0 0.0
        %1873 = vmatprep.subr.mxu0 0.0
        %1874 = vmatpush1.msra.mxu0 0.0
        %1875 = vmatprep.subr.mxu0 0.0
        %1876 = vmatpush1.msra.mxu0 0.0
        %1877 = vmatprep.subr.mxu0 0.0
        %1878 = vmatpush1.msra.mxu0 0.0
        %1879 = vmatprep.subr.mxu0 0.0
        %1880 = vmatpush1.msra.mxu0 0.0
        %1881 = vmatprep.subr.mxu0 0.0
        %1882 = vmatpush1.msra.mxu0 0.0
        %1883 = vmatprep.subr.mxu0 0.0
        %1884 = vmatpush1.msra.mxu0 0.0
        %1885 = vmatprep.subr.mxu0 0.0
        %1886 = vmatpush1.msra.mxu0 0.0
        %1887 = vmatprep.subr.mxu0 0.0
        %1888 = vmatpush1.msra.mxu0 0.0
        %1889 = vmatprep.subr.mxu0 0.0
        %1890 = vmatpush1.msra.mxu0 0.0
        %1891 = vmatprep.subr.mxu0 0.0
        %1892 = vmatpush1.msra.mxu0 0.0
        %1893 = vmatprep.subr.mxu0 0.0
        %1894 = vmatpush1.msra.mxu0 0.0
        %1895 = vmatprep.subr.mxu0 0.0
        %1896 = vmatpush1.msra.mxu0 0.0
        %1897 = vmatprep.subr.mxu0 0.0
        %1898 = vmatpush1.msra.mxu0 0.0
        %1899 = vmatprep.mubr.f32.mxu0 0.0
        %1900 = vmatmul.mubr.f32.gmra.mrb[0].mxu0 %v1815
        %v1901 = vpop.f32.mrb[0].mxu0
        %v1902 = vadd.f32 %v1811, %v1901
        %v1903 = vpop.f32.mrb[0].mxu0
        %v1904 = vadd.f32 %v1811, %v1903
        %1905 = vdwg.mxu0
        %1906 = vmatprep.subr.mxu0 %v1782
        %1907 = vmatpush1.msra.mxu0 %v1781
        %1908 = vmatprep.subr.mxu0 %v1788
        %1909 = vmatpush1.msra.mxu0 %v1787
        %1910 = vmatprep.subr.mxu0 %v1794
        %1911 = vmatpush1.msra.mxu0 %v1793
        %1912 = vmatprep.subr.mxu0 %v1800
        %1913 = vmatpush1.msra.mxu0 %v1799
        %1914 = vmatprep.subr.mxu0 %v1827
        %1915 = vmatpush1.msra.mxu0 %v1824
        %1916 = vmatprep.subr.mxu0 0.0
        %1917 = vmatpush1.msra.mxu0 0.0
        %1918 = vmatprep.subr.mxu0 0.0
        %1919 = vmatpush1.msra.mxu0 0.0
        %1920 = vmatprep.subr.mxu0 0.0
        %1921 = vmatpush1.msra.mxu0 0.0
        %1922 = vmatprep.subr.mxu0 0.0
        %1923 = vmatpush1.msra.mxu0 0.0
        %1924 = vmatprep.subr.mxu0 0.0
        %1925 = vmatpush1.msra.mxu0 0.0
        %1926 = vmatprep.subr.mxu0 0.0
        %1927 = vmatpush1.msra.mxu0 0.0
        %1928 = vmatprep.subr.mxu0 0.0
        %1929 = vmatpush1.msra.mxu0 0.0
        %1930 = vmatprep.subr.mxu0 0.0
        %1931 = vmatpush1.msra.mxu0 0.0
        %1932 = vmatprep.subr.mxu0 0.0
        %1933 = vmatpush1.msra.mxu0 0.0
        %1934 = vmatprep.subr.mxu0 0.0
        %1935 = vmatpush1.msra.mxu0 0.0
        %1936 = vmatprep.subr.mxu0 0.0
        %1937 = vmatpush1.msra.mxu0 0.0
        %1938 = vmatprep.subr.mxu0 0.0
        %1939 = vmatpush1.msra.mxu0 0.0
        %1940 = vmatprep.subr.mxu0 0.0
        %1941 = vmatpush1.msra.mxu0 0.0
        %1942 = vmatprep.subr.mxu0 0.0
        %1943 = vmatpush1.msra.mxu0 0.0
        %1944 = vmatprep.subr.mxu0 0.0
        %1945 = vmatpush1.msra.mxu0 0.0
        %1946 = vmatprep.subr.mxu0 0.0
        %1947 = vmatpush1.msra.mxu0 0.0
        %1948 = vmatprep.subr.mxu0 0.0
        %1949 = vmatpush1.msra.mxu0 0.0
        %1950 = vmatprep.subr.mxu0 0.0
        %1951 = vmatpush1.msra.mxu0 0.0
        %1952 = vmatprep.subr.mxu0 0.0
        %1953 = vmatpush1.msra.mxu0 0.0
        %1954 = vmatprep.subr.mxu0 0.0
        %1955 = vmatpush1.msra.mxu0 0.0
        %1956 = vmatprep.subr.mxu0 0.0
        %1957 = vmatpush1.msra.mxu0 0.0
        %1958 = vmatprep.subr.mxu0 0.0
        %1959 = vmatpush1.msra.mxu0 0.0
        %1960 = vmatprep.subr.mxu0 0.0
        %1961 = vmatpush1.msra.mxu0 0.0
        %1962 = vmatprep.subr.mxu0 0.0
        %1963 = vmatpush1.msra.mxu0 0.0
        %1964 = vmatprep.subr.mxu0 0.0
        %1965 = vmatpush1.msra.mxu0 0.0
        %1966 = vmatprep.subr.mxu0 0.0
        %1967 = vmatpush1.msra.mxu0 0.0
        %1968 = vmatprep.subr.mxu0 0.0
        %1969 = vmatpush1.msra.mxu0 0.0
        %1970 = vmatprep.mubr.f32.mxu0 0.0
        %1971 = vmatmul.mubr.f32.gmra.mrb[0].mxu0 %v1815
        %v1972 = vpop.f32.mrb[0].mxu0
        %v1973 = vadd.f32 %v1811, %v1972
        %v1974 = vpop.f32.mrb[0].mxu0
        %v1975 = vadd.f32 %v1811, %v1974
        %1976 = vdwg.mxu0
        %1977 = vmatprep.subr.mxu0 %v1784
        %1978 = vmatpush1.msra.mxu0 %v1783
        %1979 = vmatprep.subr.mxu0 %v1790
        %1980 = vmatpush1.msra.mxu0 %v1789
        %1981 = vmatprep.subr.mxu0 %v1796
        %1982 = vmatpush1.msra.mxu0 %v1795
        %1983 = vmatprep.subr.mxu0 %v1802
        %1984 = vmatpush1.msra.mxu0 %v1801
        %1985 = vmatprep.subr.mxu0 %v1833
        %1986 = vmatpush1.msra.mxu0 %v1830
        %1987 = vmatprep.subr.mxu0 0.0
        %1988 = vmatpush1.msra.mxu0 0.0
        %1989 = vmatprep.subr.mxu0 0.0
        %1990 = vmatpush1.msra.mxu0 0.0
        %1991 = vmatprep.subr.mxu0 0.0
        %1992 = vmatpush1.msra.mxu0 0.0
        %1993 = vmatprep.subr.mxu0 0.0
        %1994 = vmatpush1.msra.mxu0 0.0
        %1995 = vmatprep.subr.mxu0 0.0
        %1996 = vmatpush1.msra.mxu0 0.0
        %1997 = vmatprep.subr.mxu0 0.0
        %1998 = vmatpush1.msra.mxu0 0.0
        %1999 = vmatprep.subr.mxu0 0.0
        %2000 = vmatpush1.msra.mxu0 0.0
        %2001 = vmatprep.subr.mxu0 0.0
        %2002 = vmatpush1.msra.mxu0 0.0
        %2003 = vmatprep.subr.mxu0 0.0
        %2004 = vmatpush1.msra.mxu0 0.0
        %2005 = vmatprep.subr.mxu0 0.0
        %2006 = vmatpush1.msra.mxu0 0.0
        %2007 = vmatprep.subr.mxu0 0.0
        %2008 = vmatpush1.msra.mxu0 0.0
        %2009 = vmatprep.subr.mxu0 0.0
        %2010 = vmatpush1.msra.mxu0 0.0
        %2011 = vmatprep.subr.mxu0 0.0
        %2012 = vmatpush1.msra.mxu0 0.0
        %2013 = vmatprep.subr.mxu0 0.0
        %2014 = vmatpush1.msra.mxu0 0.0
        %2015 = vmatprep.subr.mxu0 0.0
        %2016 = vmatpush1.msra.mxu0 0.0
        %2017 = vmatprep.subr.mxu0 0.0
        %2018 = vmatpush1.msra.mxu0 0.0
        %2019 = vmatprep.subr.mxu0 0.0
        %2020 = vmatpush1.msra.mxu0 0.0
        %2021 = vmatprep.subr.mxu0 0.0
        %2022 = vmatpush1.msra.mxu0 0.0
        %2023 = vmatprep.subr.mxu0 0.0
        %2024 = vmatpush1.msra.mxu0 0.0
        %2025 = vmatprep.subr.mxu0 0.0
        %2026 = vmatpush1.msra.mxu0 0.0
        %2027 = vmatprep.subr.mxu0 0.0
        %2028 = vmatpush1.msra.mxu0 0.0
        %2029 = vmatprep.subr.mxu0 0.0
        %2030 = vmatpush1.msra.mxu0 0.0
        %2031 = vmatprep.subr.mxu0 0.0
        %2032 = vmatpush1.msra.mxu0 0.0
        %2033 = vmatprep.subr.mxu0 0.0
        %2034 = vmatpush1.msra.mxu0 0.0
        %2035 = vmatprep.subr.mxu0 0.0
        %2036 = vmatpush1.msra.mxu0 0.0
        %2037 = vmatprep.subr.mxu0 0.0
        %2038 = vmatpush1.msra.mxu0 0.0
        %2039 = vmatprep.subr.mxu0 0.0
        %2040 = vmatpush1.msra.mxu0 0.0
        %2041 = vmatprep.mubr.f32.mxu0 0.0
        %2042 = vmatmul.mubr.f32.gmra.mrb[0].mxu0 %v1815
        %v2043 = vpop.f32.mrb[0].mxu0
        %v2044 = vadd.f32 %v1811, %v2043
        %v2045 = vpop.f32.mrb[0].mxu0
        %v2046 = vadd.f32 %v1811, %v2045
        %2047 = vdwg.mxu0
        %v2054 = vcombine.low %v1902, %v1904
        %v2055 = vcombine.low %v1973, %v1975
        %v2056 = vcombine.low %v2044, %v2046
        %2060 = vst [vmem:[%s3] sm:$0xff] %v2054
        %2061 = vst [vmem:[%s3 + $0x8] sm:$0xff] %v2055
        %vm2062 = vmor %vm263, %vm641
        %2063 = vst.msk [vmem:[%s3 + $0x10] sm:$0xff] %vm2062, %v2056
      $region40: #{s2s_hsid_forward.2} parent=31 // pred_fallthru
        _
      // Predicated region
      $region41: #{s2s_hsid_forward.2} parent=31 // pred_check
        %p2064 = pneg %p95
      $region42: #{s2s_hsid_forward.2} parent=31 // pred_check_branch
        %2066 = sbr.rel (%p2064) target = $region44
      $region43: #{s2s_hsid_forward.2} parent=31 // pred_region
        _
      $region44: #{s2s_hsid_forward.2} parent=31 // pred_fallthru
        _
      // Predicated region
      $region45: #{s2s_hsid_forward.2} parent=31 // pred_check
        %p2067 = pneg %p95
      $region46: #{s2s_hsid_forward.2} parent=31 // pred_check_branch
        %2069 = sbr.rel (%p2067) target = $region48
      $region47: #{s2s_hsid_forward.2} parent=31 // pred_region
        _
      $region48: #{s2s_hsid_forward.2} parent=31 // pred_fallthru
        _
    $region32: #{s2s_hsid_forward.2} parent=5 // pred_fallthru
      _
    %p2070 = scmp.le.s32.totalorder 2, %s9
    // Predicated region
    $region49: #{s2s_hsid_forward.2} parent=5 // pred_check
      %p2071 = pneg %p2070
    $region50: #{s2s_hsid_forward.2} parent=5 // pred_check_branch
      %2073 = sbr.rel (%p2071) target = $region52
    $region51: #{s2s_hsid_forward.2} parent=5 // pred_region
      %s2074 = ssub.s32 %s9, 2
    $region52: #{s2s_hsid_forward.2} parent=5 // pred_fallthru
      _
  $region6: #{s2s_hsid_forward.2} parent=0 // loop_footer
    %s13 = sadd.s32 1, %s9
  $region7: #{s2s_hsid_forward.2} parent=0 // loop_footer_branch
    %8 = sbr.rel target = $region3
  $region8: #{s2s_hsid_forward.2} parent=0 // loop_exit
    _

</llo_original>
